<compile_context>
chip_gen: v7x
topology: tpu7x:2x2x1
jax: 0.10.0
libtpu: 0.0.40
codegen_flags: <defaults>
</compile_context>

<pallas_src>
import functools

import jax
import jax.numpy as jnp
from jax.experimental import pallas as pl
from jax.experimental.pallas import tpu as pltpu


# --------------------------------------------------------------------------
# Weight layout: fold (permute -> block-diag bmm -> inverse permute) of layer i
# into a single (D, D) permuted-block-diagonal matrix (pure scatter, no FLOPs).
#
# Derivation (D = B**k, c = B**i, chunks of size B*c):
#   y_out[chunk*B*c + a_out*c + j] =
#       sum_{a_in} y_in[chunk*B*c + a_in*c + j] * W[chunk*c + j, a_in, a_out]
# --------------------------------------------------------------------------
def _dense_layer_matrix(w, layer_idx, block_dim):
    n_blocks, B, _ = w.shape
    D = n_blocks * B
    c = block_dim ** layer_idx
    nch = D // (B * c)                       # number of B*c-sized chunks per row
    wr = w.reshape(nch, c, B, B)             # [chunk, j, a_in, a_out]
    ch = jnp.arange(nch)[:, None]            # (nch, 1)
    jj = jnp.arange(c)[None, :]              # (1, c)
    m6 = jnp.zeros((nch, B, c, nch, B, c), w.dtype)
    # m6[chunk, a_in, j, chunk, a_out, j] = wr[chunk, j, a_in, a_out]
    m6 = m6.at[ch, :, jj, ch, :, jj].set(wr)
    return m6.reshape(D, D)


# --------------------------------------------------------------------------
# Pallas kernel: one batch tile, L lane-dense matmuls + optional bias.
# --------------------------------------------------------------------------
def _make_mixer_kernel(n_layers, has_bias):
    def kernel(*refs):
        x_ref = refs[0]
        w_refs = refs[1:1 + n_layers]
        idx = 1 + n_layers
        b_ref = refs[idx] if has_bias else None
        o_ref = refs[idx + 1] if has_bias else refs[idx]

        h = x_ref[...]                                       # (bs_tile, D) f32
        for i in range(n_layers):
            h = jnp.dot(h, w_refs[i][...],
                        preferred_element_type=jnp.float32)  # (bs_tile, D)
        if has_bias:
            h = h + b_ref[...]
        o_ref[...] = h.astype(o_ref.dtype)

    return kernel


def mixer_forward(x, weights, bias=None, *, block_dim, bs_tile=128):
    """x: (bs, input_dim); weights[i]: (n_blocks, block_dim, block_dim);
    bias: None or (1, input_dim).  Returns (bs, input_dim)."""
    bs, D = x.shape
    n_layers = len(weights)
    assert D % block_dim == 0
    assert D == block_dim ** n_layers, (
        "input_dim must be an exact power of block_dim")
    # TODO(synk): non-power input_dim makes the torch view(-1, B, B**i) permute
    # across batch rows; that configuration is not supported here.

    # Fold each layer's permutations + block-diagonal weights into a dense slab.
    mats = [_dense_layer_matrix(w, i, block_dim) for i, w in enumerate(weights)]

    has_bias = bias is not None
    if has_bias:
        bias = jnp.asarray(bias).reshape(1, D)

    # Batch tiling (pad bs up to a multiple of bs_tile if needed).
    bs_tile = min(bs_tile, max(bs, 8))
    bs_pad = ((bs + bs_tile - 1) // bs_tile) * bs_tile
    xp = x if bs_pad == bs else jnp.pad(x, ((0, bs_pad - bs), (0, 0)))
    n_tiles = bs_pad // bs_tile

    in_specs = [pl.BlockSpec((bs_tile, D), lambda j: (j, 0))]
    for _ in range(n_layers):
        in_specs.append(pl.BlockSpec((D, D), lambda j: (0, 0)))
    if has_bias:
        in_specs.append(pl.BlockSpec((1, D), lambda j: (0, 0)))
    out_specs = pl.BlockSpec((bs_tile, D), lambda j: (j, 0))

    args = [xp, *mats]
    if has_bias:
        args.append(bias)

    out = pl.pallas_call(
        _make_mixer_kernel(n_layers, has_bias),
        out_shape=jax.ShapeDtypeStruct((bs_pad, D), x.dtype),
        grid_spec=pltpu.PrefetchScalarGridSpec(
            num_scalar_prefetch=0,
            grid=(n_tiles,),
            in_specs=in_specs,
            out_specs=out_specs,
        ),
        compiler_params=pltpu.CompilerParams(
            dimension_semantics=("parallel",)),
    )(*args)

    return out if bs_pad == bs else out[:bs]


# --------------------------------------------------------------------------
# Pure-JAX reference: direct translation of the PyTorch forward.
# --------------------------------------------------------------------------
def _mixer_layer_ref(y, w, layer_idx, block_dim):
    rows, D = y.shape
    B = block_dim
    c = B ** layer_idx
    # pre-permute: within chunks of B*c, view (B, c) -> transpose -> flatten
    y = y.reshape(rows, D // (B * c), B, c).swapaxes(-1, -2).reshape(rows, D)
    # BlockWeight: block-diagonal matmul over contiguous B-sized chunks
    y = y.reshape(rows, D // B, B)
    y = jnp.einsum("rnb,nbc->rnc", y, w,
                   precision=jax.lax.Precision.HIGHEST)
    y = y.reshape(rows, D)
    # post-permute (inverse): view (c, B) -> transpose -> flatten
    y = y.reshape(rows, D // (B * c), c, B).swapaxes(-1, -2).reshape(rows, D)
    return y


def mixer_reference(x, weights, block_dim, bias=None):
    y = x
    for i, w in enumerate(weights):
        y = _mixer_layer_ref(y, w, i, block_dim)
    if bias is not None:
        y = y + jnp.asarray(bias).reshape(1, -1)
    return y


if __name__ == "__main__":
    block_dim = 8
    input_dim = 512          # = block_dim ** 3  ->  num_layers = 3
    bs = 256

    # num_layers = ceil(log_{block_dim}(input_dim)), computed in integers
    num_layers = 1
    while block_dim ** num_layers < input_dim:
        num_layers += 1

    key = jax.random.PRNGKey(0)
    key, kx = jax.random.split(key)
    x = jax.random.normal(kx, (bs, input_dim), jnp.float32)

    # kaiming_uniform_(a=sqrt(5)) on (n_blocks, B, B): bound = 1 / B
    n_blocks = input_dim // block_dim
    bound = 1.0 / block_dim
    weights = []
    for _ in range(num_layers):
        key, kw = jax.random.split(key)
        weights.append(jax.random.uniform(
            kw, (n_blocks, block_dim, block_dim), jnp.float32, -bound, bound))

    fwd = jax.jit(functools.partial(mixer_forward,
                                    block_dim=block_dim, bs_tile=128))

    # default module config: bias=False
    y = jax.block_until_ready(fwd(x, weights))
    y_ref = mixer_reference(x, weights, block_dim)
    assert y.shape == (bs, input_dim)
    assert jnp.allclose(y, y_ref, atol=1e-3, rtol=1e-2), \
        "mismatch vs reference (no bias)"

    # bias=True config
    key, kb = jax.random.split(key)
    bias = jax.random.uniform(kb, (1, input_dim), jnp.float32, -0.1, 0.1)
    y_b = jax.block_until_ready(fwd(x, weights, bias))
    y_b_ref = mixer_reference(x, weights, block_dim, bias)
    assert jnp.allclose(y_b, y_b_ref, atol=1e-3, rtol=1e-2), \
        "mismatch vs reference (bias)"

    print("KERNEL_OK")
</pallas_src>

<mosaic_0001>
module attributes {stable_mosaic.version = 11 : i64} {
  func.func @kernel(%arg0: i32, %arg1: memref<128x512xf32, #tpu.memory_space<vmem>>, %arg2: memref<512x512xf32, #tpu.memory_space<vmem>>, %arg3: memref<512x512xf32, #tpu.memory_space<vmem>>, %arg4: memref<512x512xf32, #tpu.memory_space<vmem>>, %arg5: memref<128x512xf32, #tpu.memory_space<vmem>>) attributes {dimension_semantics = [#tpu.dimension_semantics<parallel>], iteration_bounds = array<i64: 2>, scalar_prefetch = 0 : i64, scratch_operands = 0 : i64, tpu.core_type = #tpu.core_type<tc>, window_params = [{transform_indices = @transform_0, window_bounds = array<i64: 128, 512>}, {pipeline_mode = #tpu.pipeline_mode<synchronous>, transform_indices = @transform_1, window_bounds = array<i64: 512, 512>}, {pipeline_mode = #tpu.pipeline_mode<synchronous>, transform_indices = @transform_2, window_bounds = array<i64: 512, 512>}, {pipeline_mode = #tpu.pipeline_mode<synchronous>, transform_indices = @transform_3, window_bounds = array<i64: 512, 512>}, {transform_indices = @transform_4, window_bounds = array<i64: 128, 512>}]} {
    %c0 = arith.constant 0 : index
    %c0_0 = arith.constant 0 : index
    %0 = vector.load %arg1[%c0, %c0_0] : memref<128x512xf32, #tpu.memory_space<vmem>>, vector<128x512xf32>
    %c0_1 = arith.constant 0 : index
    %c0_2 = arith.constant 0 : index
    %1 = vector.load %arg2[%c0_1, %c0_2] : memref<512x512xf32, #tpu.memory_space<vmem>>, vector<512x512xf32>
    %cst = arith.constant dense<0.000000e+00> : vector<128x512xf32>
    %2 = tpu.matmul %0, %1, %cst {dimension_numbers = #tpu.dot_dimension_numbers<[1], [0], [0], [1], [0, 0, 1, 1], [], []>} : vector<128x512xf32>, vector<512x512xf32>, vector<128x512xf32> -> vector<128x512xf32>
    %c0_3 = arith.constant 0 : index
    %c0_4 = arith.constant 0 : index
    %3 = vector.load %arg3[%c0_3, %c0_4] : memref<512x512xf32, #tpu.memory_space<vmem>>, vector<512x512xf32>
    %cst_5 = arith.constant dense<0.000000e+00> : vector<128x512xf32>
    %4 = tpu.matmul %2, %3, %cst_5 {dimension_numbers = #tpu.dot_dimension_numbers<[1], [0], [0], [1], [0, 0, 1, 1], [], []>} : vector<128x512xf32>, vector<512x512xf32>, vector<128x512xf32> -> vector<128x512xf32>
    %c0_6 = arith.constant 0 : index
    %c0_7 = arith.constant 0 : index
    %5 = vector.load %arg4[%c0_6, %c0_7] : memref<512x512xf32, #tpu.memory_space<vmem>>, vector<512x512xf32>
    %cst_8 = arith.constant dense<0.000000e+00> : vector<128x512xf32>
    %6 = tpu.matmul %4, %5, %cst_8 {dimension_numbers = #tpu.dot_dimension_numbers<[1], [0], [0], [1], [0, 0, 1, 1], [], []>} : vector<128x512xf32>, vector<512x512xf32>, vector<128x512xf32> -> vector<128x512xf32>
    %c0_9 = arith.constant 0 : index
    %c0_10 = arith.constant 0 : index
    %7 = vector.load %arg5[%c0_9, %c0_10] : memref<128x512xf32, #tpu.memory_space<vmem>>, vector<128x512xf32>
    tpu.vector_store %arg5[%c0_9, %c0_10], %6 {strides = array<i32>} : memref<128x512xf32, #tpu.memory_space<vmem>>, vector<128x512xf32>,
    return
  }
  func.func @transform_0(%arg0: i32) -> (i32, i32) {
    %c0_i32 = arith.constant 0 : i32
    %c0_i32_0 = arith.constant 0 : i32
    return %arg0, %c0_i32 : i32, i32
  }
  func.func @transform_1(%arg0: i32) -> (i32, i32) {
    %c0_i32 = arith.constant 0 : i32
    %c0_i32_0 = arith.constant 0 : i32
    %c0_i32_1 = arith.constant 0 : i32
    return %c0_i32, %c0_i32_0 : i32, i32
  }
  func.func @transform_2(%arg0: i32) -> (i32, i32) {
    %c0_i32 = arith.constant 0 : i32
    %c0_i32_0 = arith.constant 0 : i32
    %c0_i32_1 = arith.constant 0 : i32
    return %c0_i32, %c0_i32_0 : i32, i32
  }
  func.func @transform_3(%arg0: i32) -> (i32, i32) {
    %c0_i32 = arith.constant 0 : i32
    %c0_i32_0 = arith.constant 0 : i32
    %c0_i32_1 = arith.constant 0 : i32
    return %c0_i32, %c0_i32_0 : i32, i32
  }
  func.func @transform_4(%arg0: i32) -> (i32, i32) {
    %c0_i32 = arith.constant 0 : i32
    %c0_i32_0 = arith.constant 0 : i32
    return %arg0, %c0_i32 : i32, i32
  }
}

</mosaic_0001>

<llo_original>
// kernel: mixer_forward.1
$region0: #{mixer_forward.1}
  #allocation0 [shape = 'u32[]', space=smem, size = 0x4, offset = 0x4, fixed_abs, tag = 'smem constant byte address 0x4 - core index']
  #allocation1 [shape = 'u32[144,128]{1,0:T(1,128)}', space=vmem, size = 0x12000, scoped, tag = 'internal scratch']
  %s0 = inlined_call_operand.vmem [shape: f32[256,512], index: 0, kind: input, shape index: {}]
  %s1 = inlined_call_operand.vmem [shape: f32[512,512], index: 1, kind: input, shape index: {}]
  %s2 = inlined_call_operand.vmem [shape: f32[512,512], index: 2, kind: input, shape index: {}]
  %s3 = inlined_call_operand.vmem [shape: f32[512,512], index: 3, kind: input, shape index: {}]
  %s4 = inlined_call_operand.hbm [shape: f32[256,512], index: 4, kind: output, shape index: {}]
  %s5 = sld [smem:[#allocation0]]
  $region49: #{mixer_forward.1} parent=0
    _
  %s7 = ssub.s32 1, %s5
  %s8 = scalar_select 0, %s7, %s5
  $region1: #{mixer_forward.1} parent=0
    #allocation2 [shape = 'u8[524288]{0}', space=vmem, size = 0x80000, scoped, tag = 'output window, operand 0']
    #allocation3 [shape = 's32[2]{0}', space=sflag, size = 0x8, scoped, tag = 'scoped memory for mixer_forward.1']
    %9 = vsyncpa [#allocation3], 0
    %s10 = scalar_lea.sflag [#allocation3], 1
    %11 = vsyncpa %s10, 0
    loop: start=0, step=1, limit=4
    $region2: #{mixer_forward.1} parent=1 // loop_pre_header
      _
    $region3: #{mixer_forward.1} parent=1 // loop_header
      %s13 = sphi 0, %s17
      %p14 = scmp.ge.s32.totalorder %s13, 4
      %s23 = sphi 0, %s25
      %s26 = sphi 0, %s23
      %s27 = sphi 0, %s26
      %s43 = sphi 0, %s27
      %s47 = sphi 0, %s47
      %s49 = sphi 0, %s47
      %s50 = sphi 0, %s49
      %s64 = sphi 0, %s50
      %s68 = sphi 0, %s68
      %s70 = sphi 0, %s68
      %s71 = sphi 0, %s70
      %s85 = sphi 0, %s71
      %s89 = sphi 0, %s89
      %s91 = sphi 0, %s89
      %s92 = sphi 0, %s91
      %s106 = sphi 0, %s92
      %s112 = sphi 0, %s114
      %s115 = sphi 0, %s112
      %s116 = sphi 0, %s115
      %s132 = sphi 0, %s116
    $region4: #{mixer_forward.1} parent=1 // loop_header_branch
      %16 = sbr.rel (%p14) target = $region8
    $region5: #{mixer_forward.1} parent=1 // loop_body
      %s18 = ssub.s32 %s13, 1
      %s19 = ssub.s32 %s13, 2
      %s20 = sadd.s32 %s13, 1
      %s21 = ssub.s32 %s13, %s20
      %p22 = scmp.eq.s32.totalorder %s21, 0
      %s24 = sadd.s32 %s23, 1
      %s25 = scalar_select %p22, %s23, %s24
      %p28 = pneg %p22
      %p29 = scmp.eq.s32.totalorder %s13, 1
      %p30 = por %p28, %p29
      %p31 = scmp.ne.s32.totalorder %s23, %s26
      %p32 = scmp.eq.s32.totalorder %s13, 0
      %p33 = por %p31, %p32
      %p34 = scmp.ne.s32.totalorder %s23, %s26
      %p35 = scmp.eq.s32.totalorder %s18, 1
      %p36 = por %p34, %p35
      %p37 = scmp.ne.s32.totalorder %s26, %s27
      %p38 = scmp.eq.s32.totalorder %s18, 0
      %p39 = por %p37, %p38
      %p40 = scmp.ne.s32.totalorder %s26, %s27
      %p41 = scmp.eq.s32.totalorder %s19, 1
      %p42 = por %p40, %p41
      %p44 = scmp.ne.s32.totalorder %s27, %s43
      %p45 = scmp.eq.s32.totalorder %s19, 0
      %p46 = por %p44, %p45
      %s48 = sadd.s32 %s47, 1
      %p51 = scmp.eq.s32.totalorder %s13, 1
      %p52 = scmp.ne.s32.totalorder %s47, %s49
      %p53 = scmp.eq.s32.totalorder %s13, 0
      %p54 = por %p52, %p53
      %p55 = scmp.ne.s32.totalorder %s47, %s49
      %p56 = scmp.eq.s32.totalorder %s18, 1
      %p57 = por %p55, %p56
      %p58 = scmp.ne.s32.totalorder %s49, %s50
      %p59 = scmp.eq.s32.totalorder %s18, 0
      %p60 = por %p58, %p59
      %p61 = scmp.ne.s32.totalorder %s49, %s50
      %p62 = scmp.eq.s32.totalorder %s19, 1
      %p63 = por %p61, %p62
      %p65 = scmp.ne.s32.totalorder %s50, %s64
      %p66 = scmp.eq.s32.totalorder %s19, 0
      %p67 = por %p65, %p66
      %s69 = sadd.s32 %s68, 1
      %p72 = scmp.eq.s32.totalorder %s13, 1
      %p73 = scmp.ne.s32.totalorder %s68, %s70
      %p74 = scmp.eq.s32.totalorder %s13, 0
      %p75 = por %p73, %p74
      %p76 = scmp.ne.s32.totalorder %s68, %s70
      %p77 = scmp.eq.s32.totalorder %s18, 1
      %p78 = por %p76, %p77
      %p79 = scmp.ne.s32.totalorder %s70, %s71
      %p80 = scmp.eq.s32.totalorder %s18, 0
      %p81 = por %p79, %p80
      %p82 = scmp.ne.s32.totalorder %s70, %s71
      %p83 = scmp.eq.s32.totalorder %s19, 1
      %p84 = por %p82, %p83
      %p86 = scmp.ne.s32.totalorder %s71, %s85
      %p87 = scmp.eq.s32.totalorder %s19, 0
      %p88 = por %p86, %p87
      %s90 = sadd.s32 %s89, 1
      %p93 = scmp.eq.s32.totalorder %s13, 1
      %p94 = scmp.ne.s32.totalorder %s89, %s91
      %p95 = scmp.eq.s32.totalorder %s13, 0
      %p96 = por %p94, %p95
      %p97 = scmp.ne.s32.totalorder %s89, %s91
      %p98 = scmp.eq.s32.totalorder %s18, 1
      %p99 = por %p97, %p98
      %p100 = scmp.ne.s32.totalorder %s91, %s92
      %p101 = scmp.eq.s32.totalorder %s18, 0
      %p102 = por %p100, %p101
      %p103 = scmp.ne.s32.totalorder %s91, %s92
      %p104 = scmp.eq.s32.totalorder %s19, 1
      %p105 = por %p103, %p104
      %p107 = scmp.ne.s32.totalorder %s92, %s106
      %p108 = scmp.eq.s32.totalorder %s19, 0
      %p109 = por %p107, %p108
      %s110 = ssub.s32 %s13, %s20
      %p111 = scmp.eq.s32.totalorder %s110, 0
      %s113 = sadd.s32 %s112, 1
      %s114 = scalar_select %p111, %s112, %s113
      %p117 = pneg %p111
      %p118 = scmp.eq.s32.totalorder %s13, 1
      %p119 = por %p117, %p118
      %p120 = scmp.ne.s32.totalorder %s112, %s115
      %p121 = scmp.eq.s32.totalorder %s13, 0
      %p122 = por %p120, %p121
      %p123 = scmp.ne.s32.totalorder %s112, %s115
      %p124 = scmp.eq.s32.totalorder %s18, 1
      %p125 = por %p123, %p124
      %p126 = scmp.ne.s32.totalorder %s115, %s116
      %p127 = scmp.eq.s32.totalorder %s18, 0
      %p128 = por %p126, %p127
      %p129 = scmp.ne.s32.totalorder %s115, %s116
      %p130 = scmp.eq.s32.totalorder %s19, 1
      %p131 = por %p129, %p130
      %p133 = scmp.ne.s32.totalorder %s116, %s132
      %p134 = scmp.eq.s32.totalorder %s19, 0
      %p135 = por %p133, %p134
      %p136 = scmp.le.s32.totalorder 1, %s13
      %p137 = scmp.lt.s32.totalorder %s13, 3
      %p138 = pnand %p136, %p137
      %p139 = pneg %p138
      // Predicated region
      $region9: #{mixer_forward.1} parent=5 // pred_check
        _
      $region10: #{mixer_forward.1} parent=5 // pred_check_branch
        %141 = sbr.rel (%p138) target = $region12
      $region11: #{mixer_forward.1} parent=5 // pred_region
        %s142 = ssub.s32 %s13, 1
        // Predicated region
        $region13: #{mixer_forward.1} parent=11 // pred_check
          %p143 = pneg %p60
        $region14: #{mixer_forward.1} parent=11 // pred_check_branch
          %145 = sbr.rel (%p143) target = $region16
        $region15: #{mixer_forward.1} parent=11 // pred_region
          _
        $region16: #{mixer_forward.1} parent=11 // pred_fallthru
          _
        // Predicated region
        $region17: #{mixer_forward.1} parent=11 // pred_check
          %p146 = pneg %p81
        $region18: #{mixer_forward.1} parent=11 // pred_check_branch
          %148 = sbr.rel (%p146) target = $region20
        $region19: #{mixer_forward.1} parent=11 // pred_region
          _
        $region20: #{mixer_forward.1} parent=11 // pred_fallthru
          _
        // Predicated region
        $region21: #{mixer_forward.1} parent=11 // pred_check
          %p149 = pneg %p102
        $region22: #{mixer_forward.1} parent=11 // pred_check_branch
          %151 = sbr.rel (%p149) target = $region24
        $region23: #{mixer_forward.1} parent=11 // pred_region
          _
        $region24: #{mixer_forward.1} parent=11 // pred_fallthru
          _
      $region12: #{mixer_forward.1} parent=5 // pred_fallthru
        _
      %p152 = scmp.lt.s32.totalorder %s13, 2
      // Predicated region
      $region25: #{mixer_forward.1} parent=5 // pred_check
        %p153 = pneg %p152
      $region26: #{mixer_forward.1} parent=5 // pred_check_branch
        %155 = sbr.rel (%p153) target = $region28
      $region27: #{mixer_forward.1} parent=5 // pred_region
        // Predicated region
        $region29: #{mixer_forward.1} parent=27 // pred_check
          %p156 = pneg %p33
        $region30: #{mixer_forward.1} parent=27 // pred_check_branch
          %158 = sbr.rel (%p156) target = $region32
        $region31: #{mixer_forward.1} parent=27 // pred_region
          %s159 = smul.u32 16, %s13
          %p160 = scmp.lt.s32.totalorder %s159, 31
          %s161 = scalar_select %p160, %s159, 31
          %s162 = smul.addr %s161, 4
          %s163 = smul.addr %s162, 8
          %s164 = scalar_lea.vmem %s0, %s163
          %s165 = smul.u32 16, %s13
        $region32: #{mixer_forward.1} parent=27 // pred_fallthru
          _
      $region28: #{mixer_forward.1} parent=5 // pred_fallthru
        _
      %p166 = scmp.le.s32.totalorder 1, %s13
      %p167 = scmp.lt.s32.totalorder %s13, 3
      %p168 = pnand %p166, %p167
      %p169 = pneg %p168
      // Predicated region
      $region33: #{mixer_forward.1} parent=5 // pred_check
        _
      $region34: #{mixer_forward.1} parent=5 // pred_check_branch
        %171 = sbr.rel (%p168) target = $region36
      $region35: #{mixer_forward.1} parent=5 // pred_region
        %s172 = ssub.s32 %s13, 1
        %s173 = smul.u32 16, %s18
        %p174 = scmp.lt.s32.totalorder %s173, 31
        %s175 = scalar_select %p174, %s173, 31
        %s176 = smul.addr %s175, 4
        %s177 = smul.addr %s176, 8
        %s178 = scalar_lea.vmem %s0, %s177
        %p179 = pneg %p39
        %p180 = pneg %p36
        %p181 = pneg %p60
        %p182 = pneg %p57
        %p183 = pneg %p81
        %p184 = pneg %p78
        %p185 = pneg %p102
        %p186 = pneg %p99
        %p187 = pneg %p128
        %p188 = pneg %p125
        %s189 = sand.u32 %s115, 1
        %s190 = scalar_lea.sflag [#allocation3], %s189
        %s191 = sand.u32 %s115, 1
        %s192 = smul.addr %s191, 512
        %s193 = scalar_lea.vmem [#allocation2], %s192
        %s194 = smul.u32 16, %s18
        %p195 = scmp.lt.s32.totalorder %s194, 31
        %s196 = scalar_select %p195, %s194, 31
        %s197 = smul.addr %s196, 4
        %s198 = smul.addr %s197, 8
        %s199 = scalar_lea.vmem %s0, %s198
        %s200 = smul.u32 16, %s18
        %s201 = smul.u32 16, %s18
        %v202 = vld [vmem:[%s199] sm:$0xff]
        %v203 = vld [vmem:[%s199 + $0x8] sm:$0xff]
        %v204 = vld [vmem:[%s199 + $0x10] sm:$0xff]
        %v205 = vld [vmem:[%s199 + $0x18] sm:$0xff]
        %v206 = vld [vmem:[%s199 + $0x20] sm:$0xff]
        %v207 = vld [vmem:[%s199 + $0x28] sm:$0xff]
        %v208 = vld [vmem:[%s199 + $0x30] sm:$0xff]
        %v209 = vld [vmem:[%s199 + $0x38] sm:$0xff]
        %v210 = vld [vmem:[%s199 + $0x40] sm:$0xff]
        %v211 = vld [vmem:[%s199 + $0x48] sm:$0xff]
        %v212 = vld [vmem:[%s199 + $0x50] sm:$0xff]
        %v213 = vld [vmem:[%s199 + $0x58] sm:$0xff]
        %v214 = vld [vmem:[%s199 + $0x60] sm:$0xff]
        %v215 = vld [vmem:[%s199 + $0x68] sm:$0xff]
        %v216 = vld [vmem:[%s199 + $0x70] sm:$0xff]
        %v217 = vld [vmem:[%s199 + $0x78] sm:$0xff]
        %v218 = vld [vmem:[%s199 + $0x80] sm:$0xff]
        %v219 = vld [vmem:[%s199 + $0x88] sm:$0xff]
        %v220 = vld [vmem:[%s199 + $0x90] sm:$0xff]
        %v221 = vld [vmem:[%s199 + $0x98] sm:$0xff]
        %v222 = vld [vmem:[%s199 + $0xa0] sm:$0xff]
        %v223 = vld [vmem:[%s199 + $0xa8] sm:$0xff]
        %v224 = vld [vmem:[%s199 + $0xb0] sm:$0xff]
        %v225 = vld [vmem:[%s199 + $0xb8] sm:$0xff]
        %v226 = vld [vmem:[%s199 + $0xc0] sm:$0xff]
        %v227 = vld [vmem:[%s199 + $0xc8] sm:$0xff]
        %v228 = vld [vmem:[%s199 + $0xd0] sm:$0xff]
        %v229 = vld [vmem:[%s199 + $0xd8] sm:$0xff]
        %v230 = vld [vmem:[%s199 + $0xe0] sm:$0xff]
        %v231 = vld [vmem:[%s199 + $0xe8] sm:$0xff]
        %v232 = vld [vmem:[%s199 + $0xf0] sm:$0xff]
        %v233 = vld [vmem:[%s199 + $0xf8] sm:$0xff]
        %v234 = vld [vmem:[%s199 + $0x100] sm:$0xff]
        %v235 = vld [vmem:[%s199 + $0x108] sm:$0xff]
        %v236 = vld [vmem:[%s199 + $0x110] sm:$0xff]
        %v237 = vld [vmem:[%s199 + $0x118] sm:$0xff]
        %v238 = vld [vmem:[%s199 + $0x120] sm:$0xff]
        %v239 = vld [vmem:[%s199 + $0x128] sm:$0xff]
        %v240 = vld [vmem:[%s199 + $0x130] sm:$0xff]
        %v241 = vld [vmem:[%s199 + $0x138] sm:$0xff]
        %v242 = vld [vmem:[%s199 + $0x140] sm:$0xff]
        %v243 = vld [vmem:[%s199 + $0x148] sm:$0xff]
        %v244 = vld [vmem:[%s199 + $0x150] sm:$0xff]
        %v245 = vld [vmem:[%s199 + $0x158] sm:$0xff]
        %v246 = vld [vmem:[%s199 + $0x160] sm:$0xff]
        %v247 = vld [vmem:[%s199 + $0x168] sm:$0xff]
        %v248 = vld [vmem:[%s199 + $0x170] sm:$0xff]
        %v249 = vld [vmem:[%s199 + $0x178] sm:$0xff]
        %v250 = vld [vmem:[%s199 + $0x180] sm:$0xff]
        %v251 = vld [vmem:[%s199 + $0x188] sm:$0xff]
        %v252 = vld [vmem:[%s199 + $0x190] sm:$0xff]
        %v253 = vld [vmem:[%s199 + $0x198] sm:$0xff]
        %v254 = vld [vmem:[%s199 + $0x1a0] sm:$0xff]
        %v255 = vld [vmem:[%s199 + $0x1a8] sm:$0xff]
        %v256 = vld [vmem:[%s199 + $0x1b0] sm:$0xff]
        %v257 = vld [vmem:[%s199 + $0x1b8] sm:$0xff]
        %v258 = vld [vmem:[%s199 + $0x1c0] sm:$0xff]
        %v259 = vld [vmem:[%s199 + $0x1c8] sm:$0xff]
        %v260 = vld [vmem:[%s199 + $0x1d0] sm:$0xff]
        %v261 = vld [vmem:[%s199 + $0x1d8] sm:$0xff]
        %v262 = vld [vmem:[%s199 + $0x1e0] sm:$0xff]
        %v263 = vld [vmem:[%s199 + $0x1e8] sm:$0xff]
        %v264 = vld [vmem:[%s199 + $0x1f0] sm:$0xff]
        %v265 = vld [vmem:[%s199 + $0x1f8] sm:$0xff]
        %v266 = vld [vmem:[%s1] sm:$0xff]
        %v267 = vld [vmem:[%s1 + $0x8] sm:$0xff]
        %v268 = vld [vmem:[%s1 + $0x10] sm:$0xff]
        %v269 = vld [vmem:[%s1 + $0x18] sm:$0xff]
        %v270 = vld [vmem:[%s1 + $0x20] sm:$0xff]
        %v271 = vld [vmem:[%s1 + $0x28] sm:$0xff]
        %v272 = vld [vmem:[%s1 + $0x30] sm:$0xff]
        %v273 = vld [vmem:[%s1 + $0x38] sm:$0xff]
        %v274 = vld [vmem:[%s1 + $0x40] sm:$0xff]
        %v275 = vld [vmem:[%s1 + $0x48] sm:$0xff]
        %v276 = vld [vmem:[%s1 + $0x50] sm:$0xff]
        %v277 = vld [vmem:[%s1 + $0x58] sm:$0xff]
        %v278 = vld [vmem:[%s1 + $0x60] sm:$0xff]
        %v279 = vld [vmem:[%s1 + $0x68] sm:$0xff]
        %v280 = vld [vmem:[%s1 + $0x70] sm:$0xff]
        %v281 = vld [vmem:[%s1 + $0x78] sm:$0xff]
        %v282 = vld [vmem:[%s1 + $0x80] sm:$0xff]
        %v283 = vld [vmem:[%s1 + $0x88] sm:$0xff]
        %v284 = vld [vmem:[%s1 + $0x90] sm:$0xff]
        %v285 = vld [vmem:[%s1 + $0x98] sm:$0xff]
        %v286 = vld [vmem:[%s1 + $0xa0] sm:$0xff]
        %v287 = vld [vmem:[%s1 + $0xa8] sm:$0xff]
        %v288 = vld [vmem:[%s1 + $0xb0] sm:$0xff]
        %v289 = vld [vmem:[%s1 + $0xb8] sm:$0xff]
        %v290 = vld [vmem:[%s1 + $0xc0] sm:$0xff]
        %v291 = vld [vmem:[%s1 + $0xc8] sm:$0xff]
        %v292 = vld [vmem:[%s1 + $0xd0] sm:$0xff]
        %v293 = vld [vmem:[%s1 + $0xd8] sm:$0xff]
        %v294 = vld [vmem:[%s1 + $0xe0] sm:$0xff]
        %v295 = vld [vmem:[%s1 + $0xe8] sm:$0xff]
        %v296 = vld [vmem:[%s1 + $0xf0] sm:$0xff]
        %v297 = vld [vmem:[%s1 + $0xf8] sm:$0xff]
        %v298 = vld [vmem:[%s1 + $0x100] sm:$0xff]
        %v299 = vld [vmem:[%s1 + $0x108] sm:$0xff]
        %v300 = vld [vmem:[%s1 + $0x110] sm:$0xff]
        %v301 = vld [vmem:[%s1 + $0x118] sm:$0xff]
        %v302 = vld [vmem:[%s1 + $0x120] sm:$0xff]
        %v303 = vld [vmem:[%s1 + $0x128] sm:$0xff]
        %v304 = vld [vmem:[%s1 + $0x130] sm:$0xff]
        %v305 = vld [vmem:[%s1 + $0x138] sm:$0xff]
        %v306 = vld [vmem:[%s1 + $0x140] sm:$0xff]
        %v307 = vld [vmem:[%s1 + $0x148] sm:$0xff]
        %v308 = vld [vmem:[%s1 + $0x150] sm:$0xff]
        %v309 = vld [vmem:[%s1 + $0x158] sm:$0xff]
        %v310 = vld [vmem:[%s1 + $0x160] sm:$0xff]
        %v311 = vld [vmem:[%s1 + $0x168] sm:$0xff]
        %v312 = vld [vmem:[%s1 + $0x170] sm:$0xff]
        %v313 = vld [vmem:[%s1 + $0x178] sm:$0xff]
        %v314 = vld [vmem:[%s1 + $0x180] sm:$0xff]
        %v315 = vld [vmem:[%s1 + $0x188] sm:$0xff]
        %v316 = vld [vmem:[%s1 + $0x190] sm:$0xff]
        %v317 = vld [vmem:[%s1 + $0x198] sm:$0xff]
        %v318 = vld [vmem:[%s1 + $0x1a0] sm:$0xff]
        %v319 = vld [vmem:[%s1 + $0x1a8] sm:$0xff]
        %v320 = vld [vmem:[%s1 + $0x1b0] sm:$0xff]
        %v321 = vld [vmem:[%s1 + $0x1b8] sm:$0xff]
        %v322 = vld [vmem:[%s1 + $0x1c0] sm:$0xff]
        %v323 = vld [vmem:[%s1 + $0x1c8] sm:$0xff]
        %v324 = vld [vmem:[%s1 + $0x1d0] sm:$0xff]
        %v325 = vld [vmem:[%s1 + $0x1d8] sm:$0xff]
        %v326 = vld [vmem:[%s1 + $0x1e0] sm:$0xff]
        %v327 = vld [vmem:[%s1 + $0x1e8] sm:$0xff]
        %v328 = vld [vmem:[%s1 + $0x1f0] sm:$0xff]
        %v329 = vld [vmem:[%s1 + $0x1f8] sm:$0xff]
        %v330 = vld [vmem:[%s1 + $0x200] sm:$0xff]
        %v331 = vld [vmem:[%s1 + $0x208] sm:$0xff]
        %v332 = vld [vmem:[%s1 + $0x210] sm:$0xff]
        %v333 = vld [vmem:[%s1 + $0x218] sm:$0xff]
        %v334 = vld [vmem:[%s1 + $0x220] sm:$0xff]
        %v335 = vld [vmem:[%s1 + $0x228] sm:$0xff]
        %v336 = vld [vmem:[%s1 + $0x230] sm:$0xff]
        %v337 = vld [vmem:[%s1 + $0x238] sm:$0xff]
        %v338 = vld [vmem:[%s1 + $0x240] sm:$0xff]
        %v339 = vld [vmem:[%s1 + $0x248] sm:$0xff]
        %v340 = vld [vmem:[%s1 + $0x250] sm:$0xff]
        %v341 = vld [vmem:[%s1 + $0x258] sm:$0xff]
        %v342 = vld [vmem:[%s1 + $0x260] sm:$0xff]
        %v343 = vld [vmem:[%s1 + $0x268] sm:$0xff]
        %v344 = vld [vmem:[%s1 + $0x270] sm:$0xff]
        %v345 = vld [vmem:[%s1 + $0x278] sm:$0xff]
        %v346 = vld [vmem:[%s1 + $0x280] sm:$0xff]
        %v347 = vld [vmem:[%s1 + $0x288] sm:$0xff]
        %v348 = vld [vmem:[%s1 + $0x290] sm:$0xff]
        %v349 = vld [vmem:[%s1 + $0x298] sm:$0xff]
        %v350 = vld [vmem:[%s1 + $0x2a0] sm:$0xff]
        %v351 = vld [vmem:[%s1 + $0x2a8] sm:$0xff]
        %v352 = vld [vmem:[%s1 + $0x2b0] sm:$0xff]
        %v353 = vld [vmem:[%s1 + $0x2b8] sm:$0xff]
        %v354 = vld [vmem:[%s1 + $0x2c0] sm:$0xff]
        %v355 = vld [vmem:[%s1 + $0x2c8] sm:$0xff]
        %v356 = vld [vmem:[%s1 + $0x2d0] sm:$0xff]
        %v357 = vld [vmem:[%s1 + $0x2d8] sm:$0xff]
        %v358 = vld [vmem:[%s1 + $0x2e0] sm:$0xff]
        %v359 = vld [vmem:[%s1 + $0x2e8] sm:$0xff]
        %v360 = vld [vmem:[%s1 + $0x2f0] sm:$0xff]
        %v361 = vld [vmem:[%s1 + $0x2f8] sm:$0xff]
        %v362 = vld [vmem:[%s1 + $0x300] sm:$0xff]
        %v363 = vld [vmem:[%s1 + $0x308] sm:$0xff]
        %v364 = vld [vmem:[%s1 + $0x310] sm:$0xff]
        %v365 = vld [vmem:[%s1 + $0x318] sm:$0xff]
        %v366 = vld [vmem:[%s1 + $0x320] sm:$0xff]
        %v367 = vld [vmem:[%s1 + $0x328] sm:$0xff]
        %v368 = vld [vmem:[%s1 + $0x330] sm:$0xff]
        %v369 = vld [vmem:[%s1 + $0x338] sm:$0xff]
        %v370 = vld [vmem:[%s1 + $0x340] sm:$0xff]
        %v371 = vld [vmem:[%s1 + $0x348] sm:$0xff]
        %v372 = vld [vmem:[%s1 + $0x350] sm:$0xff]
        %v373 = vld [vmem:[%s1 + $0x358] sm:$0xff]
        %v374 = vld [vmem:[%s1 + $0x360] sm:$0xff]
        %v375 = vld [vmem:[%s1 + $0x368] sm:$0xff]
        %v376 = vld [vmem:[%s1 + $0x370] sm:$0xff]
        %v377 = vld [vmem:[%s1 + $0x378] sm:$0xff]
        %v378 = vld [vmem:[%s1 + $0x380] sm:$0xff]
        %v379 = vld [vmem:[%s1 + $0x388] sm:$0xff]
        %v380 = vld [vmem:[%s1 + $0x390] sm:$0xff]
        %v381 = vld [vmem:[%s1 + $0x398] sm:$0xff]
        %v382 = vld [vmem:[%s1 + $0x3a0] sm:$0xff]
        %v383 = vld [vmem:[%s1 + $0x3a8] sm:$0xff]
        %v384 = vld [vmem:[%s1 + $0x3b0] sm:$0xff]
        %v385 = vld [vmem:[%s1 + $0x3b8] sm:$0xff]
        %v386 = vld [vmem:[%s1 + $0x3c0] sm:$0xff]
        %v387 = vld [vmem:[%s1 + $0x3c8] sm:$0xff]
        %v388 = vld [vmem:[%s1 + $0x3d0] sm:$0xff]
        %v389 = vld [vmem:[%s1 + $0x3d8] sm:$0xff]
        %v390 = vld [vmem:[%s1 + $0x3e0] sm:$0xff]
        %v391 = vld [vmem:[%s1 + $0x3e8] sm:$0xff]
        %v392 = vld [vmem:[%s1 + $0x3f0] sm:$0xff]
        %v393 = vld [vmem:[%s1 + $0x3f8] sm:$0xff]
        %v394 = vld [vmem:[%s1 + $0x400] sm:$0xff]
        %v395 = vld [vmem:[%s1 + $0x408] sm:$0xff]
        %v396 = vld [vmem:[%s1 + $0x410] sm:$0xff]
        %v397 = vld [vmem:[%s1 + $0x418] sm:$0xff]
        %v398 = vld [vmem:[%s1 + $0x420] sm:$0xff]
        %v399 = vld [vmem:[%s1 + $0x428] sm:$0xff]
        %v400 = vld [vmem:[%s1 + $0x430] sm:$0xff]
        %v401 = vld [vmem:[%s1 + $0x438] sm:$0xff]
        %v402 = vld [vmem:[%s1 + $0x440] sm:$0xff]
        %v403 = vld [vmem:[%s1 + $0x448] sm:$0xff]
        %v404 = vld [vmem:[%s1 + $0x450] sm:$0xff]
        %v405 = vld [vmem:[%s1 + $0x458] sm:$0xff]
        %v406 = vld [vmem:[%s1 + $0x460] sm:$0xff]
        %v407 = vld [vmem:[%s1 + $0x468] sm:$0xff]
        %v408 = vld [vmem:[%s1 + $0x470] sm:$0xff]
        %v409 = vld [vmem:[%s1 + $0x478] sm:$0xff]
        %v410 = vld [vmem:[%s1 + $0x480] sm:$0xff]
        %v411 = vld [vmem:[%s1 + $0x488] sm:$0xff]
        %v412 = vld [vmem:[%s1 + $0x490] sm:$0xff]
        %v413 = vld [vmem:[%s1 + $0x498] sm:$0xff]
        %v414 = vld [vmem:[%s1 + $0x4a0] sm:$0xff]
        %v415 = vld [vmem:[%s1 + $0x4a8] sm:$0xff]
        %v416 = vld [vmem:[%s1 + $0x4b0] sm:$0xff]
        %v417 = vld [vmem:[%s1 + $0x4b8] sm:$0xff]
        %v418 = vld [vmem:[%s1 + $0x4c0] sm:$0xff]
        %v419 = vld [vmem:[%s1 + $0x4c8] sm:$0xff]
        %v420 = vld [vmem:[%s1 + $0x4d0] sm:$0xff]
        %v421 = vld [vmem:[%s1 + $0x4d8] sm:$0xff]
        %v422 = vld [vmem:[%s1 + $0x4e0] sm:$0xff]
        %v423 = vld [vmem:[%s1 + $0x4e8] sm:$0xff]
        %v424 = vld [vmem:[%s1 + $0x4f0] sm:$0xff]
        %v425 = vld [vmem:[%s1 + $0x4f8] sm:$0xff]
        %v426 = vld [vmem:[%s1 + $0x500] sm:$0xff]
        %v427 = vld [vmem:[%s1 + $0x508] sm:$0xff]
        %v428 = vld [vmem:[%s1 + $0x510] sm:$0xff]
        %v429 = vld [vmem:[%s1 + $0x518] sm:$0xff]
        %v430 = vld [vmem:[%s1 + $0x520] sm:$0xff]
        %v431 = vld [vmem:[%s1 + $0x528] sm:$0xff]
        %v432 = vld [vmem:[%s1 + $0x530] sm:$0xff]
        %v433 = vld [vmem:[%s1 + $0x538] sm:$0xff]
        %v434 = vld [vmem:[%s1 + $0x540] sm:$0xff]
        %v435 = vld [vmem:[%s1 + $0x548] sm:$0xff]
        %v436 = vld [vmem:[%s1 + $0x550] sm:$0xff]
        %v437 = vld [vmem:[%s1 + $0x558] sm:$0xff]
        %v438 = vld [vmem:[%s1 + $0x560] sm:$0xff]
        %v439 = vld [vmem:[%s1 + $0x568] sm:$0xff]
        %v440 = vld [vmem:[%s1 + $0x570] sm:$0xff]
        %v441 = vld [vmem:[%s1 + $0x578] sm:$0xff]
        %v442 = vld [vmem:[%s1 + $0x580] sm:$0xff]
        %v443 = vld [vmem:[%s1 + $0x588] sm:$0xff]
        %v444 = vld [vmem:[%s1 + $0x590] sm:$0xff]
        %v445 = vld [vmem:[%s1 + $0x598] sm:$0xff]
        %v446 = vld [vmem:[%s1 + $0x5a0] sm:$0xff]
        %v447 = vld [vmem:[%s1 + $0x5a8] sm:$0xff]
        %v448 = vld [vmem:[%s1 + $0x5b0] sm:$0xff]
        %v449 = vld [vmem:[%s1 + $0x5b8] sm:$0xff]
        %v450 = vld [vmem:[%s1 + $0x5c0] sm:$0xff]
        %v451 = vld [vmem:[%s1 + $0x5c8] sm:$0xff]
        %v452 = vld [vmem:[%s1 + $0x5d0] sm:$0xff]
        %v453 = vld [vmem:[%s1 + $0x5d8] sm:$0xff]
        %v454 = vld [vmem:[%s1 + $0x5e0] sm:$0xff]
        %v455 = vld [vmem:[%s1 + $0x5e8] sm:$0xff]
        %v456 = vld [vmem:[%s1 + $0x5f0] sm:$0xff]
        %v457 = vld [vmem:[%s1 + $0x5f8] sm:$0xff]
        %v458 = vld [vmem:[%s1 + $0x600] sm:$0xff]
        %v459 = vld [vmem:[%s1 + $0x608] sm:$0xff]
        %v460 = vld [vmem:[%s1 + $0x610] sm:$0xff]
        %v461 = vld [vmem:[%s1 + $0x618] sm:$0xff]
        %v462 = vld [vmem:[%s1 + $0x620] sm:$0xff]
        %v463 = vld [vmem:[%s1 + $0x628] sm:$0xff]
        %v464 = vld [vmem:[%s1 + $0x630] sm:$0xff]
        %v465 = vld [vmem:[%s1 + $0x638] sm:$0xff]
        %v466 = vld [vmem:[%s1 + $0x640] sm:$0xff]
        %v467 = vld [vmem:[%s1 + $0x648] sm:$0xff]
        %v468 = vld [vmem:[%s1 + $0x650] sm:$0xff]
        %v469 = vld [vmem:[%s1 + $0x658] sm:$0xff]
        %v470 = vld [vmem:[%s1 + $0x660] sm:$0xff]
        %v471 = vld [vmem:[%s1 + $0x668] sm:$0xff]
        %v472 = vld [vmem:[%s1 + $0x670] sm:$0xff]
        %v473 = vld [vmem:[%s1 + $0x678] sm:$0xff]
        %v474 = vld [vmem:[%s1 + $0x680] sm:$0xff]
        %v475 = vld [vmem:[%s1 + $0x688] sm:$0xff]
        %v476 = vld [vmem:[%s1 + $0x690] sm:$0xff]
        %v477 = vld [vmem:[%s1 + $0x698] sm:$0xff]
        %v478 = vld [vmem:[%s1 + $0x6a0] sm:$0xff]
        %v479 = vld [vmem:[%s1 + $0x6a8] sm:$0xff]
        %v480 = vld [vmem:[%s1 + $0x6b0] sm:$0xff]
        %v481 = vld [vmem:[%s1 + $0x6b8] sm:$0xff]
        %v482 = vld [vmem:[%s1 + $0x6c0] sm:$0xff]
        %v483 = vld [vmem:[%s1 + $0x6c8] sm:$0xff]
        %v484 = vld [vmem:[%s1 + $0x6d0] sm:$0xff]
        %v485 = vld [vmem:[%s1 + $0x6d8] sm:$0xff]
        %v486 = vld [vmem:[%s1 + $0x6e0] sm:$0xff]
        %v487 = vld [vmem:[%s1 + $0x6e8] sm:$0xff]
        %v488 = vld [vmem:[%s1 + $0x6f0] sm:$0xff]
        %v489 = vld [vmem:[%s1 + $0x6f8] sm:$0xff]
        %v490 = vld [vmem:[%s1 + $0x700] sm:$0xff]
        %v491 = vld [vmem:[%s1 + $0x708] sm:$0xff]
        %v492 = vld [vmem:[%s1 + $0x710] sm:$0xff]
        %v493 = vld [vmem:[%s1 + $0x718] sm:$0xff]
        %v494 = vld [vmem:[%s1 + $0x720] sm:$0xff]
        %v495 = vld [vmem:[%s1 + $0x728] sm:$0xff]
        %v496 = vld [vmem:[%s1 + $0x730] sm:$0xff]
        %v497 = vld [vmem:[%s1 + $0x738] sm:$0xff]
        %v498 = vld [vmem:[%s1 + $0x740] sm:$0xff]
        %v499 = vld [vmem:[%s1 + $0x748] sm:$0xff]
        %v500 = vld [vmem:[%s1 + $0x750] sm:$0xff]
        %v501 = vld [vmem:[%s1 + $0x758] sm:$0xff]
        %v502 = vld [vmem:[%s1 + $0x760] sm:$0xff]
        %v503 = vld [vmem:[%s1 + $0x768] sm:$0xff]
        %v504 = vld [vmem:[%s1 + $0x770] sm:$0xff]
        %v505 = vld [vmem:[%s1 + $0x778] sm:$0xff]
        %v506 = vld [vmem:[%s1 + $0x780] sm:$0xff]
        %v507 = vld [vmem:[%s1 + $0x788] sm:$0xff]
        %v508 = vld [vmem:[%s1 + $0x790] sm:$0xff]
        %v509 = vld [vmem:[%s1 + $0x798] sm:$0xff]
        %v510 = vld [vmem:[%s1 + $0x7a0] sm:$0xff]
        %v511 = vld [vmem:[%s1 + $0x7a8] sm:$0xff]
        %v512 = vld [vmem:[%s1 + $0x7b0] sm:$0xff]
        %v513 = vld [vmem:[%s1 + $0x7b8] sm:$0xff]
        %v514 = vld [vmem:[%s1 + $0x7c0] sm:$0xff]
        %v515 = vld [vmem:[%s1 + $0x7c8] sm:$0xff]
        %v516 = vld [vmem:[%s1 + $0x7d0] sm:$0xff]
        %v517 = vld [vmem:[%s1 + $0x7d8] sm:$0xff]
        %v518 = vld [vmem:[%s1 + $0x7e0] sm:$0xff]
        %v519 = vld [vmem:[%s1 + $0x7e8] sm:$0xff]
        %v520 = vld [vmem:[%s1 + $0x7f0] sm:$0xff]
        %v521 = vld [vmem:[%s1 + $0x7f8] sm:$0xff]
        %522 = vmatprep.subr.mxu0 %v267
        %523 = vmatpush1.msra.mxu0 %v266
        %524 = vmatprep.subr.mxu0 %v271
        %525 = vmatpush1.msra.mxu0 %v270
        %526 = vmatprep.subr.mxu0 %v275
        %527 = vmatpush1.msra.mxu0 %v274
        %528 = vmatprep.subr.mxu0 %v279
        %529 = vmatpush1.msra.mxu0 %v278
        %530 = vmatprep.subr.mxu0 %v283
        %531 = vmatpush1.msra.mxu0 %v282
        %532 = vmatprep.subr.mxu0 %v287
        %533 = vmatpush1.msra.mxu0 %v286
        %534 = vmatprep.subr.mxu0 %v291
        %535 = vmatpush1.msra.mxu0 %v290
        %536 = vmatprep.subr.mxu0 %v295
        %537 = vmatpush1.msra.mxu0 %v294
        %538 = vmatprep.subr.mxu0 %v299
        %539 = vmatpush1.msra.mxu0 %v298
        %540 = vmatprep.subr.mxu0 %v303
        %541 = vmatpush1.msra.mxu0 %v302
        %542 = vmatprep.subr.mxu0 %v307
        %543 = vmatpush1.msra.mxu0 %v306
        %544 = vmatprep.subr.mxu0 %v311
        %545 = vmatpush1.msra.mxu0 %v310
        %546 = vmatprep.subr.mxu0 %v315
        %547 = vmatpush1.msra.mxu0 %v314
        %548 = vmatprep.subr.mxu0 %v319
        %549 = vmatpush1.msra.mxu0 %v318
        %550 = vmatprep.subr.mxu0 %v323
        %551 = vmatpush1.msra.mxu0 %v322
        %552 = vmatprep.subr.mxu0 %v327
        %553 = vmatpush1.msra.mxu0 %v326
        %554 = vmatprep.subr.mxu0 %v331
        %555 = vmatpush1.msra.mxu0 %v330
        %556 = vmatprep.subr.mxu0 %v335
        %557 = vmatpush1.msra.mxu0 %v334
        %558 = vmatprep.subr.mxu0 %v339
        %559 = vmatpush1.msra.mxu0 %v338
        %560 = vmatprep.subr.mxu0 %v343
        %561 = vmatpush1.msra.mxu0 %v342
        %562 = vmatprep.subr.mxu0 %v347
        %563 = vmatpush1.msra.mxu0 %v346
        %564 = vmatprep.subr.mxu0 %v351
        %565 = vmatpush1.msra.mxu0 %v350
        %566 = vmatprep.subr.mxu0 %v355
        %567 = vmatpush1.msra.mxu0 %v354
        %568 = vmatprep.subr.mxu0 %v359
        %569 = vmatpush1.msra.mxu0 %v358
        %570 = vmatprep.subr.mxu0 %v363
        %571 = vmatpush1.msra.mxu0 %v362
        %572 = vmatprep.subr.mxu0 %v367
        %573 = vmatpush1.msra.mxu0 %v366
        %574 = vmatprep.subr.mxu0 %v371
        %575 = vmatpush1.msra.mxu0 %v370
        %576 = vmatprep.subr.mxu0 %v375
        %577 = vmatpush1.msra.mxu0 %v374
        %578 = vmatprep.subr.mxu0 %v379
        %579 = vmatpush1.msra.mxu0 %v378
        %580 = vmatprep.subr.mxu0 %v383
        %581 = vmatpush1.msra.mxu0 %v382
        %582 = vmatprep.subr.mxu0 %v387
        %583 = vmatpush1.msra.mxu0 %v386
        %584 = vmatprep.subr.mxu0 %v391
        %585 = vmatpush1.msra.mxu0 %v390
        %586 = vmatprep.mubr.f32.mxu0 %v203
        %587 = vmatmul.mubr.f32.gmra.mrb[0].mxu0 %v202
        %v588 = vpop.f32.mrb[0].mxu0
        %v589 = vadd.f32 0.0, %v588
        %v590 = vpop.f32.mrb[0].mxu0
        %v591 = vadd.f32 0.0, %v590
        %592 = vmatprep.mubr.f32.mxu0 %v207
        %593 = vmatmul.mubr.f32.gmra.mrb[0].mxu0 %v206
        %v594 = vpop.f32.mrb[0].mxu0
        %v595 = vadd.f32 0.0, %v594
        %v596 = vpop.f32.mrb[0].mxu0
        %v597 = vadd.f32 0.0, %v596
        %598 = vmatprep.mubr.f32.mxu0 %v211
        %599 = vmatmul.mubr.f32.gmra.mrb[0].mxu0 %v210
        %v600 = vpop.f32.mrb[0].mxu0
        %v601 = vadd.f32 0.0, %v600
        %v602 = vpop.f32.mrb[0].mxu0
        %v603 = vadd.f32 0.0, %v602
        %604 = vmatprep.mubr.f32.mxu0 %v215
        %605 = vmatmul.mubr.f32.gmra.mrb[0].mxu0 %v214
        %v606 = vpop.f32.mrb[0].mxu0
        %v607 = vadd.f32 0.0, %v606
        %v608 = vpop.f32.mrb[0].mxu0
        %v609 = vadd.f32 0.0, %v608
        %610 = vmatprep.mubr.f32.mxu0 %v219
        %611 = vmatmul.mubr.f32.gmra.mrb[0].mxu0 %v218
        %v612 = vpop.f32.mrb[0].mxu0
        %v613 = vadd.f32 0.0, %v612
        %v614 = vpop.f32.mrb[0].mxu0
        %v615 = vadd.f32 0.0, %v614
        %616 = vmatprep.mubr.f32.mxu0 %v223
        %617 = vmatmul.mubr.f32.gmra.mrb[0].mxu0 %v222
        %v618 = vpop.f32.mrb[0].mxu0
        %v619 = vadd.f32 0.0, %v618
        %v620 = vpop.f32.mrb[0].mxu0
        %v621 = vadd.f32 0.0, %v620
        %622 = vmatprep.mubr.f32.mxu0 %v227
        %623 = vmatmul.mubr.f32.gmra.mrb[0].mxu0 %v226
        %v624 = vpop.f32.mrb[0].mxu0
        %v625 = vadd.f32 0.0, %v624
        %v626 = vpop.f32.mrb[0].mxu0
        %v627 = vadd.f32 0.0, %v626
        %628 = vmatprep.mubr.f32.mxu0 %v231
        %629 = vmatmul.mubr.f32.gmra.mrb[0].mxu0 %v230
        %v630 = vpop.f32.mrb[0].mxu0
        %v631 = vadd.f32 0.0, %v630
        %v632 = vpop.f32.mrb[0].mxu0
        %v633 = vadd.f32 0.0, %v632
        %634 = vmatprep.mubr.f32.mxu0 %v235
        %635 = vmatmul.mubr.f32.gmra.mrb[0].mxu0 %v234
        %v636 = vpop.f32.mrb[0].mxu0
        %v637 = vadd.f32 0.0, %v636
        %v638 = vpop.f32.mrb[0].mxu0
        %v639 = vadd.f32 0.0, %v638
        %640 = vmatprep.mubr.f32.mxu0 %v239
        %641 = vmatmul.mubr.f32.gmra.mrb[0].mxu0 %v238
        %v642 = vpop.f32.mrb[0].mxu0
        %v643 = vadd.f32 0.0, %v642
        %v644 = vpop.f32.mrb[0].mxu0
        %v645 = vadd.f32 0.0, %v644
        %646 = vmatprep.mubr.f32.mxu0 %v243
        %647 = vmatmul.mubr.f32.gmra.mrb[0].mxu0 %v242
        %v648 = vpop.f32.mrb[0].mxu0
        %v649 = vadd.f32 0.0, %v648
        %v650 = vpop.f32.mrb[0].mxu0
        %v651 = vadd.f32 0.0, %v650
        %652 = vmatprep.mubr.f32.mxu0 %v247
        %653 = vmatmul.mubr.f32.gmra.mrb[0].mxu0 %v246
        %v654 = vpop.f32.mrb[0].mxu0
        %v655 = vadd.f32 0.0, %v654
        %v656 = vpop.f32.mrb[0].mxu0
        %v657 = vadd.f32 0.0, %v656
        %658 = vmatprep.mubr.f32.mxu0 %v251
        %659 = vmatmul.mubr.f32.gmra.mrb[0].mxu0 %v250
        %v660 = vpop.f32.mrb[0].mxu0
        %v661 = vadd.f32 0.0, %v660
        %v662 = vpop.f32.mrb[0].mxu0
        %v663 = vadd.f32 0.0, %v662
        %664 = vmatprep.mubr.f32.mxu0 %v255
        %665 = vmatmul.mubr.f32.gmra.mrb[0].mxu0 %v254
        %v666 = vpop.f32.mrb[0].mxu0
        %v667 = vadd.f32 0.0, %v666
        %v668 = vpop.f32.mrb[0].mxu0
        %v669 = vadd.f32 0.0, %v668
        %670 = vmatprep.mubr.f32.mxu0 %v259
        %671 = vmatmul.mubr.f32.gmra.mrb[0].mxu0 %v258
        %v672 = vpop.f32.mrb[0].mxu0
        %v673 = vadd.f32 0.0, %v672
        %v674 = vpop.f32.mrb[0].mxu0
        %v675 = vadd.f32 0.0, %v674
        %676 = vmatprep.mubr.f32.mxu0 %v263
        %677 = vmatmul.mubr.f32.gmra.mrb[0].mxu0 %v262
        %v678 = vpop.f32.mrb[0].mxu0
        %v679 = vadd.f32 0.0, %v678
        %v680 = vpop.f32.mrb[0].mxu0
        %v681 = vadd.f32 0.0, %v680
        %682 = vdwg.mxu0
        %683 = vmatprep.subr.mxu0 %v395
        %684 = vmatpush1.msra.mxu0 %v394
        %685 = vmatprep.subr.mxu0 %v399
        %686 = vmatpush1.msra.mxu0 %v398
        %687 = vmatprep.subr.mxu0 %v403
        %688 = vmatpush1.msra.mxu0 %v402
        %689 = vmatprep.subr.mxu0 %v407
        %690 = vmatpush1.msra.mxu0 %v406
        %691 = vmatprep.subr.mxu0 %v411
        %692 = vmatpush1.msra.mxu0 %v410
        %693 = vmatprep.subr.mxu0 %v415
        %694 = vmatpush1.msra.mxu0 %v414
        %695 = vmatprep.subr.mxu0 %v419
        %696 = vmatpush1.msra.mxu0 %v418
        %697 = vmatprep.subr.mxu0 %v423
        %698 = vmatpush1.msra.mxu0 %v422
        %699 = vmatprep.subr.mxu0 %v427
        %700 = vmatpush1.msra.mxu0 %v426
        %701 = vmatprep.subr.mxu0 %v431
        %702 = vmatpush1.msra.mxu0 %v430
        %703 = vmatprep.subr.mxu0 %v435
        %704 = vmatpush1.msra.mxu0 %v434
        %705 = vmatprep.subr.mxu0 %v439
        %706 = vmatpush1.msra.mxu0 %v438
        %707 = vmatprep.subr.mxu0 %v443
        %708 = vmatpush1.msra.mxu0 %v442
        %709 = vmatprep.subr.mxu0 %v447
        %710 = vmatpush1.msra.mxu0 %v446
        %711 = vmatprep.subr.mxu0 %v451
        %712 = vmatpush1.msra.mxu0 %v450
        %713 = vmatprep.subr.mxu0 %v455
        %714 = vmatpush1.msra.mxu0 %v454
        %715 = vmatprep.subr.mxu0 %v459
        %716 = vmatpush1.msra.mxu0 %v458
        %717 = vmatprep.subr.mxu0 %v463
        %718 = vmatpush1.msra.mxu0 %v462
        %719 = vmatprep.subr.mxu0 %v467
        %720 = vmatpush1.msra.mxu0 %v466
        %721 = vmatprep.subr.mxu0 %v471
        %722 = vmatpush1.msra.mxu0 %v470
        %723 = vmatprep.subr.mxu0 %v475
        %724 = vmatpush1.msra.mxu0 %v474
        %725 = vmatprep.subr.mxu0 %v479
        %726 = vmatpush1.msra.mxu0 %v478
        %727 = vmatprep.subr.mxu0 %v483
        %728 = vmatpush1.msra.mxu0 %v482
        %729 = vmatprep.subr.mxu0 %v487
        %730 = vmatpush1.msra.mxu0 %v486
        %731 = vmatprep.subr.mxu0 %v491
        %732 = vmatpush1.msra.mxu0 %v490
        %733 = vmatprep.subr.mxu0 %v495
        %734 = vmatpush1.msra.mxu0 %v494
        %735 = vmatprep.subr.mxu0 %v499
        %736 = vmatpush1.msra.mxu0 %v498
        %737 = vmatprep.subr.mxu0 %v503
        %738 = vmatpush1.msra.mxu0 %v502
        %739 = vmatprep.subr.mxu0 %v507
        %740 = vmatpush1.msra.mxu0 %v506
        %741 = vmatprep.subr.mxu0 %v511
        %742 = vmatpush1.msra.mxu0 %v510
        %743 = vmatprep.subr.mxu0 %v515
        %744 = vmatpush1.msra.mxu0 %v514
        %745 = vmatprep.subr.mxu0 %v519
        %746 = vmatpush1.msra.mxu0 %v518
        %747 = vmatprep.mubr.f32.mxu0 %v205
        %748 = vmatmul.mubr.f32.gmra.mrb[0].mxu0 %v204
        %v749 = vpop.f32.mrb[0].mxu0
        %v750 = vadd.f32 %v589, %v749
        %v751 = vpop.f32.mrb[0].mxu0
        %v752 = vadd.f32 %v591, %v751
        %753 = vmatprep.mubr.f32.mxu0 %v209
        %754 = vmatmul.mubr.f32.gmra.mrb[0].mxu0 %v208
        %v755 = vpop.f32.mrb[0].mxu0
        %v756 = vadd.f32 %v595, %v755
        %v757 = vpop.f32.mrb[0].mxu0
        %v758 = vadd.f32 %v597, %v757
        %759 = vmatprep.mubr.f32.mxu0 %v213
        %760 = vmatmul.mubr.f32.gmra.mrb[0].mxu0 %v212
        %v761 = vpop.f32.mrb[0].mxu0
        %v762 = vadd.f32 %v601, %v761
        %v763 = vpop.f32.mrb[0].mxu0
        %v764 = vadd.f32 %v603, %v763
        %765 = vmatprep.mubr.f32.mxu0 %v217
        %766 = vmatmul.mubr.f32.gmra.mrb[0].mxu0 %v216
        %v767 = vpop.f32.mrb[0].mxu0
        %v768 = vadd.f32 %v607, %v767
        %v769 = vpop.f32.mrb[0].mxu0
        %v770 = vadd.f32 %v609, %v769
        %771 = vmatprep.mubr.f32.mxu0 %v221
        %772 = vmatmul.mubr.f32.gmra.mrb[0].mxu0 %v220
        %v773 = vpop.f32.mrb[0].mxu0
        %v774 = vadd.f32 %v613, %v773
        %v775 = vpop.f32.mrb[0].mxu0
        %v776 = vadd.f32 %v615, %v775
        %777 = vmatprep.mubr.f32.mxu0 %v225
        %778 = vmatmul.mubr.f32.gmra.mrb[0].mxu0 %v224
        %v779 = vpop.f32.mrb[0].mxu0
        %v780 = vadd.f32 %v619, %v779
        %v781 = vpop.f32.mrb[0].mxu0
        %v782 = vadd.f32 %v621, %v781
        %783 = vmatprep.mubr.f32.mxu0 %v229
        %784 = vmatmul.mubr.f32.gmra.mrb[0].mxu0 %v228
        %v785 = vpop.f32.mrb[0].mxu0
        %v786 = vadd.f32 %v625, %v785
        %v787 = vpop.f32.mrb[0].mxu0
        %v788 = vadd.f32 %v627, %v787
        %789 = vmatprep.mubr.f32.mxu0 %v233
        %790 = vmatmul.mubr.f32.gmra.mrb[0].mxu0 %v232
        %v791 = vpop.f32.mrb[0].mxu0
        %v792 = vadd.f32 %v631, %v791
        %v793 = vpop.f32.mrb[0].mxu0
        %v794 = vadd.f32 %v633, %v793
        %795 = vmatprep.mubr.f32.mxu0 %v237
        %796 = vmatmul.mubr.f32.gmra.mrb[0].mxu0 %v236
        %v797 = vpop.f32.mrb[0].mxu0
        %v798 = vadd.f32 %v637, %v797
        %v799 = vpop.f32.mrb[0].mxu0
        %v800 = vadd.f32 %v639, %v799
        %801 = vmatprep.mubr.f32.mxu0 %v241
        %802 = vmatmul.mubr.f32.gmra.mrb[0].mxu0 %v240
        %v803 = vpop.f32.mrb[0].mxu0
        %v804 = vadd.f32 %v643, %v803
        %v805 = vpop.f32.mrb[0].mxu0
        %v806 = vadd.f32 %v645, %v805
        %807 = vmatprep.mubr.f32.mxu0 %v245
        %808 = vmatmul.mubr.f32.gmra.mrb[0].mxu0 %v244
        %v809 = vpop.f32.mrb[0].mxu0
        %v810 = vadd.f32 %v649, %v809
        %v811 = vpop.f32.mrb[0].mxu0
        %v812 = vadd.f32 %v651, %v811
        %813 = vmatprep.mubr.f32.mxu0 %v249
        %814 = vmatmul.mubr.f32.gmra.mrb[0].mxu0 %v248
        %v815 = vpop.f32.mrb[0].mxu0
        %v816 = vadd.f32 %v655, %v815
        %v817 = vpop.f32.mrb[0].mxu0
        %v818 = vadd.f32 %v657, %v817
        %819 = vmatprep.mubr.f32.mxu0 %v253
        %820 = vmatmul.mubr.f32.gmra.mrb[0].mxu0 %v252
        %v821 = vpop.f32.mrb[0].mxu0
        %v822 = vadd.f32 %v661, %v821
        %v823 = vpop.f32.mrb[0].mxu0
        %v824 = vadd.f32 %v663, %v823
        %825 = vmatprep.mubr.f32.mxu0 %v257
        %826 = vmatmul.mubr.f32.gmra.mrb[0].mxu0 %v256
        %v827 = vpop.f32.mrb[0].mxu0
        %v828 = vadd.f32 %v667, %v827
        %v829 = vpop.f32.mrb[0].mxu0
        %v830 = vadd.f32 %v669, %v829
        %831 = vmatprep.mubr.f32.mxu0 %v261
        %832 = vmatmul.mubr.f32.gmra.mrb[0].mxu0 %v260
        %v833 = vpop.f32.mrb[0].mxu0
        %v834 = vadd.f32 %v673, %v833
        %v835 = vpop.f32.mrb[0].mxu0
        %v836 = vadd.f32 %v675, %v835
        %837 = vmatprep.mubr.f32.mxu0 %v265
        %838 = vmatmul.mubr.f32.gmra.mrb[0].mxu0 %v264
        %v839 = vpop.f32.mrb[0].mxu0
        %v840 = vadd.f32 %v679, %v839
        %v841 = vpop.f32.mrb[0].mxu0
        %v842 = vadd.f32 %v681, %v841
        %843 = vdwg.mxu0
        %844 = vmatprep.subr.mxu0 %v269
        %845 = vmatpush1.msra.mxu0 %v268
        %846 = vmatprep.subr.mxu0 %v273
        %847 = vmatpush1.msra.mxu0 %v272
        %848 = vmatprep.subr.mxu0 %v277
        %849 = vmatpush1.msra.mxu0 %v276
        %850 = vmatprep.subr.mxu0 %v281
        %851 = vmatpush1.msra.mxu0 %v280
        %852 = vmatprep.subr.mxu0 %v285
        %853 = vmatpush1.msra.mxu0 %v284
        %854 = vmatprep.subr.mxu0 %v289
        %855 = vmatpush1.msra.mxu0 %v288
        %856 = vmatprep.subr.mxu0 %v293
        %857 = vmatpush1.msra.mxu0 %v292
        %858 = vmatprep.subr.mxu0 %v297
        %859 = vmatpush1.msra.mxu0 %v296
        %860 = vmatprep.subr.mxu0 %v301
        %861 = vmatpush1.msra.mxu0 %v300
        %862 = vmatprep.subr.mxu0 %v305
        %863 = vmatpush1.msra.mxu0 %v304
        %864 = vmatprep.subr.mxu0 %v309
        %865 = vmatpush1.msra.mxu0 %v308
        %866 = vmatprep.subr.mxu0 %v313
        %867 = vmatpush1.msra.mxu0 %v312
        %868 = vmatprep.subr.mxu0 %v317
        %869 = vmatpush1.msra.mxu0 %v316
        %870 = vmatprep.subr.mxu0 %v321
        %871 = vmatpush1.msra.mxu0 %v320
        %872 = vmatprep.subr.mxu0 %v325
        %873 = vmatpush1.msra.mxu0 %v324
        %874 = vmatprep.subr.mxu0 %v329
        %875 = vmatpush1.msra.mxu0 %v328
        %876 = vmatprep.subr.mxu0 %v333
        %877 = vmatpush1.msra.mxu0 %v332
        %878 = vmatprep.subr.mxu0 %v337
        %879 = vmatpush1.msra.mxu0 %v336
        %880 = vmatprep.subr.mxu0 %v341
        %881 = vmatpush1.msra.mxu0 %v340
        %882 = vmatprep.subr.mxu0 %v345
        %883 = vmatpush1.msra.mxu0 %v344
        %884 = vmatprep.subr.mxu0 %v349
        %885 = vmatpush1.msra.mxu0 %v348
        %886 = vmatprep.subr.mxu0 %v353
        %887 = vmatpush1.msra.mxu0 %v352
        %888 = vmatprep.subr.mxu0 %v357
        %889 = vmatpush1.msra.mxu0 %v356
        %890 = vmatprep.subr.mxu0 %v361
        %891 = vmatpush1.msra.mxu0 %v360
        %892 = vmatprep.subr.mxu0 %v365
        %893 = vmatpush1.msra.mxu0 %v364
        %894 = vmatprep.subr.mxu0 %v369
        %895 = vmatpush1.msra.mxu0 %v368
        %896 = vmatprep.subr.mxu0 %v373
        %897 = vmatpush1.msra.mxu0 %v372
        %898 = vmatprep.subr.mxu0 %v377
        %899 = vmatpush1.msra.mxu0 %v376
        %900 = vmatprep.subr.mxu0 %v381
        %901 = vmatpush1.msra.mxu0 %v380
        %902 = vmatprep.subr.mxu0 %v385
        %903 = vmatpush1.msra.mxu0 %v384
        %904 = vmatprep.subr.mxu0 %v389
        %905 = vmatpush1.msra.mxu0 %v388
        %906 = vmatprep.subr.mxu0 %v393
        %907 = vmatpush1.msra.mxu0 %v392
        %908 = vmatprep.mubr.f32.mxu0 %v203
        %909 = vmatmul.mubr.f32.gmra.mrb[0].mxu0 %v202
        %v910 = vpop.f32.mrb[0].mxu0
        %v911 = vadd.f32 0.0, %v910
        %v912 = vpop.f32.mrb[0].mxu0
        %v913 = vadd.f32 0.0, %v912
        %914 = vmatprep.mubr.f32.mxu0 %v207
        %915 = vmatmul.mubr.f32.gmra.mrb[0].mxu0 %v206
        %v916 = vpop.f32.mrb[0].mxu0
        %v917 = vadd.f32 0.0, %v916
        %v918 = vpop.f32.mrb[0].mxu0
        %v919 = vadd.f32 0.0, %v918
        %920 = vmatprep.mubr.f32.mxu0 %v211
        %921 = vmatmul.mubr.f32.gmra.mrb[0].mxu0 %v210
        %v922 = vpop.f32.mrb[0].mxu0
        %v923 = vadd.f32 0.0, %v922
        %v924 = vpop.f32.mrb[0].mxu0
        %v925 = vadd.f32 0.0, %v924
        %926 = vmatprep.mubr.f32.mxu0 %v215
        %927 = vmatmul.mubr.f32.gmra.mrb[0].mxu0 %v214
        %v928 = vpop.f32.mrb[0].mxu0
        %v929 = vadd.f32 0.0, %v928
        %v930 = vpop.f32.mrb[0].mxu0
        %v931 = vadd.f32 0.0, %v930
        %932 = vmatprep.mubr.f32.mxu0 %v219
        %933 = vmatmul.mubr.f32.gmra.mrb[0].mxu0 %v218
        %v934 = vpop.f32.mrb[0].mxu0
        %v935 = vadd.f32 0.0, %v934
        %v936 = vpop.f32.mrb[0].mxu0
        %v937 = vadd.f32 0.0, %v936
        %938 = vmatprep.mubr.f32.mxu0 %v223
        %939 = vmatmul.mubr.f32.gmra.mrb[0].mxu0 %v222
        %v940 = vpop.f32.mrb[0].mxu0
        %v941 = vadd.f32 0.0, %v940
        %v942 = vpop.f32.mrb[0].mxu0
        %v943 = vadd.f32 0.0, %v942
        %944 = vmatprep.mubr.f32.mxu0 %v227
        %945 = vmatmul.mubr.f32.gmra.mrb[0].mxu0 %v226
        %v946 = vpop.f32.mrb[0].mxu0
        %v947 = vadd.f32 0.0, %v946
        %v948 = vpop.f32.mrb[0].mxu0
        %v949 = vadd.f32 0.0, %v948
        %950 = vmatprep.mubr.f32.mxu0 %v231
        %951 = vmatmul.mubr.f32.gmra.mrb[0].mxu0 %v230
        %v952 = vpop.f32.mrb[0].mxu0
        %v953 = vadd.f32 0.0, %v952
        %v954 = vpop.f32.mrb[0].mxu0
        %v955 = vadd.f32 0.0, %v954
        %956 = vmatprep.mubr.f32.mxu0 %v235
        %957 = vmatmul.mubr.f32.gmra.mrb[0].mxu0 %v234
        %v958 = vpop.f32.mrb[0].mxu0
        %v959 = vadd.f32 0.0, %v958
        %v960 = vpop.f32.mrb[0].mxu0
        %v961 = vadd.f32 0.0, %v960
        %962 = vmatprep.mubr.f32.mxu0 %v239
        %963 = vmatmul.mubr.f32.gmra.mrb[0].mxu0 %v238
        %v964 = vpop.f32.mrb[0].mxu0
        %v965 = vadd.f32 0.0, %v964
        %v966 = vpop.f32.mrb[0].mxu0
        %v967 = vadd.f32 0.0, %v966
        %968 = vmatprep.mubr.f32.mxu0 %v243
        %969 = vmatmul.mubr.f32.gmra.mrb[0].mxu0 %v242
        %v970 = vpop.f32.mrb[0].mxu0
        %v971 = vadd.f32 0.0, %v970
        %v972 = vpop.f32.mrb[0].mxu0
        %v973 = vadd.f32 0.0, %v972
        %974 = vmatprep.mubr.f32.mxu0 %v247
        %975 = vmatmul.mubr.f32.gmra.mrb[0].mxu0 %v246
        %v976 = vpop.f32.mrb[0].mxu0
        %v977 = vadd.f32 0.0, %v976
        %v978 = vpop.f32.mrb[0].mxu0
        %v979 = vadd.f32 0.0, %v978
        %980 = vmatprep.mubr.f32.mxu0 %v251
        %981 = vmatmul.mubr.f32.gmra.mrb[0].mxu0 %v250
        %v982 = vpop.f32.mrb[0].mxu0
        %v983 = vadd.f32 0.0, %v982
        %v984 = vpop.f32.mrb[0].mxu0
        %v985 = vadd.f32 0.0, %v984
        %986 = vmatprep.mubr.f32.mxu0 %v255
        %987 = vmatmul.mubr.f32.gmra.mrb[0].mxu0 %v254
        %v988 = vpop.f32.mrb[0].mxu0
        %v989 = vadd.f32 0.0, %v988
        %v990 = vpop.f32.mrb[0].mxu0
        %v991 = vadd.f32 0.0, %v990
        %992 = vmatprep.mubr.f32.mxu0 %v259
        %993 = vmatmul.mubr.f32.gmra.mrb[0].mxu0 %v258
        %v994 = vpop.f32.mrb[0].mxu0
        %v995 = vadd.f32 0.0, %v994
        %v996 = vpop.f32.mrb[0].mxu0
        %v997 = vadd.f32 0.0, %v996
        %998 = vmatprep.mubr.f32.mxu0 %v263
        %999 = vmatmul.mubr.f32.gmra.mrb[0].mxu0 %v262
        %v1000 = vpop.f32.mrb[0].mxu0
        %v1001 = vadd.f32 0.0, %v1000
        %v1002 = vpop.f32.mrb[0].mxu0
        %v1003 = vadd.f32 0.0, %v1002
        %1004 = vdwg.mxu0
        %1005 = vmatprep.subr.mxu0 %v397
        %1006 = vmatpush1.msra.mxu0 %v396
        %1007 = vmatprep.subr.mxu0 %v401
        %1008 = vmatpush1.msra.mxu0 %v400
        %1009 = vmatprep.subr.mxu0 %v405
        %1010 = vmatpush1.msra.mxu0 %v404
        %1011 = vmatprep.subr.mxu0 %v409
        %1012 = vmatpush1.msra.mxu0 %v408
        %1013 = vmatprep.subr.mxu0 %v413
        %1014 = vmatpush1.msra.mxu0 %v412
        %1015 = vmatprep.subr.mxu0 %v417
        %1016 = vmatpush1.msra.mxu0 %v416
        %1017 = vmatprep.subr.mxu0 %v421
        %1018 = vmatpush1.msra.mxu0 %v420
        %1019 = vmatprep.subr.mxu0 %v425
        %1020 = vmatpush1.msra.mxu0 %v424
        %1021 = vmatprep.subr.mxu0 %v429
        %1022 = vmatpush1.msra.mxu0 %v428
        %1023 = vmatprep.subr.mxu0 %v433
        %1024 = vmatpush1.msra.mxu0 %v432
        %1025 = vmatprep.subr.mxu0 %v437
        %1026 = vmatpush1.msra.mxu0 %v436
        %1027 = vmatprep.subr.mxu0 %v441
        %1028 = vmatpush1.msra.mxu0 %v440
        %1029 = vmatprep.subr.mxu0 %v445
        %1030 = vmatpush1.msra.mxu0 %v444
        %1031 = vmatprep.subr.mxu0 %v449
        %1032 = vmatpush1.msra.mxu0 %v448
        %1033 = vmatprep.subr.mxu0 %v453
        %1034 = vmatpush1.msra.mxu0 %v452
        %1035 = vmatprep.subr.mxu0 %v457
        %1036 = vmatpush1.msra.mxu0 %v456
        %1037 = vmatprep.subr.mxu0 %v461
        %1038 = vmatpush1.msra.mxu0 %v460
        %1039 = vmatprep.subr.mxu0 %v465
        %1040 = vmatpush1.msra.mxu0 %v464
        %1041 = vmatprep.subr.mxu0 %v469
        %1042 = vmatpush1.msra.mxu0 %v468
        %1043 = vmatprep.subr.mxu0 %v473
        %1044 = vmatpush1.msra.mxu0 %v472
        %1045 = vmatprep.subr.mxu0 %v477
        %1046 = vmatpush1.msra.mxu0 %v476
        %1047 = vmatprep.subr.mxu0 %v481
        %1048 = vmatpush1.msra.mxu0 %v480
        %1049 = vmatprep.subr.mxu0 %v485
        %1050 = vmatpush1.msra.mxu0 %v484
        %1051 = vmatprep.subr.mxu0 %v489
        %1052 = vmatpush1.msra.mxu0 %v488
        %1053 = vmatprep.subr.mxu0 %v493
        %1054 = vmatpush1.msra.mxu0 %v492
        %1055 = vmatprep.subr.mxu0 %v497
        %1056 = vmatpush1.msra.mxu0 %v496
        %1057 = vmatprep.subr.mxu0 %v501
        %1058 = vmatpush1.msra.mxu0 %v500
        %1059 = vmatprep.subr.mxu0 %v505
        %1060 = vmatpush1.msra.mxu0 %v504
        %1061 = vmatprep.subr.mxu0 %v509
        %1062 = vmatpush1.msra.mxu0 %v508
        %1063 = vmatprep.subr.mxu0 %v513
        %1064 = vmatpush1.msra.mxu0 %v512
        %1065 = vmatprep.subr.mxu0 %v517
        %1066 = vmatpush1.msra.mxu0 %v516
        %1067 = vmatprep.subr.mxu0 %v521
        %1068 = vmatpush1.msra.mxu0 %v520
        %1069 = vmatprep.mubr.f32.mxu0 %v205
        %1070 = vmatmul.mubr.f32.gmra.mrb[0].mxu0 %v204
        %v1071 = vpop.f32.mrb[0].mxu0
        %v1072 = vadd.f32 %v911, %v1071
        %v1073 = vpop.f32.mrb[0].mxu0
        %v1074 = vadd.f32 %v913, %v1073
        %1075 = vmatprep.mubr.f32.mxu0 %v209
        %1076 = vmatmul.mubr.f32.gmra.mrb[0].mxu0 %v208
        %v1077 = vpop.f32.mrb[0].mxu0
        %v1078 = vadd.f32 %v917, %v1077
        %v1079 = vpop.f32.mrb[0].mxu0
        %v1080 = vadd.f32 %v919, %v1079
        %1081 = vmatprep.mubr.f32.mxu0 %v213
        %1082 = vmatmul.mubr.f32.gmra.mrb[0].mxu0 %v212
        %v1083 = vpop.f32.mrb[0].mxu0
        %v1084 = vadd.f32 %v923, %v1083
        %v1085 = vpop.f32.mrb[0].mxu0
        %v1086 = vadd.f32 %v925, %v1085
        %1087 = vmatprep.mubr.f32.mxu0 %v217
        %1088 = vmatmul.mubr.f32.gmra.mrb[0].mxu0 %v216
        %v1089 = vpop.f32.mrb[0].mxu0
        %v1090 = vadd.f32 %v929, %v1089
        %v1091 = vpop.f32.mrb[0].mxu0
        %v1092 = vadd.f32 %v931, %v1091
        %1093 = vmatprep.mubr.f32.mxu0 %v221
        %1094 = vmatmul.mubr.f32.gmra.mrb[0].mxu0 %v220
        %v1095 = vpop.f32.mrb[0].mxu0
        %v1096 = vadd.f32 %v935, %v1095
        %v1097 = vpop.f32.mrb[0].mxu0
        %v1098 = vadd.f32 %v937, %v1097
        %1099 = vmatprep.mubr.f32.mxu0 %v225
        %1100 = vmatmul.mubr.f32.gmra.mrb[0].mxu0 %v224
        %v1101 = vpop.f32.mrb[0].mxu0
        %v1102 = vadd.f32 %v941, %v1101
        %v1103 = vpop.f32.mrb[0].mxu0
        %v1104 = vadd.f32 %v943, %v1103
        %1105 = vmatprep.mubr.f32.mxu0 %v229
        %1106 = vmatmul.mubr.f32.gmra.mrb[0].mxu0 %v228
        %v1107 = vpop.f32.mrb[0].mxu0
        %v1108 = vadd.f32 %v947, %v1107
        %v1109 = vpop.f32.mrb[0].mxu0
        %v1110 = vadd.f32 %v949, %v1109
        %1111 = vmatprep.mubr.f32.mxu0 %v233
        %1112 = vmatmul.mubr.f32.gmra.mrb[0].mxu0 %v232
        %v1113 = vpop.f32.mrb[0].mxu0
        %v1114 = vadd.f32 %v953, %v1113
        %v1115 = vpop.f32.mrb[0].mxu0
        %v1116 = vadd.f32 %v955, %v1115
        %1117 = vmatprep.mubr.f32.mxu0 %v237
        %1118 = vmatmul.mubr.f32.gmra.mrb[0].mxu0 %v236
        %v1119 = vpop.f32.mrb[0].mxu0
        %v1120 = vadd.f32 %v959, %v1119
        %v1121 = vpop.f32.mrb[0].mxu0
        %v1122 = vadd.f32 %v961, %v1121
        %1123 = vmatprep.mubr.f32.mxu0 %v241
        %1124 = vmatmul.mubr.f32.gmra.mrb[0].mxu0 %v240
        %v1125 = vpop.f32.mrb[0].mxu0
        %v1126 = vadd.f32 %v965, %v1125
        %v1127 = vpop.f32.mrb[0].mxu0
        %v1128 = vadd.f32 %v967, %v1127
        %1129 = vmatprep.mubr.f32.mxu0 %v245
        %1130 = vmatmul.mubr.f32.gmra.mrb[0].mxu0 %v244
        %v1131 = vpop.f32.mrb[0].mxu0
        %v1132 = vadd.f32 %v971, %v1131
        %v1133 = vpop.f32.mrb[0].mxu0
        %v1134 = vadd.f32 %v973, %v1133
        %1135 = vmatprep.mubr.f32.mxu0 %v249
        %1136 = vmatmul.mubr.f32.gmra.mrb[0].mxu0 %v248
        %v1137 = vpop.f32.mrb[0].mxu0
        %v1138 = vadd.f32 %v977, %v1137
        %v1139 = vpop.f32.mrb[0].mxu0
        %v1140 = vadd.f32 %v979, %v1139
        %1141 = vmatprep.mubr.f32.mxu0 %v253
        %1142 = vmatmul.mubr.f32.gmra.mrb[0].mxu0 %v252
        %v1143 = vpop.f32.mrb[0].mxu0
        %v1144 = vadd.f32 %v983, %v1143
        %v1145 = vpop.f32.mrb[0].mxu0
        %v1146 = vadd.f32 %v985, %v1145
        %1147 = vmatprep.mubr.f32.mxu0 %v257
        %1148 = vmatmul.mubr.f32.gmra.mrb[0].mxu0 %v256
        %v1149 = vpop.f32.mrb[0].mxu0
        %v1150 = vadd.f32 %v989, %v1149
        %v1151 = vpop.f32.mrb[0].mxu0
        %v1152 = vadd.f32 %v991, %v1151
        %1153 = vmatprep.mubr.f32.mxu0 %v261
        %1154 = vmatmul.mubr.f32.gmra.mrb[0].mxu0 %v260
        %v1155 = vpop.f32.mrb[0].mxu0
        %v1156 = vadd.f32 %v995, %v1155
        %v1157 = vpop.f32.mrb[0].mxu0
        %v1158 = vadd.f32 %v997, %v1157
        %1159 = vmatprep.mubr.f32.mxu0 %v265
        %1160 = vmatmul.mubr.f32.gmra.mrb[0].mxu0 %v264
        %v1161 = vpop.f32.mrb[0].mxu0
        %v1162 = vadd.f32 %v1001, %v1161
        %v1163 = vpop.f32.mrb[0].mxu0
        %v1164 = vadd.f32 %v1003, %v1163
        %1165 = vdwg.mxu0
        %v1166 = vld [vmem:[%s2] sm:$0xff]
        %v1167 = vld [vmem:[%s2 + $0x8] sm:$0xff]
        %v1168 = vld [vmem:[%s2 + $0x10] sm:$0xff]
        %v1169 = vld [vmem:[%s2 + $0x18] sm:$0xff]
        %v1170 = vld [vmem:[%s2 + $0x20] sm:$0xff]
        %v1171 = vld [vmem:[%s2 + $0x28] sm:$0xff]
        %v1172 = vld [vmem:[%s2 + $0x30] sm:$0xff]
        %v1173 = vld [vmem:[%s2 + $0x38] sm:$0xff]
        %v1174 = vld [vmem:[%s2 + $0x40] sm:$0xff]
        %v1175 = vld [vmem:[%s2 + $0x48] sm:$0xff]
        %v1176 = vld [vmem:[%s2 + $0x50] sm:$0xff]
        %v1177 = vld [vmem:[%s2 + $0x58] sm:$0xff]
        %v1178 = vld [vmem:[%s2 + $0x60] sm:$0xff]
        %v1179 = vld [vmem:[%s2 + $0x68] sm:$0xff]
        %v1180 = vld [vmem:[%s2 + $0x70] sm:$0xff]
        %v1181 = vld [vmem:[%s2 + $0x78] sm:$0xff]
        %v1182 = vld [vmem:[%s2 + $0x80] sm:$0xff]
        %v1183 = vld [vmem:[%s2 + $0x88] sm:$0xff]
        %v1184 = vld [vmem:[%s2 + $0x90] sm:$0xff]
        %v1185 = vld [vmem:[%s2 + $0x98] sm:$0xff]
        %v1186 = vld [vmem:[%s2 + $0xa0] sm:$0xff]
        %v1187 = vld [vmem:[%s2 + $0xa8] sm:$0xff]
        %v1188 = vld [vmem:[%s2 + $0xb0] sm:$0xff]
        %v1189 = vld [vmem:[%s2 + $0xb8] sm:$0xff]
        %v1190 = vld [vmem:[%s2 + $0xc0] sm:$0xff]
        %v1191 = vld [vmem:[%s2 + $0xc8] sm:$0xff]
        %v1192 = vld [vmem:[%s2 + $0xd0] sm:$0xff]
        %v1193 = vld [vmem:[%s2 + $0xd8] sm:$0xff]
        %v1194 = vld [vmem:[%s2 + $0xe0] sm:$0xff]
        %v1195 = vld [vmem:[%s2 + $0xe8] sm:$0xff]
        %v1196 = vld [vmem:[%s2 + $0xf0] sm:$0xff]
        %v1197 = vld [vmem:[%s2 + $0xf8] sm:$0xff]
        %v1198 = vld [vmem:[%s2 + $0x100] sm:$0xff]
        %v1199 = vld [vmem:[%s2 + $0x108] sm:$0xff]
        %v1200 = vld [vmem:[%s2 + $0x110] sm:$0xff]
        %v1201 = vld [vmem:[%s2 + $0x118] sm:$0xff]
        %v1202 = vld [vmem:[%s2 + $0x120] sm:$0xff]
        %v1203 = vld [vmem:[%s2 + $0x128] sm:$0xff]
        %v1204 = vld [vmem:[%s2 + $0x130] sm:$0xff]
        %v1205 = vld [vmem:[%s2 + $0x138] sm:$0xff]
        %v1206 = vld [vmem:[%s2 + $0x140] sm:$0xff]
        %v1207 = vld [vmem:[%s2 + $0x148] sm:$0xff]
        %v1208 = vld [vmem:[%s2 + $0x150] sm:$0xff]
        %v1209 = vld [vmem:[%s2 + $0x158] sm:$0xff]
        %v1210 = vld [vmem:[%s2 + $0x160] sm:$0xff]
        %v1211 = vld [vmem:[%s2 + $0x168] sm:$0xff]
        %v1212 = vld [vmem:[%s2 + $0x170] sm:$0xff]
        %v1213 = vld [vmem:[%s2 + $0x178] sm:$0xff]
        %v1214 = vld [vmem:[%s2 + $0x180] sm:$0xff]
        %v1215 = vld [vmem:[%s2 + $0x188] sm:$0xff]
        %v1216 = vld [vmem:[%s2 + $0x190] sm:$0xff]
        %v1217 = vld [vmem:[%s2 + $0x198] sm:$0xff]
        %v1218 = vld [vmem:[%s2 + $0x1a0] sm:$0xff]
        %v1219 = vld [vmem:[%s2 + $0x1a8] sm:$0xff]
        %v1220 = vld [vmem:[%s2 + $0x1b0] sm:$0xff]
        %v1221 = vld [vmem:[%s2 + $0x1b8] sm:$0xff]
        %v1222 = vld [vmem:[%s2 + $0x1c0] sm:$0xff]
        %v1223 = vld [vmem:[%s2 + $0x1c8] sm:$0xff]
        %v1224 = vld [vmem:[%s2 + $0x1d0] sm:$0xff]
        %v1225 = vld [vmem:[%s2 + $0x1d8] sm:$0xff]
        %v1226 = vld [vmem:[%s2 + $0x1e0] sm:$0xff]
        %v1227 = vld [vmem:[%s2 + $0x1e8] sm:$0xff]
        %v1228 = vld [vmem:[%s2 + $0x1f0] sm:$0xff]
        %v1229 = vld [vmem:[%s2 + $0x1f8] sm:$0xff]
        %v1230 = vld [vmem:[%s2 + $0x200] sm:$0xff]
        %v1231 = vld [vmem:[%s2 + $0x208] sm:$0xff]
        %v1232 = vld [vmem:[%s2 + $0x210] sm:$0xff]
        %v1233 = vld [vmem:[%s2 + $0x218] sm:$0xff]
        %v1234 = vld [vmem:[%s2 + $0x220] sm:$0xff]
        %v1235 = vld [vmem:[%s2 + $0x228] sm:$0xff]
        %v1236 = vld [vmem:[%s2 + $0x230] sm:$0xff]
        %v1237 = vld [vmem:[%s2 + $0x238] sm:$0xff]
        %v1238 = vld [vmem:[%s2 + $0x240] sm:$0xff]
        %v1239 = vld [vmem:[%s2 + $0x248] sm:$0xff]
        %v1240 = vld [vmem:[%s2 + $0x250] sm:$0xff]
        %v1241 = vld [vmem:[%s2 + $0x258] sm:$0xff]
        %v1242 = vld [vmem:[%s2 + $0x260] sm:$0xff]
        %v1243 = vld [vmem:[%s2 + $0x268] sm:$0xff]
        %v1244 = vld [vmem:[%s2 + $0x270] sm:$0xff]
        %v1245 = vld [vmem:[%s2 + $0x278] sm:$0xff]
        %v1246 = vld [vmem:[%s2 + $0x280] sm:$0xff]
        %v1247 = vld [vmem:[%s2 + $0x288] sm:$0xff]
        %v1248 = vld [vmem:[%s2 + $0x290] sm:$0xff]
        %v1249 = vld [vmem:[%s2 + $0x298] sm:$0xff]
        %v1250 = vld [vmem:[%s2 + $0x2a0] sm:$0xff]
        %v1251 = vld [vmem:[%s2 + $0x2a8] sm:$0xff]
        %v1252 = vld [vmem:[%s2 + $0x2b0] sm:$0xff]
        %v1253 = vld [vmem:[%s2 + $0x2b8] sm:$0xff]
        %v1254 = vld [vmem:[%s2 + $0x2c0] sm:$0xff]
        %v1255 = vld [vmem:[%s2 + $0x2c8] sm:$0xff]
        %v1256 = vld [vmem:[%s2 + $0x2d0] sm:$0xff]
        %v1257 = vld [vmem:[%s2 + $0x2d8] sm:$0xff]
        %v1258 = vld [vmem:[%s2 + $0x2e0] sm:$0xff]
        %v1259 = vld [vmem:[%s2 + $0x2e8] sm:$0xff]
        %v1260 = vld [vmem:[%s2 + $0x2f0] sm:$0xff]
        %v1261 = vld [vmem:[%s2 + $0x2f8] sm:$0xff]
        %v1262 = vld [vmem:[%s2 + $0x300] sm:$0xff]
        %v1263 = vld [vmem:[%s2 + $0x308] sm:$0xff]
        %v1264 = vld [vmem:[%s2 + $0x310] sm:$0xff]
        %v1265 = vld [vmem:[%s2 + $0x318] sm:$0xff]
        %v1266 = vld [vmem:[%s2 + $0x320] sm:$0xff]
        %v1267 = vld [vmem:[%s2 + $0x328] sm:$0xff]
        %v1268 = vld [vmem:[%s2 + $0x330] sm:$0xff]
        %v1269 = vld [vmem:[%s2 + $0x338] sm:$0xff]
        %v1270 = vld [vmem:[%s2 + $0x340] sm:$0xff]
        %v1271 = vld [vmem:[%s2 + $0x348] sm:$0xff]
        %v1272 = vld [vmem:[%s2 + $0x350] sm:$0xff]
        %v1273 = vld [vmem:[%s2 + $0x358] sm:$0xff]
        %v1274 = vld [vmem:[%s2 + $0x360] sm:$0xff]
        %v1275 = vld [vmem:[%s2 + $0x368] sm:$0xff]
        %v1276 = vld [vmem:[%s2 + $0x370] sm:$0xff]
        %v1277 = vld [vmem:[%s2 + $0x378] sm:$0xff]
        %v1278 = vld [vmem:[%s2 + $0x380] sm:$0xff]
        %v1279 = vld [vmem:[%s2 + $0x388] sm:$0xff]
        %v1280 = vld [vmem:[%s2 + $0x390] sm:$0xff]
        %v1281 = vld [vmem:[%s2 + $0x398] sm:$0xff]
        %v1282 = vld [vmem:[%s2 + $0x3a0] sm:$0xff]
        %v1283 = vld [vmem:[%s2 + $0x3a8] sm:$0xff]
        %v1284 = vld [vmem:[%s2 + $0x3b0] sm:$0xff]
        %v1285 = vld [vmem:[%s2 + $0x3b8] sm:$0xff]
        %v1286 = vld [vmem:[%s2 + $0x3c0] sm:$0xff]
        %v1287 = vld [vmem:[%s2 + $0x3c8] sm:$0xff]
        %v1288 = vld [vmem:[%s2 + $0x3d0] sm:$0xff]
        %v1289 = vld [vmem:[%s2 + $0x3d8] sm:$0xff]
        %v1290 = vld [vmem:[%s2 + $0x3e0] sm:$0xff]
        %v1291 = vld [vmem:[%s2 + $0x3e8] sm:$0xff]
        %v1292 = vld [vmem:[%s2 + $0x3f0] sm:$0xff]
        %v1293 = vld [vmem:[%s2 + $0x3f8] sm:$0xff]
        %v1294 = vld [vmem:[%s2 + $0x400] sm:$0xff]
        %v1295 = vld [vmem:[%s2 + $0x408] sm:$0xff]
        %v1296 = vld [vmem:[%s2 + $0x410] sm:$0xff]
        %v1297 = vld [vmem:[%s2 + $0x418] sm:$0xff]
        %v1298 = vld [vmem:[%s2 + $0x420] sm:$0xff]
        %v1299 = vld [vmem:[%s2 + $0x428] sm:$0xff]
        %v1300 = vld [vmem:[%s2 + $0x430] sm:$0xff]
        %v1301 = vld [vmem:[%s2 + $0x438] sm:$0xff]
        %v1302 = vld [vmem:[%s2 + $0x440] sm:$0xff]
        %v1303 = vld [vmem:[%s2 + $0x448] sm:$0xff]
        %v1304 = vld [vmem:[%s2 + $0x450] sm:$0xff]
        %v1305 = vld [vmem:[%s2 + $0x458] sm:$0xff]
        %v1306 = vld [vmem:[%s2 + $0x460] sm:$0xff]
        %v1307 = vld [vmem:[%s2 + $0x468] sm:$0xff]
        %v1308 = vld [vmem:[%s2 + $0x470] sm:$0xff]
        %v1309 = vld [vmem:[%s2 + $0x478] sm:$0xff]
        %v1310 = vld [vmem:[%s2 + $0x480] sm:$0xff]
        %v1311 = vld [vmem:[%s2 + $0x488] sm:$0xff]
        %v1312 = vld [vmem:[%s2 + $0x490] sm:$0xff]
        %v1313 = vld [vmem:[%s2 + $0x498] sm:$0xff]
        %v1314 = vld [vmem:[%s2 + $0x4a0] sm:$0xff]
        %v1315 = vld [vmem:[%s2 + $0x4a8] sm:$0xff]
        %v1316 = vld [vmem:[%s2 + $0x4b0] sm:$0xff]
        %v1317 = vld [vmem:[%s2 + $0x4b8] sm:$0xff]
        %v1318 = vld [vmem:[%s2 + $0x4c0] sm:$0xff]
        %v1319 = vld [vmem:[%s2 + $0x4c8] sm:$0xff]
        %v1320 = vld [vmem:[%s2 + $0x4d0] sm:$0xff]
        %v1321 = vld [vmem:[%s2 + $0x4d8] sm:$0xff]
        %v1322 = vld [vmem:[%s2 + $0x4e0] sm:$0xff]
        %v1323 = vld [vmem:[%s2 + $0x4e8] sm:$0xff]
        %v1324 = vld [vmem:[%s2 + $0x4f0] sm:$0xff]
        %v1325 = vld [vmem:[%s2 + $0x4f8] sm:$0xff]
        %v1326 = vld [vmem:[%s2 + $0x500] sm:$0xff]
        %v1327 = vld [vmem:[%s2 + $0x508] sm:$0xff]
        %v1328 = vld [vmem:[%s2 + $0x510] sm:$0xff]
        %v1329 = vld [vmem:[%s2 + $0x518] sm:$0xff]
        %v1330 = vld [vmem:[%s2 + $0x520] sm:$0xff]
        %v1331 = vld [vmem:[%s2 + $0x528] sm:$0xff]
        %v1332 = vld [vmem:[%s2 + $0x530] sm:$0xff]
        %v1333 = vld [vmem:[%s2 + $0x538] sm:$0xff]
        %v1334 = vld [vmem:[%s2 + $0x540] sm:$0xff]
        %v1335 = vld [vmem:[%s2 + $0x548] sm:$0xff]
        %v1336 = vld [vmem:[%s2 + $0x550] sm:$0xff]
        %v1337 = vld [vmem:[%s2 + $0x558] sm:$0xff]
        %v1338 = vld [vmem:[%s2 + $0x560] sm:$0xff]
        %v1339 = vld [vmem:[%s2 + $0x568] sm:$0xff]
        %v1340 = vld [vmem:[%s2 + $0x570] sm:$0xff]
        %v1341 = vld [vmem:[%s2 + $0x578] sm:$0xff]
        %v1342 = vld [vmem:[%s2 + $0x580] sm:$0xff]
        %v1343 = vld [vmem:[%s2 + $0x588] sm:$0xff]
        %v1344 = vld [vmem:[%s2 + $0x590] sm:$0xff]
        %v1345 = vld [vmem:[%s2 + $0x598] sm:$0xff]
        %v1346 = vld [vmem:[%s2 + $0x5a0] sm:$0xff]
        %v1347 = vld [vmem:[%s2 + $0x5a8] sm:$0xff]
        %v1348 = vld [vmem:[%s2 + $0x5b0] sm:$0xff]
        %v1349 = vld [vmem:[%s2 + $0x5b8] sm:$0xff]
        %v1350 = vld [vmem:[%s2 + $0x5c0] sm:$0xff]
        %v1351 = vld [vmem:[%s2 + $0x5c8] sm:$0xff]
        %v1352 = vld [vmem:[%s2 + $0x5d0] sm:$0xff]
        %v1353 = vld [vmem:[%s2 + $0x5d8] sm:$0xff]
        %v1354 = vld [vmem:[%s2 + $0x5e0] sm:$0xff]
        %v1355 = vld [vmem:[%s2 + $0x5e8] sm:$0xff]
        %v1356 = vld [vmem:[%s2 + $0x5f0] sm:$0xff]
        %v1357 = vld [vmem:[%s2 + $0x5f8] sm:$0xff]
        %v1358 = vld [vmem:[%s2 + $0x600] sm:$0xff]
        %v1359 = vld [vmem:[%s2 + $0x608] sm:$0xff]
        %v1360 = vld [vmem:[%s2 + $0x610] sm:$0xff]
        %v1361 = vld [vmem:[%s2 + $0x618] sm:$0xff]
        %v1362 = vld [vmem:[%s2 + $0x620] sm:$0xff]
        %v1363 = vld [vmem:[%s2 + $0x628] sm:$0xff]
        %v1364 = vld [vmem:[%s2 + $0x630] sm:$0xff]
        %v1365 = vld [vmem:[%s2 + $0x638] sm:$0xff]
        %v1366 = vld [vmem:[%s2 + $0x640] sm:$0xff]
        %v1367 = vld [vmem:[%s2 + $0x648] sm:$0xff]
        %v1368 = vld [vmem:[%s2 + $0x650] sm:$0xff]
        %v1369 = vld [vmem:[%s2 + $0x658] sm:$0xff]
        %v1370 = vld [vmem:[%s2 + $0x660] sm:$0xff]
        %v1371 = vld [vmem:[%s2 + $0x668] sm:$0xff]
        %v1372 = vld [vmem:[%s2 + $0x670] sm:$0xff]
        %v1373 = vld [vmem:[%s2 + $0x678] sm:$0xff]
        %v1374 = vld [vmem:[%s2 + $0x680] sm:$0xff]
        %v1375 = vld [vmem:[%s2 + $0x688] sm:$0xff]
        %v1376 = vld [vmem:[%s2 + $0x690] sm:$0xff]
        %v1377 = vld [vmem:[%s2 + $0x698] sm:$0xff]
        %v1378 = vld [vmem:[%s2 + $0x6a0] sm:$0xff]
        %v1379 = vld [vmem:[%s2 + $0x6a8] sm:$0xff]
        %v1380 = vld [vmem:[%s2 + $0x6b0] sm:$0xff]
        %v1381 = vld [vmem:[%s2 + $0x6b8] sm:$0xff]
        %v1382 = vld [vmem:[%s2 + $0x6c0] sm:$0xff]
        %v1383 = vld [vmem:[%s2 + $0x6c8] sm:$0xff]
        %v1384 = vld [vmem:[%s2 + $0x6d0] sm:$0xff]
        %v1385 = vld [vmem:[%s2 + $0x6d8] sm:$0xff]
        %v1386 = vld [vmem:[%s2 + $0x6e0] sm:$0xff]
        %v1387 = vld [vmem:[%s2 + $0x6e8] sm:$0xff]
        %v1388 = vld [vmem:[%s2 + $0x6f0] sm:$0xff]
        %v1389 = vld [vmem:[%s2 + $0x6f8] sm:$0xff]
        %v1390 = vld [vmem:[%s2 + $0x700] sm:$0xff]
        %v1391 = vld [vmem:[%s2 + $0x708] sm:$0xff]
        %v1392 = vld [vmem:[%s2 + $0x710] sm:$0xff]
        %v1393 = vld [vmem:[%s2 + $0x718] sm:$0xff]
        %v1394 = vld [vmem:[%s2 + $0x720] sm:$0xff]
        %v1395 = vld [vmem:[%s2 + $0x728] sm:$0xff]
        %v1396 = vld [vmem:[%s2 + $0x730] sm:$0xff]
        %v1397 = vld [vmem:[%s2 + $0x738] sm:$0xff]
        %v1398 = vld [vmem:[%s2 + $0x740] sm:$0xff]
        %v1399 = vld [vmem:[%s2 + $0x748] sm:$0xff]
        %v1400 = vld [vmem:[%s2 + $0x750] sm:$0xff]
        %v1401 = vld [vmem:[%s2 + $0x758] sm:$0xff]
        %v1402 = vld [vmem:[%s2 + $0x760] sm:$0xff]
        %v1403 = vld [vmem:[%s2 + $0x768] sm:$0xff]
        %v1404 = vld [vmem:[%s2 + $0x770] sm:$0xff]
        %v1405 = vld [vmem:[%s2 + $0x778] sm:$0xff]
        %v1406 = vld [vmem:[%s2 + $0x780] sm:$0xff]
        %v1407 = vld [vmem:[%s2 + $0x788] sm:$0xff]
        %v1408 = vld [vmem:[%s2 + $0x790] sm:$0xff]
        %v1409 = vld [vmem:[%s2 + $0x798] sm:$0xff]
        %v1410 = vld [vmem:[%s2 + $0x7a0] sm:$0xff]
        %v1411 = vld [vmem:[%s2 + $0x7a8] sm:$0xff]
        %v1412 = vld [vmem:[%s2 + $0x7b0] sm:$0xff]
        %v1413 = vld [vmem:[%s2 + $0x7b8] sm:$0xff]
        %v1414 = vld [vmem:[%s2 + $0x7c0] sm:$0xff]
        %v1415 = vld [vmem:[%s2 + $0x7c8] sm:$0xff]
        %v1416 = vld [vmem:[%s2 + $0x7d0] sm:$0xff]
        %v1417 = vld [vmem:[%s2 + $0x7d8] sm:$0xff]
        %v1418 = vld [vmem:[%s2 + $0x7e0] sm:$0xff]
        %v1419 = vld [vmem:[%s2 + $0x7e8] sm:$0xff]
        %v1420 = vld [vmem:[%s2 + $0x7f0] sm:$0xff]
        %v1421 = vld [vmem:[%s2 + $0x7f8] sm:$0xff]
        %1422 = vmatprep.subr.mxu0 %v1167
        %1423 = vmatpush1.msra.mxu0 %v1166
        %1424 = vmatprep.subr.mxu0 %v1171
        %1425 = vmatpush1.msra.mxu0 %v1170
        %1426 = vmatprep.subr.mxu0 %v1175
        %1427 = vmatpush1.msra.mxu0 %v1174
        %1428 = vmatprep.subr.mxu0 %v1179
        %1429 = vmatpush1.msra.mxu0 %v1178
        %1430 = vmatprep.subr.mxu0 %v1183
        %1431 = vmatpush1.msra.mxu0 %v1182
        %1432 = vmatprep.subr.mxu0 %v1187
        %1433 = vmatpush1.msra.mxu0 %v1186
        %1434 = vmatprep.subr.mxu0 %v1191
        %1435 = vmatpush1.msra.mxu0 %v1190
        %1436 = vmatprep.subr.mxu0 %v1195
        %1437 = vmatpush1.msra.mxu0 %v1194
        %1438 = vmatprep.subr.mxu0 %v1199
        %1439 = vmatpush1.msra.mxu0 %v1198
        %1440 = vmatprep.subr.mxu0 %v1203
        %1441 = vmatpush1.msra.mxu0 %v1202
        %1442 = vmatprep.subr.mxu0 %v1207
        %1443 = vmatpush1.msra.mxu0 %v1206
        %1444 = vmatprep.subr.mxu0 %v1211
        %1445 = vmatpush1.msra.mxu0 %v1210
        %1446 = vmatprep.subr.mxu0 %v1215
        %1447 = vmatpush1.msra.mxu0 %v1214
        %1448 = vmatprep.subr.mxu0 %v1219
        %1449 = vmatpush1.msra.mxu0 %v1218
        %1450 = vmatprep.subr.mxu0 %v1223
        %1451 = vmatpush1.msra.mxu0 %v1222
        %1452 = vmatprep.subr.mxu0 %v1227
        %1453 = vmatpush1.msra.mxu0 %v1226
        %1454 = vmatprep.subr.mxu0 %v1231
        %1455 = vmatpush1.msra.mxu0 %v1230
        %1456 = vmatprep.subr.mxu0 %v1235
        %1457 = vmatpush1.msra.mxu0 %v1234
        %1458 = vmatprep.subr.mxu0 %v1239
        %1459 = vmatpush1.msra.mxu0 %v1238
        %1460 = vmatprep.subr.mxu0 %v1243
        %1461 = vmatpush1.msra.mxu0 %v1242
        %1462 = vmatprep.subr.mxu0 %v1247
        %1463 = vmatpush1.msra.mxu0 %v1246
        %1464 = vmatprep.subr.mxu0 %v1251
        %1465 = vmatpush1.msra.mxu0 %v1250
        %1466 = vmatprep.subr.mxu0 %v1255
        %1467 = vmatpush1.msra.mxu0 %v1254
        %1468 = vmatprep.subr.mxu0 %v1259
        %1469 = vmatpush1.msra.mxu0 %v1258
        %1470 = vmatprep.subr.mxu0 %v1263
        %1471 = vmatpush1.msra.mxu0 %v1262
        %1472 = vmatprep.subr.mxu0 %v1267
        %1473 = vmatpush1.msra.mxu0 %v1266
        %1474 = vmatprep.subr.mxu0 %v1271
        %1475 = vmatpush1.msra.mxu0 %v1270
        %1476 = vmatprep.subr.mxu0 %v1275
        %1477 = vmatpush1.msra.mxu0 %v1274
        %1478 = vmatprep.subr.mxu0 %v1279
        %1479 = vmatpush1.msra.mxu0 %v1278
        %1480 = vmatprep.subr.mxu0 %v1283
        %1481 = vmatpush1.msra.mxu0 %v1282
        %1482 = vmatprep.subr.mxu0 %v1287
        %1483 = vmatpush1.msra.mxu0 %v1286
        %1484 = vmatprep.subr.mxu0 %v1291
        %1485 = vmatpush1.msra.mxu0 %v1290
        %1486 = vmatprep.mubr.f32.mxu0 %v752
        %1487 = vmatmul.mubr.f32.gmra.mrb[0].mxu0 %v750
        %v1488 = vpop.f32.mrb[0].mxu0
        %v1489 = vadd.f32 0.0, %v1488
        %v1490 = vpop.f32.mrb[0].mxu0
        %v1491 = vadd.f32 0.0, %v1490
        %1492 = vmatprep.mubr.f32.mxu0 %v758
        %1493 = vmatmul.mubr.f32.gmra.mrb[0].mxu0 %v756
        %v1494 = vpop.f32.mrb[0].mxu0
        %v1495 = vadd.f32 0.0, %v1494
        %v1496 = vpop.f32.mrb[0].mxu0
        %v1497 = vadd.f32 0.0, %v1496
        %1498 = vmatprep.mubr.f32.mxu0 %v764
        %1499 = vmatmul.mubr.f32.gmra.mrb[0].mxu0 %v762
        %v1500 = vpop.f32.mrb[0].mxu0
        %v1501 = vadd.f32 0.0, %v1500
        %v1502 = vpop.f32.mrb[0].mxu0
        %v1503 = vadd.f32 0.0, %v1502
        %1504 = vmatprep.mubr.f32.mxu0 %v770
        %1505 = vmatmul.mubr.f32.gmra.mrb[0].mxu0 %v768
        %v1506 = vpop.f32.mrb[0].mxu0
        %v1507 = vadd.f32 0.0, %v1506
        %v1508 = vpop.f32.mrb[0].mxu0
        %v1509 = vadd.f32 0.0, %v1508
        %1510 = vmatprep.mubr.f32.mxu0 %v776
        %1511 = vmatmul.mubr.f32.gmra.mrb[0].mxu0 %v774
        %v1512 = vpop.f32.mrb[0].mxu0
        %v1513 = vadd.f32 0.0, %v1512
        %v1514 = vpop.f32.mrb[0].mxu0
        %v1515 = vadd.f32 0.0, %v1514
        %1516 = vmatprep.mubr.f32.mxu0 %v782
        %1517 = vmatmul.mubr.f32.gmra.mrb[0].mxu0 %v780
        %v1518 = vpop.f32.mrb[0].mxu0
        %v1519 = vadd.f32 0.0, %v1518
        %v1520 = vpop.f32.mrb[0].mxu0
        %v1521 = vadd.f32 0.0, %v1520
        %1522 = vmatprep.mubr.f32.mxu0 %v788
        %1523 = vmatmul.mubr.f32.gmra.mrb[0].mxu0 %v786
        %v1524 = vpop.f32.mrb[0].mxu0
        %v1525 = vadd.f32 0.0, %v1524
        %v1526 = vpop.f32.mrb[0].mxu0
        %v1527 = vadd.f32 0.0, %v1526
        %1528 = vmatprep.mubr.f32.mxu0 %v794
        %1529 = vmatmul.mubr.f32.gmra.mrb[0].mxu0 %v792
        %v1530 = vpop.f32.mrb[0].mxu0
        %v1531 = vadd.f32 0.0, %v1530
        %v1532 = vpop.f32.mrb[0].mxu0
        %v1533 = vadd.f32 0.0, %v1532
        %1534 = vmatprep.mubr.f32.mxu0 %v800
        %1535 = vmatmul.mubr.f32.gmra.mrb[0].mxu0 %v798
        %v1536 = vpop.f32.mrb[0].mxu0
        %v1537 = vadd.f32 0.0, %v1536
        %v1538 = vpop.f32.mrb[0].mxu0
        %v1539 = vadd.f32 0.0, %v1538
        %1540 = vmatprep.mubr.f32.mxu0 %v806
        %1541 = vmatmul.mubr.f32.gmra.mrb[0].mxu0 %v804
        %v1542 = vpop.f32.mrb[0].mxu0
        %v1543 = vadd.f32 0.0, %v1542
        %v1544 = vpop.f32.mrb[0].mxu0
        %v1545 = vadd.f32 0.0, %v1544
        %1546 = vmatprep.mubr.f32.mxu0 %v812
        %1547 = vmatmul.mubr.f32.gmra.mrb[0].mxu0 %v810
        %v1548 = vpop.f32.mrb[0].mxu0
        %v1549 = vadd.f32 0.0, %v1548
        %v1550 = vpop.f32.mrb[0].mxu0
        %v1551 = vadd.f32 0.0, %v1550
        %1552 = vmatprep.mubr.f32.mxu0 %v818
        %1553 = vmatmul.mubr.f32.gmra.mrb[0].mxu0 %v816
        %v1554 = vpop.f32.mrb[0].mxu0
        %v1555 = vadd.f32 0.0, %v1554
        %v1556 = vpop.f32.mrb[0].mxu0
        %v1557 = vadd.f32 0.0, %v1556
        %1558 = vmatprep.mubr.f32.mxu0 %v824
        %1559 = vmatmul.mubr.f32.gmra.mrb[0].mxu0 %v822
        %v1560 = vpop.f32.mrb[0].mxu0
        %v1561 = vadd.f32 0.0, %v1560
        %v1562 = vpop.f32.mrb[0].mxu0
        %v1563 = vadd.f32 0.0, %v1562
        %1564 = vmatprep.mubr.f32.mxu0 %v830
        %1565 = vmatmul.mubr.f32.gmra.mrb[0].mxu0 %v828
        %v1566 = vpop.f32.mrb[0].mxu0
        %v1567 = vadd.f32 0.0, %v1566
        %v1568 = vpop.f32.mrb[0].mxu0
        %v1569 = vadd.f32 0.0, %v1568
        %1570 = vmatprep.mubr.f32.mxu0 %v836
        %1571 = vmatmul.mubr.f32.gmra.mrb[0].mxu0 %v834
        %v1572 = vpop.f32.mrb[0].mxu0
        %v1573 = vadd.f32 0.0, %v1572
        %v1574 = vpop.f32.mrb[0].mxu0
        %v1575 = vadd.f32 0.0, %v1574
        %1576 = vmatprep.mubr.f32.mxu0 %v842
        %1577 = vmatmul.mubr.f32.gmra.mrb[0].mxu0 %v840
        %v1578 = vpop.f32.mrb[0].mxu0
        %v1579 = vadd.f32 0.0, %v1578
        %v1580 = vpop.f32.mrb[0].mxu0
        %v1581 = vadd.f32 0.0, %v1580
        %1582 = vdwg.mxu0
        %1583 = vmatprep.subr.mxu0 %v1295
        %1584 = vmatpush1.msra.mxu0 %v1294
        %1585 = vmatprep.subr.mxu0 %v1299
        %1586 = vmatpush1.msra.mxu0 %v1298
        %1587 = vmatprep.subr.mxu0 %v1303
        %1588 = vmatpush1.msra.mxu0 %v1302
        %1589 = vmatprep.subr.mxu0 %v1307
        %1590 = vmatpush1.msra.mxu0 %v1306
        %1591 = vmatprep.subr.mxu0 %v1311
        %1592 = vmatpush1.msra.mxu0 %v1310
        %1593 = vmatprep.subr.mxu0 %v1315
        %1594 = vmatpush1.msra.mxu0 %v1314
        %1595 = vmatprep.subr.mxu0 %v1319
        %1596 = vmatpush1.msra.mxu0 %v1318
        %1597 = vmatprep.subr.mxu0 %v1323
        %1598 = vmatpush1.msra.mxu0 %v1322
        %1599 = vmatprep.subr.mxu0 %v1327
        %1600 = vmatpush1.msra.mxu0 %v1326
        %1601 = vmatprep.subr.mxu0 %v1331
        %1602 = vmatpush1.msra.mxu0 %v1330
        %1603 = vmatprep.subr.mxu0 %v1335
        %1604 = vmatpush1.msra.mxu0 %v1334
        %1605 = vmatprep.subr.mxu0 %v1339
        %1606 = vmatpush1.msra.mxu0 %v1338
        %1607 = vmatprep.subr.mxu0 %v1343
        %1608 = vmatpush1.msra.mxu0 %v1342
        %1609 = vmatprep.subr.mxu0 %v1347
        %1610 = vmatpush1.msra.mxu0 %v1346
        %1611 = vmatprep.subr.mxu0 %v1351
        %1612 = vmatpush1.msra.mxu0 %v1350
        %1613 = vmatprep.subr.mxu0 %v1355
        %1614 = vmatpush1.msra.mxu0 %v1354
        %1615 = vmatprep.subr.mxu0 %v1359
        %1616 = vmatpush1.msra.mxu0 %v1358
        %1617 = vmatprep.subr.mxu0 %v1363
        %1618 = vmatpush1.msra.mxu0 %v1362
        %1619 = vmatprep.subr.mxu0 %v1367
        %1620 = vmatpush1.msra.mxu0 %v1366
        %1621 = vmatprep.subr.mxu0 %v1371
        %1622 = vmatpush1.msra.mxu0 %v1370
        %1623 = vmatprep.subr.mxu0 %v1375
        %1624 = vmatpush1.msra.mxu0 %v1374
        %1625 = vmatprep.subr.mxu0 %v1379
        %1626 = vmatpush1.msra.mxu0 %v1378
        %1627 = vmatprep.subr.mxu0 %v1383
        %1628 = vmatpush1.msra.mxu0 %v1382
        %1629 = vmatprep.subr.mxu0 %v1387
        %1630 = vmatpush1.msra.mxu0 %v1386
        %1631 = vmatprep.subr.mxu0 %v1391
        %1632 = vmatpush1.msra.mxu0 %v1390
        %1633 = vmatprep.subr.mxu0 %v1395
        %1634 = vmatpush1.msra.mxu0 %v1394
        %1635 = vmatprep.subr.mxu0 %v1399
        %1636 = vmatpush1.msra.mxu0 %v1398
        %1637 = vmatprep.subr.mxu0 %v1403
        %1638 = vmatpush1.msra.mxu0 %v1402
        %1639 = vmatprep.subr.mxu0 %v1407
        %1640 = vmatpush1.msra.mxu0 %v1406
        %1641 = vmatprep.subr.mxu0 %v1411
        %1642 = vmatpush1.msra.mxu0 %v1410
        %1643 = vmatprep.subr.mxu0 %v1415
        %1644 = vmatpush1.msra.mxu0 %v1414
        %1645 = vmatprep.subr.mxu0 %v1419
        %1646 = vmatpush1.msra.mxu0 %v1418
        %1647 = vmatprep.mubr.f32.mxu0 %v1074
        %1648 = vmatmul.mubr.f32.gmra.mrb[0].mxu0 %v1072
        %v1649 = vpop.f32.mrb[0].mxu0
        %v1650 = vadd.f32 %v1489, %v1649
        %v1651 = vpop.f32.mrb[0].mxu0
        %v1652 = vadd.f32 %v1491, %v1651
        %1653 = vmatprep.mubr.f32.mxu0 %v1080
        %1654 = vmatmul.mubr.f32.gmra.mrb[0].mxu0 %v1078
        %v1655 = vpop.f32.mrb[0].mxu0
        %v1656 = vadd.f32 %v1495, %v1655
        %v1657 = vpop.f32.mrb[0].mxu0
        %v1658 = vadd.f32 %v1497, %v1657
        %1659 = vmatprep.mubr.f32.mxu0 %v1086
        %1660 = vmatmul.mubr.f32.gmra.mrb[0].mxu0 %v1084
        %v1661 = vpop.f32.mrb[0].mxu0
        %v1662 = vadd.f32 %v1501, %v1661
        %v1663 = vpop.f32.mrb[0].mxu0
        %v1664 = vadd.f32 %v1503, %v1663
        %1665 = vmatprep.mubr.f32.mxu0 %v1092
        %1666 = vmatmul.mubr.f32.gmra.mrb[0].mxu0 %v1090
        %v1667 = vpop.f32.mrb[0].mxu0
        %v1668 = vadd.f32 %v1507, %v1667
        %v1669 = vpop.f32.mrb[0].mxu0
        %v1670 = vadd.f32 %v1509, %v1669
        %1671 = vmatprep.mubr.f32.mxu0 %v1098
        %1672 = vmatmul.mubr.f32.gmra.mrb[0].mxu0 %v1096
        %v1673 = vpop.f32.mrb[0].mxu0
        %v1674 = vadd.f32 %v1513, %v1673
        %v1675 = vpop.f32.mrb[0].mxu0
        %v1676 = vadd.f32 %v1515, %v1675
        %1677 = vmatprep.mubr.f32.mxu0 %v1104
        %1678 = vmatmul.mubr.f32.gmra.mrb[0].mxu0 %v1102
        %v1679 = vpop.f32.mrb[0].mxu0
        %v1680 = vadd.f32 %v1519, %v1679
        %v1681 = vpop.f32.mrb[0].mxu0
        %v1682 = vadd.f32 %v1521, %v1681
        %1683 = vmatprep.mubr.f32.mxu0 %v1110
        %1684 = vmatmul.mubr.f32.gmra.mrb[0].mxu0 %v1108
        %v1685 = vpop.f32.mrb[0].mxu0
        %v1686 = vadd.f32 %v1525, %v1685
        %v1687 = vpop.f32.mrb[0].mxu0
        %v1688 = vadd.f32 %v1527, %v1687
        %1689 = vmatprep.mubr.f32.mxu0 %v1116
        %1690 = vmatmul.mubr.f32.gmra.mrb[0].mxu0 %v1114
        %v1691 = vpop.f32.mrb[0].mxu0
        %v1692 = vadd.f32 %v1531, %v1691
        %v1693 = vpop.f32.mrb[0].mxu0
        %v1694 = vadd.f32 %v1533, %v1693
        %1695 = vmatprep.mubr.f32.mxu0 %v1122
        %1696 = vmatmul.mubr.f32.gmra.mrb[0].mxu0 %v1120
        %v1697 = vpop.f32.mrb[0].mxu0
        %v1698 = vadd.f32 %v1537, %v1697
        %v1699 = vpop.f32.mrb[0].mxu0
        %v1700 = vadd.f32 %v1539, %v1699
        %1701 = vmatprep.mubr.f32.mxu0 %v1128
        %1702 = vmatmul.mubr.f32.gmra.mrb[0].mxu0 %v1126
        %v1703 = vpop.f32.mrb[0].mxu0
        %v1704 = vadd.f32 %v1543, %v1703
        %v1705 = vpop.f32.mrb[0].mxu0
        %v1706 = vadd.f32 %v1545, %v1705
        %1707 = vmatprep.mubr.f32.mxu0 %v1134
        %1708 = vmatmul.mubr.f32.gmra.mrb[0].mxu0 %v1132
        %v1709 = vpop.f32.mrb[0].mxu0
        %v1710 = vadd.f32 %v1549, %v1709
        %v1711 = vpop.f32.mrb[0].mxu0
        %v1712 = vadd.f32 %v1551, %v1711
        %1713 = vmatprep.mubr.f32.mxu0 %v1140
        %1714 = vmatmul.mubr.f32.gmra.mrb[0].mxu0 %v1138
        %v1715 = vpop.f32.mrb[0].mxu0
        %v1716 = vadd.f32 %v1555, %v1715
        %v1717 = vpop.f32.mrb[0].mxu0
        %v1718 = vadd.f32 %v1557, %v1717
        %1719 = vmatprep.mubr.f32.mxu0 %v1146
        %1720 = vmatmul.mubr.f32.gmra.mrb[0].mxu0 %v1144
        %v1721 = vpop.f32.mrb[0].mxu0
        %v1722 = vadd.f32 %v1561, %v1721
        %v1723 = vpop.f32.mrb[0].mxu0
        %v1724 = vadd.f32 %v1563, %v1723
        %1725 = vmatprep.mubr.f32.mxu0 %v1152
        %1726 = vmatmul.mubr.f32.gmra.mrb[0].mxu0 %v1150
        %v1727 = vpop.f32.mrb[0].mxu0
        %v1728 = vadd.f32 %v1567, %v1727
        %v1729 = vpop.f32.mrb[0].mxu0
        %v1730 = vadd.f32 %v1569, %v1729
        %1731 = vmatprep.mubr.f32.mxu0 %v1158
        %1732 = vmatmul.mubr.f32.gmra.mrb[0].mxu0 %v1156
        %v1733 = vpop.f32.mrb[0].mxu0
        %v1734 = vadd.f32 %v1573, %v1733
        %v1735 = vpop.f32.mrb[0].mxu0
        %v1736 = vadd.f32 %v1575, %v1735
        %1737 = vmatprep.mubr.f32.mxu0 %v1164
        %1738 = vmatmul.mubr.f32.gmra.mrb[0].mxu0 %v1162
        %v1739 = vpop.f32.mrb[0].mxu0
        %v1740 = vadd.f32 %v1579, %v1739
        %v1741 = vpop.f32.mrb[0].mxu0
        %v1742 = vadd.f32 %v1581, %v1741
        %1743 = vdwg.mxu0
        %1744 = vmatprep.subr.mxu0 %v1169
        %1745 = vmatpush1.msra.mxu0 %v1168
        %1746 = vmatprep.subr.mxu0 %v1173
        %1747 = vmatpush1.msra.mxu0 %v1172
        %1748 = vmatprep.subr.mxu0 %v1177
        %1749 = vmatpush1.msra.mxu0 %v1176
        %1750 = vmatprep.subr.mxu0 %v1181
        %1751 = vmatpush1.msra.mxu0 %v1180
        %1752 = vmatprep.subr.mxu0 %v1185
        %1753 = vmatpush1.msra.mxu0 %v1184
        %1754 = vmatprep.subr.mxu0 %v1189
        %1755 = vmatpush1.msra.mxu0 %v1188
        %1756 = vmatprep.subr.mxu0 %v1193
        %1757 = vmatpush1.msra.mxu0 %v1192
        %1758 = vmatprep.subr.mxu0 %v1197
        %1759 = vmatpush1.msra.mxu0 %v1196
        %1760 = vmatprep.subr.mxu0 %v1201
        %1761 = vmatpush1.msra.mxu0 %v1200
        %1762 = vmatprep.subr.mxu0 %v1205
        %1763 = vmatpush1.msra.mxu0 %v1204
        %1764 = vmatprep.subr.mxu0 %v1209
        %1765 = vmatpush1.msra.mxu0 %v1208
        %1766 = vmatprep.subr.mxu0 %v1213
        %1767 = vmatpush1.msra.mxu0 %v1212
        %1768 = vmatprep.subr.mxu0 %v1217
        %1769 = vmatpush1.msra.mxu0 %v1216
        %1770 = vmatprep.subr.mxu0 %v1221
        %1771 = vmatpush1.msra.mxu0 %v1220
        %1772 = vmatprep.subr.mxu0 %v1225
        %1773 = vmatpush1.msra.mxu0 %v1224
        %1774 = vmatprep.subr.mxu0 %v1229
        %1775 = vmatpush1.msra.mxu0 %v1228
        %1776 = vmatprep.subr.mxu0 %v1233
        %1777 = vmatpush1.msra.mxu0 %v1232
        %1778 = vmatprep.subr.mxu0 %v1237
        %1779 = vmatpush1.msra.mxu0 %v1236
        %1780 = vmatprep.subr.mxu0 %v1241
        %1781 = vmatpush1.msra.mxu0 %v1240
        %1782 = vmatprep.subr.mxu0 %v1245
        %1783 = vmatpush1.msra.mxu0 %v1244
        %1784 = vmatprep.subr.mxu0 %v1249
        %1785 = vmatpush1.msra.mxu0 %v1248
        %1786 = vmatprep.subr.mxu0 %v1253
        %1787 = vmatpush1.msra.mxu0 %v1252
        %1788 = vmatprep.subr.mxu0 %v1257
        %1789 = vmatpush1.msra.mxu0 %v1256
        %1790 = vmatprep.subr.mxu0 %v1261
        %1791 = vmatpush1.msra.mxu0 %v1260
        %1792 = vmatprep.subr.mxu0 %v1265
        %1793 = vmatpush1.msra.mxu0 %v1264
        %1794 = vmatprep.subr.mxu0 %v1269
        %1795 = vmatpush1.msra.mxu0 %v1268
        %1796 = vmatprep.subr.mxu0 %v1273
        %1797 = vmatpush1.msra.mxu0 %v1272
        %1798 = vmatprep.subr.mxu0 %v1277
        %1799 = vmatpush1.msra.mxu0 %v1276
        %1800 = vmatprep.subr.mxu0 %v1281
        %1801 = vmatpush1.msra.mxu0 %v1280
        %1802 = vmatprep.subr.mxu0 %v1285
        %1803 = vmatpush1.msra.mxu0 %v1284
        %1804 = vmatprep.subr.mxu0 %v1289
        %1805 = vmatpush1.msra.mxu0 %v1288
        %1806 = vmatprep.subr.mxu0 %v1293
        %1807 = vmatpush1.msra.mxu0 %v1292
        %1808 = vmatprep.mubr.f32.mxu0 %v752
        %1809 = vmatmul.mubr.f32.gmra.mrb[0].mxu0 %v750
        %v1810 = vpop.f32.mrb[0].mxu0
        %v1811 = vadd.f32 0.0, %v1810
        %v1812 = vpop.f32.mrb[0].mxu0
        %v1813 = vadd.f32 0.0, %v1812
        %1814 = vmatprep.mubr.f32.mxu0 %v758
        %1815 = vmatmul.mubr.f32.gmra.mrb[0].mxu0 %v756
        %v1816 = vpop.f32.mrb[0].mxu0
        %v1817 = vadd.f32 0.0, %v1816
        %v1818 = vpop.f32.mrb[0].mxu0
        %v1819 = vadd.f32 0.0, %v1818
        %1820 = vmatprep.mubr.f32.mxu0 %v764
        %1821 = vmatmul.mubr.f32.gmra.mrb[0].mxu0 %v762
        %v1822 = vpop.f32.mrb[0].mxu0
        %v1823 = vadd.f32 0.0, %v1822
        %v1824 = vpop.f32.mrb[0].mxu0
        %v1825 = vadd.f32 0.0, %v1824
        %1826 = vmatprep.mubr.f32.mxu0 %v770
        %1827 = vmatmul.mubr.f32.gmra.mrb[0].mxu0 %v768
        %v1828 = vpop.f32.mrb[0].mxu0
        %v1829 = vadd.f32 0.0, %v1828
        %v1830 = vpop.f32.mrb[0].mxu0
        %v1831 = vadd.f32 0.0, %v1830
        %1832 = vmatprep.mubr.f32.mxu0 %v776
        %1833 = vmatmul.mubr.f32.gmra.mrb[0].mxu0 %v774
        %v1834 = vpop.f32.mrb[0].mxu0
        %v1835 = vadd.f32 0.0, %v1834
        %v1836 = vpop.f32.mrb[0].mxu0
        %v1837 = vadd.f32 0.0, %v1836
        %1838 = vmatprep.mubr.f32.mxu0 %v782
        %1839 = vmatmul.mubr.f32.gmra.mrb[0].mxu0 %v780
        %v1840 = vpop.f32.mrb[0].mxu0
        %v1841 = vadd.f32 0.0, %v1840
        %v1842 = vpop.f32.mrb[0].mxu0
        %v1843 = vadd.f32 0.0, %v1842
        %1844 = vmatprep.mubr.f32.mxu0 %v788
        %1845 = vmatmul.mubr.f32.gmra.mrb[0].mxu0 %v786
        %v1846 = vpop.f32.mrb[0].mxu0
        %v1847 = vadd.f32 0.0, %v1846
        %v1848 = vpop.f32.mrb[0].mxu0
        %v1849 = vadd.f32 0.0, %v1848
        %1850 = vmatprep.mubr.f32.mxu0 %v794
        %1851 = vmatmul.mubr.f32.gmra.mrb[0].mxu0 %v792
        %v1852 = vpop.f32.mrb[0].mxu0
        %v1853 = vadd.f32 0.0, %v1852
        %v1854 = vpop.f32.mrb[0].mxu0
        %v1855 = vadd.f32 0.0, %v1854
        %1856 = vmatprep.mubr.f32.mxu0 %v800
        %1857 = vmatmul.mubr.f32.gmra.mrb[0].mxu0 %v798
        %v1858 = vpop.f32.mrb[0].mxu0
        %v1859 = vadd.f32 0.0, %v1858
        %v1860 = vpop.f32.mrb[0].mxu0
        %v1861 = vadd.f32 0.0, %v1860
        %1862 = vmatprep.mubr.f32.mxu0 %v806
        %1863 = vmatmul.mubr.f32.gmra.mrb[0].mxu0 %v804
        %v1864 = vpop.f32.mrb[0].mxu0
        %v1865 = vadd.f32 0.0, %v1864
        %v1866 = vpop.f32.mrb[0].mxu0
        %v1867 = vadd.f32 0.0, %v1866
        %1868 = vmatprep.mubr.f32.mxu0 %v812
        %1869 = vmatmul.mubr.f32.gmra.mrb[0].mxu0 %v810
        %v1870 = vpop.f32.mrb[0].mxu0
        %v1871 = vadd.f32 0.0, %v1870
        %v1872 = vpop.f32.mrb[0].mxu0
        %v1873 = vadd.f32 0.0, %v1872
        %1874 = vmatprep.mubr.f32.mxu0 %v818
        %1875 = vmatmul.mubr.f32.gmra.mrb[0].mxu0 %v816
        %v1876 = vpop.f32.mrb[0].mxu0
        %v1877 = vadd.f32 0.0, %v1876
        %v1878 = vpop.f32.mrb[0].mxu0
        %v1879 = vadd.f32 0.0, %v1878
        %1880 = vmatprep.mubr.f32.mxu0 %v824
        %1881 = vmatmul.mubr.f32.gmra.mrb[0].mxu0 %v822
        %v1882 = vpop.f32.mrb[0].mxu0
        %v1883 = vadd.f32 0.0, %v1882
        %v1884 = vpop.f32.mrb[0].mxu0
        %v1885 = vadd.f32 0.0, %v1884
        %1886 = vmatprep.mubr.f32.mxu0 %v830
        %1887 = vmatmul.mubr.f32.gmra.mrb[0].mxu0 %v828
        %v1888 = vpop.f32.mrb[0].mxu0
        %v1889 = vadd.f32 0.0, %v1888
        %v1890 = vpop.f32.mrb[0].mxu0
        %v1891 = vadd.f32 0.0, %v1890
        %1892 = vmatprep.mubr.f32.mxu0 %v836
        %1893 = vmatmul.mubr.f32.gmra.mrb[0].mxu0 %v834
        %v1894 = vpop.f32.mrb[0].mxu0
        %v1895 = vadd.f32 0.0, %v1894
        %v1896 = vpop.f32.mrb[0].mxu0
        %v1897 = vadd.f32 0.0, %v1896
        %1898 = vmatprep.mubr.f32.mxu0 %v842
        %1899 = vmatmul.mubr.f32.gmra.mrb[0].mxu0 %v840
        %v1900 = vpop.f32.mrb[0].mxu0
        %v1901 = vadd.f32 0.0, %v1900
        %v1902 = vpop.f32.mrb[0].mxu0
        %v1903 = vadd.f32 0.0, %v1902
        %1904 = vdwg.mxu0
        %1905 = vmatprep.subr.mxu0 %v1297
        %1906 = vmatpush1.msra.mxu0 %v1296
        %1907 = vmatprep.subr.mxu0 %v1301
        %1908 = vmatpush1.msra.mxu0 %v1300
        %1909 = vmatprep.subr.mxu0 %v1305
        %1910 = vmatpush1.msra.mxu0 %v1304
        %1911 = vmatprep.subr.mxu0 %v1309
        %1912 = vmatpush1.msra.mxu0 %v1308
        %1913 = vmatprep.subr.mxu0 %v1313
        %1914 = vmatpush1.msra.mxu0 %v1312
        %1915 = vmatprep.subr.mxu0 %v1317
        %1916 = vmatpush1.msra.mxu0 %v1316
        %1917 = vmatprep.subr.mxu0 %v1321
        %1918 = vmatpush1.msra.mxu0 %v1320
        %1919 = vmatprep.subr.mxu0 %v1325
        %1920 = vmatpush1.msra.mxu0 %v1324
        %1921 = vmatprep.subr.mxu0 %v1329
        %1922 = vmatpush1.msra.mxu0 %v1328
        %1923 = vmatprep.subr.mxu0 %v1333
        %1924 = vmatpush1.msra.mxu0 %v1332
        %1925 = vmatprep.subr.mxu0 %v1337
        %1926 = vmatpush1.msra.mxu0 %v1336
        %1927 = vmatprep.subr.mxu0 %v1341
        %1928 = vmatpush1.msra.mxu0 %v1340
        %1929 = vmatprep.subr.mxu0 %v1345
        %1930 = vmatpush1.msra.mxu0 %v1344
        %1931 = vmatprep.subr.mxu0 %v1349
        %1932 = vmatpush1.msra.mxu0 %v1348
        %1933 = vmatprep.subr.mxu0 %v1353
        %1934 = vmatpush1.msra.mxu0 %v1352
        %1935 = vmatprep.subr.mxu0 %v1357
        %1936 = vmatpush1.msra.mxu0 %v1356
        %1937 = vmatprep.subr.mxu0 %v1361
        %1938 = vmatpush1.msra.mxu0 %v1360
        %1939 = vmatprep.subr.mxu0 %v1365
        %1940 = vmatpush1.msra.mxu0 %v1364
        %1941 = vmatprep.subr.mxu0 %v1369
        %1942 = vmatpush1.msra.mxu0 %v1368
        %1943 = vmatprep.subr.mxu0 %v1373
        %1944 = vmatpush1.msra.mxu0 %v1372
        %1945 = vmatprep.subr.mxu0 %v1377
        %1946 = vmatpush1.msra.mxu0 %v1376
        %1947 = vmatprep.subr.mxu0 %v1381
        %1948 = vmatpush1.msra.mxu0 %v1380
        %1949 = vmatprep.subr.mxu0 %v1385
        %1950 = vmatpush1.msra.mxu0 %v1384
        %1951 = vmatprep.subr.mxu0 %v1389
        %1952 = vmatpush1.msra.mxu0 %v1388
        %1953 = vmatprep.subr.mxu0 %v1393
        %1954 = vmatpush1.msra.mxu0 %v1392
        %1955 = vmatprep.subr.mxu0 %v1397
        %1956 = vmatpush1.msra.mxu0 %v1396
        %1957 = vmatprep.subr.mxu0 %v1401
        %1958 = vmatpush1.msra.mxu0 %v1400
        %1959 = vmatprep.subr.mxu0 %v1405
        %1960 = vmatpush1.msra.mxu0 %v1404
        %1961 = vmatprep.subr.mxu0 %v1409
        %1962 = vmatpush1.msra.mxu0 %v1408
        %1963 = vmatprep.subr.mxu0 %v1413
        %1964 = vmatpush1.msra.mxu0 %v1412
        %1965 = vmatprep.subr.mxu0 %v1417
        %1966 = vmatpush1.msra.mxu0 %v1416
        %1967 = vmatprep.subr.mxu0 %v1421
        %1968 = vmatpush1.msra.mxu0 %v1420
        %1969 = vmatprep.mubr.f32.mxu0 %v1074
        %1970 = vmatmul.mubr.f32.gmra.mrb[0].mxu0 %v1072
        %v1971 = vpop.f32.mrb[0].mxu0
        %v1972 = vadd.f32 %v1811, %v1971
        %v1973 = vpop.f32.mrb[0].mxu0
        %v1974 = vadd.f32 %v1813, %v1973
        %1975 = vmatprep.mubr.f32.mxu0 %v1080
        %1976 = vmatmul.mubr.f32.gmra.mrb[0].mxu0 %v1078
        %v1977 = vpop.f32.mrb[0].mxu0
        %v1978 = vadd.f32 %v1817, %v1977
        %v1979 = vpop.f32.mrb[0].mxu0
        %v1980 = vadd.f32 %v1819, %v1979
        %1981 = vmatprep.mubr.f32.mxu0 %v1086
        %1982 = vmatmul.mubr.f32.gmra.mrb[0].mxu0 %v1084
        %v1983 = vpop.f32.mrb[0].mxu0
        %v1984 = vadd.f32 %v1823, %v1983
        %v1985 = vpop.f32.mrb[0].mxu0
        %v1986 = vadd.f32 %v1825, %v1985
        %1987 = vmatprep.mubr.f32.mxu0 %v1092
        %1988 = vmatmul.mubr.f32.gmra.mrb[0].mxu0 %v1090
        %v1989 = vpop.f32.mrb[0].mxu0
        %v1990 = vadd.f32 %v1829, %v1989
        %v1991 = vpop.f32.mrb[0].mxu0
        %v1992 = vadd.f32 %v1831, %v1991
        %1993 = vmatprep.mubr.f32.mxu0 %v1098
        %1994 = vmatmul.mubr.f32.gmra.mrb[0].mxu0 %v1096
        %v1995 = vpop.f32.mrb[0].mxu0
        %v1996 = vadd.f32 %v1835, %v1995
        %v1997 = vpop.f32.mrb[0].mxu0
        %v1998 = vadd.f32 %v1837, %v1997
        %1999 = vmatprep.mubr.f32.mxu0 %v1104
        %2000 = vmatmul.mubr.f32.gmra.mrb[0].mxu0 %v1102
        %v2001 = vpop.f32.mrb[0].mxu0
        %v2002 = vadd.f32 %v1841, %v2001
        %v2003 = vpop.f32.mrb[0].mxu0
        %v2004 = vadd.f32 %v1843, %v2003
        %2005 = vmatprep.mubr.f32.mxu0 %v1110
        %2006 = vmatmul.mubr.f32.gmra.mrb[0].mxu0 %v1108
        %v2007 = vpop.f32.mrb[0].mxu0
        %v2008 = vadd.f32 %v1847, %v2007
        %v2009 = vpop.f32.mrb[0].mxu0
        %v2010 = vadd.f32 %v1849, %v2009
        %2011 = vmatprep.mubr.f32.mxu0 %v1116
        %2012 = vmatmul.mubr.f32.gmra.mrb[0].mxu0 %v1114
        %v2013 = vpop.f32.mrb[0].mxu0
        %v2014 = vadd.f32 %v1853, %v2013
        %v2015 = vpop.f32.mrb[0].mxu0
        %v2016 = vadd.f32 %v1855, %v2015
        %2017 = vmatprep.mubr.f32.mxu0 %v1122
        %2018 = vmatmul.mubr.f32.gmra.mrb[0].mxu0 %v1120
        %v2019 = vpop.f32.mrb[0].mxu0
        %v2020 = vadd.f32 %v1859, %v2019
        %v2021 = vpop.f32.mrb[0].mxu0
        %v2022 = vadd.f32 %v1861, %v2021
        %2023 = vmatprep.mubr.f32.mxu0 %v1128
        %2024 = vmatmul.mubr.f32.gmra.mrb[0].mxu0 %v1126
        %v2025 = vpop.f32.mrb[0].mxu0
        %v2026 = vadd.f32 %v1865, %v2025
        %v2027 = vpop.f32.mrb[0].mxu0
        %v2028 = vadd.f32 %v1867, %v2027
        %2029 = vmatprep.mubr.f32.mxu0 %v1134
        %2030 = vmatmul.mubr.f32.gmra.mrb[0].mxu0 %v1132
        %v2031 = vpop.f32.mrb[0].mxu0
        %v2032 = vadd.f32 %v1871, %v2031
        %v2033 = vpop.f32.mrb[0].mxu0
        %v2034 = vadd.f32 %v1873, %v2033
        %2035 = vmatprep.mubr.f32.mxu0 %v1140
        %2036 = vmatmul.mubr.f32.gmra.mrb[0].mxu0 %v1138
        %v2037 = vpop.f32.mrb[0].mxu0
        %v2038 = vadd.f32 %v1877, %v2037
        %v2039 = vpop.f32.mrb[0].mxu0
        %v2040 = vadd.f32 %v1879, %v2039
        %2041 = vmatprep.mubr.f32.mxu0 %v1146
        %2042 = vmatmul.mubr.f32.gmra.mrb[0].mxu0 %v1144
        %v2043 = vpop.f32.mrb[0].mxu0
        %v2044 = vadd.f32 %v1883, %v2043
        %v2045 = vpop.f32.mrb[0].mxu0
        %v2046 = vadd.f32 %v1885, %v2045
        %2047 = vmatprep.mubr.f32.mxu0 %v1152
        %2048 = vmatmul.mubr.f32.gmra.mrb[0].mxu0 %v1150
        %v2049 = vpop.f32.mrb[0].mxu0
        %v2050 = vadd.f32 %v1889, %v2049
        %v2051 = vpop.f32.mrb[0].mxu0
        %v2052 = vadd.f32 %v1891, %v2051
        %2053 = vmatprep.mubr.f32.mxu0 %v1158
        %2054 = vmatmul.mubr.f32.gmra.mrb[0].mxu0 %v1156
        %v2055 = vpop.f32.mrb[0].mxu0
        %v2056 = vadd.f32 %v1895, %v2055
        %v2057 = vpop.f32.mrb[0].mxu0
        %v2058 = vadd.f32 %v1897, %v2057
        %2059 = vmatprep.mubr.f32.mxu0 %v1164
        %2060 = vmatmul.mubr.f32.gmra.mrb[0].mxu0 %v1162
        %v2061 = vpop.f32.mrb[0].mxu0
        %v2062 = vadd.f32 %v1901, %v2061
        %v2063 = vpop.f32.mrb[0].mxu0
        %v2064 = vadd.f32 %v1903, %v2063
        %2065 = vdwg.mxu0
        %v2066 = vld [vmem:[%s3] sm:$0xff]
        %v2067 = vld [vmem:[%s3 + $0x8] sm:$0xff]
        %v2068 = vld [vmem:[%s3 + $0x10] sm:$0xff]
        %v2069 = vld [vmem:[%s3 + $0x18] sm:$0xff]
        %v2070 = vld [vmem:[%s3 + $0x20] sm:$0xff]
        %v2071 = vld [vmem:[%s3 + $0x28] sm:$0xff]
        %v2072 = vld [vmem:[%s3 + $0x30] sm:$0xff]
        %v2073 = vld [vmem:[%s3 + $0x38] sm:$0xff]
        %v2074 = vld [vmem:[%s3 + $0x40] sm:$0xff]
        %v2075 = vld [vmem:[%s3 + $0x48] sm:$0xff]
        %v2076 = vld [vmem:[%s3 + $0x50] sm:$0xff]
        %v2077 = vld [vmem:[%s3 + $0x58] sm:$0xff]
        %v2078 = vld [vmem:[%s3 + $0x60] sm:$0xff]
        %v2079 = vld [vmem:[%s3 + $0x68] sm:$0xff]
        %v2080 = vld [vmem:[%s3 + $0x70] sm:$0xff]
        %v2081 = vld [vmem:[%s3 + $0x78] sm:$0xff]
        %v2082 = vld [vmem:[%s3 + $0x80] sm:$0xff]
        %v2083 = vld [vmem:[%s3 + $0x88] sm:$0xff]
        %v2084 = vld [vmem:[%s3 + $0x90] sm:$0xff]
        %v2085 = vld [vmem:[%s3 + $0x98] sm:$0xff]
        %v2086 = vld [vmem:[%s3 + $0xa0] sm:$0xff]
        %v2087 = vld [vmem:[%s3 + $0xa8] sm:$0xff]
        %v2088 = vld [vmem:[%s3 + $0xb0] sm:$0xff]
        %v2089 = vld [vmem:[%s3 + $0xb8] sm:$0xff]
        %v2090 = vld [vmem:[%s3 + $0xc0] sm:$0xff]
        %v2091 = vld [vmem:[%s3 + $0xc8] sm:$0xff]
        %v2092 = vld [vmem:[%s3 + $0xd0] sm:$0xff]
        %v2093 = vld [vmem:[%s3 + $0xd8] sm:$0xff]
        %v2094 = vld [vmem:[%s3 + $0xe0] sm:$0xff]
        %v2095 = vld [vmem:[%s3 + $0xe8] sm:$0xff]
        %v2096 = vld [vmem:[%s3 + $0xf0] sm:$0xff]
        %v2097 = vld [vmem:[%s3 + $0xf8] sm:$0xff]
        %v2098 = vld [vmem:[%s3 + $0x100] sm:$0xff]
        %v2099 = vld [vmem:[%s3 + $0x108] sm:$0xff]
        %v2100 = vld [vmem:[%s3 + $0x110] sm:$0xff]
        %v2101 = vld [vmem:[%s3 + $0x118] sm:$0xff]
        %v2102 = vld [vmem:[%s3 + $0x120] sm:$0xff]
        %v2103 = vld [vmem:[%s3 + $0x128] sm:$0xff]
        %v2104 = vld [vmem:[%s3 + $0x130] sm:$0xff]
        %v2105 = vld [vmem:[%s3 + $0x138] sm:$0xff]
        %v2106 = vld [vmem:[%s3 + $0x140] sm:$0xff]
        %v2107 = vld [vmem:[%s3 + $0x148] sm:$0xff]
        %v2108 = vld [vmem:[%s3 + $0x150] sm:$0xff]
        %v2109 = vld [vmem:[%s3 + $0x158] sm:$0xff]
        %v2110 = vld [vmem:[%s3 + $0x160] sm:$0xff]
        %v2111 = vld [vmem:[%s3 + $0x168] sm:$0xff]
        %v2112 = vld [vmem:[%s3 + $0x170] sm:$0xff]
        %v2113 = vld [vmem:[%s3 + $0x178] sm:$0xff]
        %v2114 = vld [vmem:[%s3 + $0x180] sm:$0xff]
        %v2115 = vld [vmem:[%s3 + $0x188] sm:$0xff]
        %v2116 = vld [vmem:[%s3 + $0x190] sm:$0xff]
        %v2117 = vld [vmem:[%s3 + $0x198] sm:$0xff]
        %v2118 = vld [vmem:[%s3 + $0x1a0] sm:$0xff]
        %v2119 = vld [vmem:[%s3 + $0x1a8] sm:$0xff]
        %v2120 = vld [vmem:[%s3 + $0x1b0] sm:$0xff]
        %v2121 = vld [vmem:[%s3 + $0x1b8] sm:$0xff]
        %v2122 = vld [vmem:[%s3 + $0x1c0] sm:$0xff]
        %v2123 = vld [vmem:[%s3 + $0x1c8] sm:$0xff]
        %v2124 = vld [vmem:[%s3 + $0x1d0] sm:$0xff]
        %v2125 = vld [vmem:[%s3 + $0x1d8] sm:$0xff]
        %v2126 = vld [vmem:[%s3 + $0x1e0] sm:$0xff]
        %v2127 = vld [vmem:[%s3 + $0x1e8] sm:$0xff]
        %v2128 = vld [vmem:[%s3 + $0x1f0] sm:$0xff]
        %v2129 = vld [vmem:[%s3 + $0x1f8] sm:$0xff]
        %v2130 = vld [vmem:[%s3 + $0x200] sm:$0xff]
        %v2131 = vld [vmem:[%s3 + $0x208] sm:$0xff]
        %v2132 = vld [vmem:[%s3 + $0x210] sm:$0xff]
        %v2133 = vld [vmem:[%s3 + $0x218] sm:$0xff]
        %v2134 = vld [vmem:[%s3 + $0x220] sm:$0xff]
        %v2135 = vld [vmem:[%s3 + $0x228] sm:$0xff]
        %v2136 = vld [vmem:[%s3 + $0x230] sm:$0xff]
        %v2137 = vld [vmem:[%s3 + $0x238] sm:$0xff]
        %v2138 = vld [vmem:[%s3 + $0x240] sm:$0xff]
        %v2139 = vld [vmem:[%s3 + $0x248] sm:$0xff]
        %v2140 = vld [vmem:[%s3 + $0x250] sm:$0xff]
        %v2141 = vld [vmem:[%s3 + $0x258] sm:$0xff]
        %v2142 = vld [vmem:[%s3 + $0x260] sm:$0xff]
        %v2143 = vld [vmem:[%s3 + $0x268] sm:$0xff]
        %v2144 = vld [vmem:[%s3 + $0x270] sm:$0xff]
        %v2145 = vld [vmem:[%s3 + $0x278] sm:$0xff]
        %v2146 = vld [vmem:[%s3 + $0x280] sm:$0xff]
        %v2147 = vld [vmem:[%s3 + $0x288] sm:$0xff]
        %v2148 = vld [vmem:[%s3 + $0x290] sm:$0xff]
        %v2149 = vld [vmem:[%s3 + $0x298] sm:$0xff]
        %v2150 = vld [vmem:[%s3 + $0x2a0] sm:$0xff]
        %v2151 = vld [vmem:[%s3 + $0x2a8] sm:$0xff]
        %v2152 = vld [vmem:[%s3 + $0x2b0] sm:$0xff]
        %v2153 = vld [vmem:[%s3 + $0x2b8] sm:$0xff]
        %v2154 = vld [vmem:[%s3 + $0x2c0] sm:$0xff]
        %v2155 = vld [vmem:[%s3 + $0x2c8] sm:$0xff]
        %v2156 = vld [vmem:[%s3 + $0x2d0] sm:$0xff]
        %v2157 = vld [vmem:[%s3 + $0x2d8] sm:$0xff]
        %v2158 = vld [vmem:[%s3 + $0x2e0] sm:$0xff]
        %v2159 = vld [vmem:[%s3 + $0x2e8] sm:$0xff]
        %v2160 = vld [vmem:[%s3 + $0x2f0] sm:$0xff]
        %v2161 = vld [vmem:[%s3 + $0x2f8] sm:$0xff]
        %v2162 = vld [vmem:[%s3 + $0x300] sm:$0xff]
        %v2163 = vld [vmem:[%s3 + $0x308] sm:$0xff]
        %v2164 = vld [vmem:[%s3 + $0x310] sm:$0xff]
        %v2165 = vld [vmem:[%s3 + $0x318] sm:$0xff]
        %v2166 = vld [vmem:[%s3 + $0x320] sm:$0xff]
        %v2167 = vld [vmem:[%s3 + $0x328] sm:$0xff]
        %v2168 = vld [vmem:[%s3 + $0x330] sm:$0xff]
        %v2169 = vld [vmem:[%s3 + $0x338] sm:$0xff]
        %v2170 = vld [vmem:[%s3 + $0x340] sm:$0xff]
        %v2171 = vld [vmem:[%s3 + $0x348] sm:$0xff]
        %v2172 = vld [vmem:[%s3 + $0x350] sm:$0xff]
        %v2173 = vld [vmem:[%s3 + $0x358] sm:$0xff]
        %v2174 = vld [vmem:[%s3 + $0x360] sm:$0xff]
        %v2175 = vld [vmem:[%s3 + $0x368] sm:$0xff]
        %v2176 = vld [vmem:[%s3 + $0x370] sm:$0xff]
        %v2177 = vld [vmem:[%s3 + $0x378] sm:$0xff]
        %v2178 = vld [vmem:[%s3 + $0x380] sm:$0xff]
        %v2179 = vld [vmem:[%s3 + $0x388] sm:$0xff]
        %v2180 = vld [vmem:[%s3 + $0x390] sm:$0xff]
        %v2181 = vld [vmem:[%s3 + $0x398] sm:$0xff]
        %v2182 = vld [vmem:[%s3 + $0x3a0] sm:$0xff]
        %v2183 = vld [vmem:[%s3 + $0x3a8] sm:$0xff]
        %v2184 = vld [vmem:[%s3 + $0x3b0] sm:$0xff]
        %v2185 = vld [vmem:[%s3 + $0x3b8] sm:$0xff]
        %v2186 = vld [vmem:[%s3 + $0x3c0] sm:$0xff]
        %v2187 = vld [vmem:[%s3 + $0x3c8] sm:$0xff]
        %v2188 = vld [vmem:[%s3 + $0x3d0] sm:$0xff]
        %v2189 = vld [vmem:[%s3 + $0x3d8] sm:$0xff]
        %v2190 = vld [vmem:[%s3 + $0x3e0] sm:$0xff]
        %v2191 = vld [vmem:[%s3 + $0x3e8] sm:$0xff]
        %v2192 = vld [vmem:[%s3 + $0x3f0] sm:$0xff]
        %v2193 = vld [vmem:[%s3 + $0x3f8] sm:$0xff]
        %v2194 = vld [vmem:[%s3 + $0x400] sm:$0xff]
        %v2195 = vld [vmem:[%s3 + $0x408] sm:$0xff]
        %v2196 = vld [vmem:[%s3 + $0x410] sm:$0xff]
        %v2197 = vld [vmem:[%s3 + $0x418] sm:$0xff]
        %v2198 = vld [vmem:[%s3 + $0x420] sm:$0xff]
        %v2199 = vld [vmem:[%s3 + $0x428] sm:$0xff]
        %v2200 = vld [vmem:[%s3 + $0x430] sm:$0xff]
        %v2201 = vld [vmem:[%s3 + $0x438] sm:$0xff]
        %v2202 = vld [vmem:[%s3 + $0x440] sm:$0xff]
        %v2203 = vld [vmem:[%s3 + $0x448] sm:$0xff]
        %v2204 = vld [vmem:[%s3 + $0x450] sm:$0xff]
        %v2205 = vld [vmem:[%s3 + $0x458] sm:$0xff]
        %v2206 = vld [vmem:[%s3 + $0x460] sm:$0xff]
        %v2207 = vld [vmem:[%s3 + $0x468] sm:$0xff]
        %v2208 = vld [vmem:[%s3 + $0x470] sm:$0xff]
        %v2209 = vld [vmem:[%s3 + $0x478] sm:$0xff]
        %v2210 = vld [vmem:[%s3 + $0x480] sm:$0xff]
        %v2211 = vld [vmem:[%s3 + $0x488] sm:$0xff]
        %v2212 = vld [vmem:[%s3 + $0x490] sm:$0xff]
        %v2213 = vld [vmem:[%s3 + $0x498] sm:$0xff]
        %v2214 = vld [vmem:[%s3 + $0x4a0] sm:$0xff]
        %v2215 = vld [vmem:[%s3 + $0x4a8] sm:$0xff]
        %v2216 = vld [vmem:[%s3 + $0x4b0] sm:$0xff]
        %v2217 = vld [vmem:[%s3 + $0x4b8] sm:$0xff]
        %v2218 = vld [vmem:[%s3 + $0x4c0] sm:$0xff]
        %v2219 = vld [vmem:[%s3 + $0x4c8] sm:$0xff]
        %v2220 = vld [vmem:[%s3 + $0x4d0] sm:$0xff]
        %v2221 = vld [vmem:[%s3 + $0x4d8] sm:$0xff]
        %v2222 = vld [vmem:[%s3 + $0x4e0] sm:$0xff]
        %v2223 = vld [vmem:[%s3 + $0x4e8] sm:$0xff]
        %v2224 = vld [vmem:[%s3 + $0x4f0] sm:$0xff]
        %v2225 = vld [vmem:[%s3 + $0x4f8] sm:$0xff]
        %v2226 = vld [vmem:[%s3 + $0x500] sm:$0xff]
        %v2227 = vld [vmem:[%s3 + $0x508] sm:$0xff]
        %v2228 = vld [vmem:[%s3 + $0x510] sm:$0xff]
        %v2229 = vld [vmem:[%s3 + $0x518] sm:$0xff]
        %v2230 = vld [vmem:[%s3 + $0x520] sm:$0xff]
        %v2231 = vld [vmem:[%s3 + $0x528] sm:$0xff]
        %v2232 = vld [vmem:[%s3 + $0x530] sm:$0xff]
        %v2233 = vld [vmem:[%s3 + $0x538] sm:$0xff]
        %v2234 = vld [vmem:[%s3 + $0x540] sm:$0xff]
        %v2235 = vld [vmem:[%s3 + $0x548] sm:$0xff]
        %v2236 = vld [vmem:[%s3 + $0x550] sm:$0xff]
        %v2237 = vld [vmem:[%s3 + $0x558] sm:$0xff]
        %v2238 = vld [vmem:[%s3 + $0x560] sm:$0xff]
        %v2239 = vld [vmem:[%s3 + $0x568] sm:$0xff]
        %v2240 = vld [vmem:[%s3 + $0x570] sm:$0xff]
        %v2241 = vld [vmem:[%s3 + $0x578] sm:$0xff]
        %v2242 = vld [vmem:[%s3 + $0x580] sm:$0xff]
        %v2243 = vld [vmem:[%s3 + $0x588] sm:$0xff]
        %v2244 = vld [vmem:[%s3 + $0x590] sm:$0xff]
        %v2245 = vld [vmem:[%s3 + $0x598] sm:$0xff]
        %v2246 = vld [vmem:[%s3 + $0x5a0] sm:$0xff]
        %v2247 = vld [vmem:[%s3 + $0x5a8] sm:$0xff]
        %v2248 = vld [vmem:[%s3 + $0x5b0] sm:$0xff]
        %v2249 = vld [vmem:[%s3 + $0x5b8] sm:$0xff]
        %v2250 = vld [vmem:[%s3 + $0x5c0] sm:$0xff]
        %v2251 = vld [vmem:[%s3 + $0x5c8] sm:$0xff]
        %v2252 = vld [vmem:[%s3 + $0x5d0] sm:$0xff]
        %v2253 = vld [vmem:[%s3 + $0x5d8] sm:$0xff]
        %v2254 = vld [vmem:[%s3 + $0x5e0] sm:$0xff]
        %v2255 = vld [vmem:[%s3 + $0x5e8] sm:$0xff]
        %v2256 = vld [vmem:[%s3 + $0x5f0] sm:$0xff]
        %v2257 = vld [vmem:[%s3 + $0x5f8] sm:$0xff]
        %v2258 = vld [vmem:[%s3 + $0x600] sm:$0xff]
        %v2259 = vld [vmem:[%s3 + $0x608] sm:$0xff]
        %v2260 = vld [vmem:[%s3 + $0x610] sm:$0xff]
        %v2261 = vld [vmem:[%s3 + $0x618] sm:$0xff]
        %v2262 = vld [vmem:[%s3 + $0x620] sm:$0xff]
        %v2263 = vld [vmem:[%s3 + $0x628] sm:$0xff]
        %v2264 = vld [vmem:[%s3 + $0x630] sm:$0xff]
        %v2265 = vld [vmem:[%s3 + $0x638] sm:$0xff]
        %v2266 = vld [vmem:[%s3 + $0x640] sm:$0xff]
        %v2267 = vld [vmem:[%s3 + $0x648] sm:$0xff]
        %v2268 = vld [vmem:[%s3 + $0x650] sm:$0xff]
        %v2269 = vld [vmem:[%s3 + $0x658] sm:$0xff]
        %v2270 = vld [vmem:[%s3 + $0x660] sm:$0xff]
        %v2271 = vld [vmem:[%s3 + $0x668] sm:$0xff]
        %v2272 = vld [vmem:[%s3 + $0x670] sm:$0xff]
        %v2273 = vld [vmem:[%s3 + $0x678] sm:$0xff]
        %v2274 = vld [vmem:[%s3 + $0x680] sm:$0xff]
        %v2275 = vld [vmem:[%s3 + $0x688] sm:$0xff]
        %v2276 = vld [vmem:[%s3 + $0x690] sm:$0xff]
        %v2277 = vld [vmem:[%s3 + $0x698] sm:$0xff]
        %v2278 = vld [vmem:[%s3 + $0x6a0] sm:$0xff]
        %v2279 = vld [vmem:[%s3 + $0x6a8] sm:$0xff]
        %v2280 = vld [vmem:[%s3 + $0x6b0] sm:$0xff]
        %v2281 = vld [vmem:[%s3 + $0x6b8] sm:$0xff]
        %v2282 = vld [vmem:[%s3 + $0x6c0] sm:$0xff]
        %v2283 = vld [vmem:[%s3 + $0x6c8] sm:$0xff]
        %v2284 = vld [vmem:[%s3 + $0x6d0] sm:$0xff]
        %v2285 = vld [vmem:[%s3 + $0x6d8] sm:$0xff]
        %v2286 = vld [vmem:[%s3 + $0x6e0] sm:$0xff]
        %v2287 = vld [vmem:[%s3 + $0x6e8] sm:$0xff]
        %v2288 = vld [vmem:[%s3 + $0x6f0] sm:$0xff]
        %v2289 = vld [vmem:[%s3 + $0x6f8] sm:$0xff]
        %v2290 = vld [vmem:[%s3 + $0x700] sm:$0xff]
        %v2291 = vld [vmem:[%s3 + $0x708] sm:$0xff]
        %v2292 = vld [vmem:[%s3 + $0x710] sm:$0xff]
        %v2293 = vld [vmem:[%s3 + $0x718] sm:$0xff]
        %v2294 = vld [vmem:[%s3 + $0x720] sm:$0xff]
        %v2295 = vld [vmem:[%s3 + $0x728] sm:$0xff]
        %v2296 = vld [vmem:[%s3 + $0x730] sm:$0xff]
        %v2297 = vld [vmem:[%s3 + $0x738] sm:$0xff]
        %v2298 = vld [vmem:[%s3 + $0x740] sm:$0xff]
        %v2299 = vld [vmem:[%s3 + $0x748] sm:$0xff]
        %v2300 = vld [vmem:[%s3 + $0x750] sm:$0xff]
        %v2301 = vld [vmem:[%s3 + $0x758] sm:$0xff]
        %v2302 = vld [vmem:[%s3 + $0x760] sm:$0xff]
        %v2303 = vld [vmem:[%s3 + $0x768] sm:$0xff]
        %v2304 = vld [vmem:[%s3 + $0x770] sm:$0xff]
        %v2305 = vld [vmem:[%s3 + $0x778] sm:$0xff]
        %v2306 = vld [vmem:[%s3 + $0x780] sm:$0xff]
        %v2307 = vld [vmem:[%s3 + $0x788] sm:$0xff]
        %v2308 = vld [vmem:[%s3 + $0x790] sm:$0xff]
        %v2309 = vld [vmem:[%s3 + $0x798] sm:$0xff]
        %v2310 = vld [vmem:[%s3 + $0x7a0] sm:$0xff]
        %v2311 = vld [vmem:[%s3 + $0x7a8] sm:$0xff]
        %v2312 = vld [vmem:[%s3 + $0x7b0] sm:$0xff]
        %v2313 = vld [vmem:[%s3 + $0x7b8] sm:$0xff]
        %v2314 = vld [vmem:[%s3 + $0x7c0] sm:$0xff]
        %v2315 = vld [vmem:[%s3 + $0x7c8] sm:$0xff]
        %v2316 = vld [vmem:[%s3 + $0x7d0] sm:$0xff]
        %v2317 = vld [vmem:[%s3 + $0x7d8] sm:$0xff]
        %v2318 = vld [vmem:[%s3 + $0x7e0] sm:$0xff]
        %v2319 = vld [vmem:[%s3 + $0x7e8] sm:$0xff]
        %v2320 = vld [vmem:[%s3 + $0x7f0] sm:$0xff]
        %v2321 = vld [vmem:[%s3 + $0x7f8] sm:$0xff]
        %2322 = vmatprep.subr.mxu0 %v2067
        %2323 = vmatpush1.msra.mxu0 %v2066
        %2324 = vmatprep.subr.mxu0 %v2071
        %2325 = vmatpush1.msra.mxu0 %v2070
        %2326 = vmatprep.subr.mxu0 %v2075
        %2327 = vmatpush1.msra.mxu0 %v2074
        %2328 = vmatprep.subr.mxu0 %v2079
        %2329 = vmatpush1.msra.mxu0 %v2078
        %2330 = vmatprep.subr.mxu0 %v2083
        %2331 = vmatpush1.msra.mxu0 %v2082
        %2332 = vmatprep.subr.mxu0 %v2087
        %2333 = vmatpush1.msra.mxu0 %v2086
        %2334 = vmatprep.subr.mxu0 %v2091
        %2335 = vmatpush1.msra.mxu0 %v2090
        %2336 = vmatprep.subr.mxu0 %v2095
        %2337 = vmatpush1.msra.mxu0 %v2094
        %2338 = vmatprep.subr.mxu0 %v2099
        %2339 = vmatpush1.msra.mxu0 %v2098
        %2340 = vmatprep.subr.mxu0 %v2103
        %2341 = vmatpush1.msra.mxu0 %v2102
        %2342 = vmatprep.subr.mxu0 %v2107
        %2343 = vmatpush1.msra.mxu0 %v2106
        %2344 = vmatprep.subr.mxu0 %v2111
        %2345 = vmatpush1.msra.mxu0 %v2110
        %2346 = vmatprep.subr.mxu0 %v2115
        %2347 = vmatpush1.msra.mxu0 %v2114
        %2348 = vmatprep.subr.mxu0 %v2119
        %2349 = vmatpush1.msra.mxu0 %v2118
        %2350 = vmatprep.subr.mxu0 %v2123
        %2351 = vmatpush1.msra.mxu0 %v2122
        %2352 = vmatprep.subr.mxu0 %v2127
        %2353 = vmatpush1.msra.mxu0 %v2126
        %2354 = vmatprep.subr.mxu0 %v2131
        %2355 = vmatpush1.msra.mxu0 %v2130
        %2356 = vmatprep.subr.mxu0 %v2135
        %2357 = vmatpush1.msra.mxu0 %v2134
        %2358 = vmatprep.subr.mxu0 %v2139
        %2359 = vmatpush1.msra.mxu0 %v2138
        %2360 = vmatprep.subr.mxu0 %v2143
        %2361 = vmatpush1.msra.mxu0 %v2142
        %2362 = vmatprep.subr.mxu0 %v2147
        %2363 = vmatpush1.msra.mxu0 %v2146
        %2364 = vmatprep.subr.mxu0 %v2151
        %2365 = vmatpush1.msra.mxu0 %v2150
        %2366 = vmatprep.subr.mxu0 %v2155
        %2367 = vmatpush1.msra.mxu0 %v2154
        %2368 = vmatprep.subr.mxu0 %v2159
        %2369 = vmatpush1.msra.mxu0 %v2158
        %2370 = vmatprep.subr.mxu0 %v2163
        %2371 = vmatpush1.msra.mxu0 %v2162
        %2372 = vmatprep.subr.mxu0 %v2167
        %2373 = vmatpush1.msra.mxu0 %v2166
        %2374 = vmatprep.subr.mxu0 %v2171
        %2375 = vmatpush1.msra.mxu0 %v2170
        %2376 = vmatprep.subr.mxu0 %v2175
        %2377 = vmatpush1.msra.mxu0 %v2174
        %2378 = vmatprep.subr.mxu0 %v2179
        %2379 = vmatpush1.msra.mxu0 %v2178
        %2380 = vmatprep.subr.mxu0 %v2183
        %2381 = vmatpush1.msra.mxu0 %v2182
        %2382 = vmatprep.subr.mxu0 %v2187
        %2383 = vmatpush1.msra.mxu0 %v2186
        %2384 = vmatprep.subr.mxu0 %v2191
        %2385 = vmatpush1.msra.mxu0 %v2190
        %2386 = vmatprep.mubr.f32.mxu0 %v1652
        %2387 = vmatmul.mubr.f32.gmra.mrb[0].mxu0 %v1650
        %v2388 = vpop.f32.mrb[0].mxu0
        %v2389 = vadd.f32 0.0, %v2388
        %v2390 = vpop.f32.mrb[0].mxu0
        %v2391 = vadd.f32 0.0, %v2390
        %2392 = vmatprep.mubr.f32.mxu0 %v1658
        %2393 = vmatmul.mubr.f32.gmra.mrb[0].mxu0 %v1656
        %v2394 = vpop.f32.mrb[0].mxu0
        %v2395 = vadd.f32 0.0, %v2394
        %v2396 = vpop.f32.mrb[0].mxu0
        %v2397 = vadd.f32 0.0, %v2396
        %2398 = vmatprep.mubr.f32.mxu0 %v1664
        %2399 = vmatmul.mubr.f32.gmra.mrb[0].mxu0 %v1662
        %v2400 = vpop.f32.mrb[0].mxu0
        %v2401 = vadd.f32 0.0, %v2400
        %v2402 = vpop.f32.mrb[0].mxu0
        %v2403 = vadd.f32 0.0, %v2402
        %2404 = vmatprep.mubr.f32.mxu0 %v1670
        %2405 = vmatmul.mubr.f32.gmra.mrb[0].mxu0 %v1668
        %v2406 = vpop.f32.mrb[0].mxu0
        %v2407 = vadd.f32 0.0, %v2406
        %v2408 = vpop.f32.mrb[0].mxu0
        %v2409 = vadd.f32 0.0, %v2408
        %2410 = vmatprep.mubr.f32.mxu0 %v1676
        %2411 = vmatmul.mubr.f32.gmra.mrb[0].mxu0 %v1674
        %v2412 = vpop.f32.mrb[0].mxu0
        %v2413 = vadd.f32 0.0, %v2412
        %v2414 = vpop.f32.mrb[0].mxu0
        %v2415 = vadd.f32 0.0, %v2414
        %2416 = vmatprep.mubr.f32.mxu0 %v1682
        %2417 = vmatmul.mubr.f32.gmra.mrb[0].mxu0 %v1680
        %v2418 = vpop.f32.mrb[0].mxu0
        %v2419 = vadd.f32 0.0, %v2418
        %v2420 = vpop.f32.mrb[0].mxu0
        %v2421 = vadd.f32 0.0, %v2420
        %2422 = vmatprep.mubr.f32.mxu0 %v1688
        %2423 = vmatmul.mubr.f32.gmra.mrb[0].mxu0 %v1686
        %v2424 = vpop.f32.mrb[0].mxu0
        %v2425 = vadd.f32 0.0, %v2424
        %v2426 = vpop.f32.mrb[0].mxu0
        %v2427 = vadd.f32 0.0, %v2426
        %2428 = vmatprep.mubr.f32.mxu0 %v1694
        %2429 = vmatmul.mubr.f32.gmra.mrb[0].mxu0 %v1692
        %v2430 = vpop.f32.mrb[0].mxu0
        %v2431 = vadd.f32 0.0, %v2430
        %v2432 = vpop.f32.mrb[0].mxu0
        %v2433 = vadd.f32 0.0, %v2432
        %2434 = vmatprep.mubr.f32.mxu0 %v1700
        %2435 = vmatmul.mubr.f32.gmra.mrb[0].mxu0 %v1698
        %v2436 = vpop.f32.mrb[0].mxu0
        %v2437 = vadd.f32 0.0, %v2436
        %v2438 = vpop.f32.mrb[0].mxu0
        %v2439 = vadd.f32 0.0, %v2438
        %2440 = vmatprep.mubr.f32.mxu0 %v1706
        %2441 = vmatmul.mubr.f32.gmra.mrb[0].mxu0 %v1704
        %v2442 = vpop.f32.mrb[0].mxu0
        %v2443 = vadd.f32 0.0, %v2442
        %v2444 = vpop.f32.mrb[0].mxu0
        %v2445 = vadd.f32 0.0, %v2444
        %2446 = vmatprep.mubr.f32.mxu0 %v1712
        %2447 = vmatmul.mubr.f32.gmra.mrb[0].mxu0 %v1710
        %v2448 = vpop.f32.mrb[0].mxu0
        %v2449 = vadd.f32 0.0, %v2448
        %v2450 = vpop.f32.mrb[0].mxu0
        %v2451 = vadd.f32 0.0, %v2450
        %2452 = vmatprep.mubr.f32.mxu0 %v1718
        %2453 = vmatmul.mubr.f32.gmra.mrb[0].mxu0 %v1716
        %v2454 = vpop.f32.mrb[0].mxu0
        %v2455 = vadd.f32 0.0, %v2454
        %v2456 = vpop.f32.mrb[0].mxu0
        %v2457 = vadd.f32 0.0, %v2456
        %2458 = vmatprep.mubr.f32.mxu0 %v1724
        %2459 = vmatmul.mubr.f32.gmra.mrb[0].mxu0 %v1722
        %v2460 = vpop.f32.mrb[0].mxu0
        %v2461 = vadd.f32 0.0, %v2460
        %v2462 = vpop.f32.mrb[0].mxu0
        %v2463 = vadd.f32 0.0, %v2462
        %2464 = vmatprep.mubr.f32.mxu0 %v1730
        %2465 = vmatmul.mubr.f32.gmra.mrb[0].mxu0 %v1728
        %v2466 = vpop.f32.mrb[0].mxu0
        %v2467 = vadd.f32 0.0, %v2466
        %v2468 = vpop.f32.mrb[0].mxu0
        %v2469 = vadd.f32 0.0, %v2468
        %2470 = vmatprep.mubr.f32.mxu0 %v1736
        %2471 = vmatmul.mubr.f32.gmra.mrb[0].mxu0 %v1734
        %v2472 = vpop.f32.mrb[0].mxu0
        %v2473 = vadd.f32 0.0, %v2472
        %v2474 = vpop.f32.mrb[0].mxu0
        %v2475 = vadd.f32 0.0, %v2474
        %2476 = vmatprep.mubr.f32.mxu0 %v1742
        %2477 = vmatmul.mubr.f32.gmra.mrb[0].mxu0 %v1740
        %v2478 = vpop.f32.mrb[0].mxu0
        %v2479 = vadd.f32 0.0, %v2478
        %v2480 = vpop.f32.mrb[0].mxu0
        %v2481 = vadd.f32 0.0, %v2480
        %2482 = vdwg.mxu0
        %2483 = vmatprep.subr.mxu0 %v2195
        %2484 = vmatpush1.msra.mxu0 %v2194
        %2485 = vmatprep.subr.mxu0 %v2199
        %2486 = vmatpush1.msra.mxu0 %v2198
        %2487 = vmatprep.subr.mxu0 %v2203
        %2488 = vmatpush1.msra.mxu0 %v2202
        %2489 = vmatprep.subr.mxu0 %v2207
        %2490 = vmatpush1.msra.mxu0 %v2206
        %2491 = vmatprep.subr.mxu0 %v2211
        %2492 = vmatpush1.msra.mxu0 %v2210
        %2493 = vmatprep.subr.mxu0 %v2215
        %2494 = vmatpush1.msra.mxu0 %v2214
        %2495 = vmatprep.subr.mxu0 %v2219
        %2496 = vmatpush1.msra.mxu0 %v2218
        %2497 = vmatprep.subr.mxu0 %v2223
        %2498 = vmatpush1.msra.mxu0 %v2222
        %2499 = vmatprep.subr.mxu0 %v2227
        %2500 = vmatpush1.msra.mxu0 %v2226
        %2501 = vmatprep.subr.mxu0 %v2231
        %2502 = vmatpush1.msra.mxu0 %v2230
        %2503 = vmatprep.subr.mxu0 %v2235
        %2504 = vmatpush1.msra.mxu0 %v2234
        %2505 = vmatprep.subr.mxu0 %v2239
        %2506 = vmatpush1.msra.mxu0 %v2238
        %2507 = vmatprep.subr.mxu0 %v2243
        %2508 = vmatpush1.msra.mxu0 %v2242
        %2509 = vmatprep.subr.mxu0 %v2247
        %2510 = vmatpush1.msra.mxu0 %v2246
        %2511 = vmatprep.subr.mxu0 %v2251
        %2512 = vmatpush1.msra.mxu0 %v2250
        %2513 = vmatprep.subr.mxu0 %v2255
        %2514 = vmatpush1.msra.mxu0 %v2254
        %2515 = vmatprep.subr.mxu0 %v2259
        %2516 = vmatpush1.msra.mxu0 %v2258
        %2517 = vmatprep.subr.mxu0 %v2263
        %2518 = vmatpush1.msra.mxu0 %v2262
        %2519 = vmatprep.subr.mxu0 %v2267
        %2520 = vmatpush1.msra.mxu0 %v2266
        %2521 = vmatprep.subr.mxu0 %v2271
        %2522 = vmatpush1.msra.mxu0 %v2270
        %2523 = vmatprep.subr.mxu0 %v2275
        %2524 = vmatpush1.msra.mxu0 %v2274
        %2525 = vmatprep.subr.mxu0 %v2279
        %2526 = vmatpush1.msra.mxu0 %v2278
        %2527 = vmatprep.subr.mxu0 %v2283
        %2528 = vmatpush1.msra.mxu0 %v2282
        %2529 = vmatprep.subr.mxu0 %v2287
        %2530 = vmatpush1.msra.mxu0 %v2286
        %2531 = vmatprep.subr.mxu0 %v2291
        %2532 = vmatpush1.msra.mxu0 %v2290
        %2533 = vmatprep.subr.mxu0 %v2295
        %2534 = vmatpush1.msra.mxu0 %v2294
        %2535 = vmatprep.subr.mxu0 %v2299
        %2536 = vmatpush1.msra.mxu0 %v2298
        %2537 = vmatprep.subr.mxu0 %v2303
        %2538 = vmatpush1.msra.mxu0 %v2302
        %2539 = vmatprep.subr.mxu0 %v2307
        %2540 = vmatpush1.msra.mxu0 %v2306
        %2541 = vmatprep.subr.mxu0 %v2311
        %2542 = vmatpush1.msra.mxu0 %v2310
        %2543 = vmatprep.subr.mxu0 %v2315
        %2544 = vmatpush1.msra.mxu0 %v2314
        %2545 = vmatprep.subr.mxu0 %v2319
        %2546 = vmatpush1.msra.mxu0 %v2318
        %2547 = vmatprep.mubr.f32.mxu0 %v1974
        %2548 = vmatmul.mubr.f32.gmra.mrb[0].mxu0 %v1972
        %v2549 = vpop.f32.mrb[0].mxu0
        %v2550 = vadd.f32 %v2389, %v2549
        %v2551 = vpop.f32.mrb[0].mxu0
        %v2552 = vadd.f32 %v2391, %v2551
        %2553 = vmatprep.mubr.f32.mxu0 %v1980
        %2554 = vmatmul.mubr.f32.gmra.mrb[0].mxu0 %v1978
        %v2555 = vpop.f32.mrb[0].mxu0
        %v2556 = vadd.f32 %v2395, %v2555
        %v2557 = vpop.f32.mrb[0].mxu0
        %v2558 = vadd.f32 %v2397, %v2557
        %2559 = vmatprep.mubr.f32.mxu0 %v1986
        %2560 = vmatmul.mubr.f32.gmra.mrb[0].mxu0 %v1984
        %v2561 = vpop.f32.mrb[0].mxu0
        %v2562 = vadd.f32 %v2401, %v2561
        %v2563 = vpop.f32.mrb[0].mxu0
        %v2564 = vadd.f32 %v2403, %v2563
        %2565 = vmatprep.mubr.f32.mxu0 %v1992
        %2566 = vmatmul.mubr.f32.gmra.mrb[0].mxu0 %v1990
        %v2567 = vpop.f32.mrb[0].mxu0
        %v2568 = vadd.f32 %v2407, %v2567
        %v2569 = vpop.f32.mrb[0].mxu0
        %v2570 = vadd.f32 %v2409, %v2569
        %2571 = vmatprep.mubr.f32.mxu0 %v1998
        %2572 = vmatmul.mubr.f32.gmra.mrb[0].mxu0 %v1996
        %v2573 = vpop.f32.mrb[0].mxu0
        %v2574 = vadd.f32 %v2413, %v2573
        %v2575 = vpop.f32.mrb[0].mxu0
        %v2576 = vadd.f32 %v2415, %v2575
        %2577 = vmatprep.mubr.f32.mxu0 %v2004
        %2578 = vmatmul.mubr.f32.gmra.mrb[0].mxu0 %v2002
        %v2579 = vpop.f32.mrb[0].mxu0
        %v2580 = vadd.f32 %v2419, %v2579
        %v2581 = vpop.f32.mrb[0].mxu0
        %v2582 = vadd.f32 %v2421, %v2581
        %2583 = vmatprep.mubr.f32.mxu0 %v2010
        %2584 = vmatmul.mubr.f32.gmra.mrb[0].mxu0 %v2008
        %v2585 = vpop.f32.mrb[0].mxu0
        %v2586 = vadd.f32 %v2425, %v2585
        %v2587 = vpop.f32.mrb[0].mxu0
        %v2588 = vadd.f32 %v2427, %v2587
        %2589 = vmatprep.mubr.f32.mxu0 %v2016
        %2590 = vmatmul.mubr.f32.gmra.mrb[0].mxu0 %v2014
        %v2591 = vpop.f32.mrb[0].mxu0
        %v2592 = vadd.f32 %v2431, %v2591
        %v2593 = vpop.f32.mrb[0].mxu0
        %v2594 = vadd.f32 %v2433, %v2593
        %2595 = vmatprep.mubr.f32.mxu0 %v2022
        %2596 = vmatmul.mubr.f32.gmra.mrb[0].mxu0 %v2020
        %v2597 = vpop.f32.mrb[0].mxu0
        %v2598 = vadd.f32 %v2437, %v2597
        %v2599 = vpop.f32.mrb[0].mxu0
        %v2600 = vadd.f32 %v2439, %v2599
        %2601 = vmatprep.mubr.f32.mxu0 %v2028
        %2602 = vmatmul.mubr.f32.gmra.mrb[0].mxu0 %v2026
        %v2603 = vpop.f32.mrb[0].mxu0
        %v2604 = vadd.f32 %v2443, %v2603
        %v2605 = vpop.f32.mrb[0].mxu0
        %v2606 = vadd.f32 %v2445, %v2605
        %2607 = vmatprep.mubr.f32.mxu0 %v2034
        %2608 = vmatmul.mubr.f32.gmra.mrb[0].mxu0 %v2032
        %v2609 = vpop.f32.mrb[0].mxu0
        %v2610 = vadd.f32 %v2449, %v2609
        %v2611 = vpop.f32.mrb[0].mxu0
        %v2612 = vadd.f32 %v2451, %v2611
        %2613 = vmatprep.mubr.f32.mxu0 %v2040
        %2614 = vmatmul.mubr.f32.gmra.mrb[0].mxu0 %v2038
        %v2615 = vpop.f32.mrb[0].mxu0
        %v2616 = vadd.f32 %v2455, %v2615
        %v2617 = vpop.f32.mrb[0].mxu0
        %v2618 = vadd.f32 %v2457, %v2617
        %2619 = vmatprep.mubr.f32.mxu0 %v2046
        %2620 = vmatmul.mubr.f32.gmra.mrb[0].mxu0 %v2044
        %v2621 = vpop.f32.mrb[0].mxu0
        %v2622 = vadd.f32 %v2461, %v2621
        %v2623 = vpop.f32.mrb[0].mxu0
        %v2624 = vadd.f32 %v2463, %v2623
        %2625 = vmatprep.mubr.f32.mxu0 %v2052
        %2626 = vmatmul.mubr.f32.gmra.mrb[0].mxu0 %v2050
        %v2627 = vpop.f32.mrb[0].mxu0
        %v2628 = vadd.f32 %v2467, %v2627
        %v2629 = vpop.f32.mrb[0].mxu0
        %v2630 = vadd.f32 %v2469, %v2629
        %2631 = vmatprep.mubr.f32.mxu0 %v2058
        %2632 = vmatmul.mubr.f32.gmra.mrb[0].mxu0 %v2056
        %v2633 = vpop.f32.mrb[0].mxu0
        %v2634 = vadd.f32 %v2473, %v2633
        %v2635 = vpop.f32.mrb[0].mxu0
        %v2636 = vadd.f32 %v2475, %v2635
        %2637 = vmatprep.mubr.f32.mxu0 %v2064
        %2638 = vmatmul.mubr.f32.gmra.mrb[0].mxu0 %v2062
        %v2639 = vpop.f32.mrb[0].mxu0
        %v2640 = vadd.f32 %v2479, %v2639
        %v2641 = vpop.f32.mrb[0].mxu0
        %v2642 = vadd.f32 %v2481, %v2641
        %2643 = vdwg.mxu0
        %2644 = vmatprep.subr.mxu0 %v2069
        %2645 = vmatpush1.msra.mxu0 %v2068
        %2646 = vmatprep.subr.mxu0 %v2073
        %2647 = vmatpush1.msra.mxu0 %v2072
        %2648 = vmatprep.subr.mxu0 %v2077
        %2649 = vmatpush1.msra.mxu0 %v2076
        %2650 = vmatprep.subr.mxu0 %v2081
        %2651 = vmatpush1.msra.mxu0 %v2080
        %2652 = vmatprep.subr.mxu0 %v2085
        %2653 = vmatpush1.msra.mxu0 %v2084
        %2654 = vmatprep.subr.mxu0 %v2089
        %2655 = vmatpush1.msra.mxu0 %v2088
        %2656 = vmatprep.subr.mxu0 %v2093
        %2657 = vmatpush1.msra.mxu0 %v2092
        %2658 = vmatprep.subr.mxu0 %v2097
        %2659 = vmatpush1.msra.mxu0 %v2096
        %2660 = vmatprep.subr.mxu0 %v2101
        %2661 = vmatpush1.msra.mxu0 %v2100
        %2662 = vmatprep.subr.mxu0 %v2105
        %2663 = vmatpush1.msra.mxu0 %v2104
        %2664 = vmatprep.subr.mxu0 %v2109
        %2665 = vmatpush1.msra.mxu0 %v2108
        %2666 = vmatprep.subr.mxu0 %v2113
        %2667 = vmatpush1.msra.mxu0 %v2112
        %2668 = vmatprep.subr.mxu0 %v2117
        %2669 = vmatpush1.msra.mxu0 %v2116
        %2670 = vmatprep.subr.mxu0 %v2121
        %2671 = vmatpush1.msra.mxu0 %v2120
        %2672 = vmatprep.subr.mxu0 %v2125
        %2673 = vmatpush1.msra.mxu0 %v2124
        %2674 = vmatprep.subr.mxu0 %v2129
        %2675 = vmatpush1.msra.mxu0 %v2128
        %2676 = vmatprep.subr.mxu0 %v2133
        %2677 = vmatpush1.msra.mxu0 %v2132
        %2678 = vmatprep.subr.mxu0 %v2137
        %2679 = vmatpush1.msra.mxu0 %v2136
        %2680 = vmatprep.subr.mxu0 %v2141
        %2681 = vmatpush1.msra.mxu0 %v2140
        %2682 = vmatprep.subr.mxu0 %v2145
        %2683 = vmatpush1.msra.mxu0 %v2144
        %2684 = vmatprep.subr.mxu0 %v2149
        %2685 = vmatpush1.msra.mxu0 %v2148
        %2686 = vmatprep.subr.mxu0 %v2153
        %2687 = vmatpush1.msra.mxu0 %v2152
        %2688 = vmatprep.subr.mxu0 %v2157
        %2689 = vmatpush1.msra.mxu0 %v2156
        %2690 = vmatprep.subr.mxu0 %v2161
        %2691 = vmatpush1.msra.mxu0 %v2160
        %2692 = vmatprep.subr.mxu0 %v2165
        %2693 = vmatpush1.msra.mxu0 %v2164
        %2694 = vmatprep.subr.mxu0 %v2169
        %2695 = vmatpush1.msra.mxu0 %v2168
        %2696 = vmatprep.subr.mxu0 %v2173
        %2697 = vmatpush1.msra.mxu0 %v2172
        %2698 = vmatprep.subr.mxu0 %v2177
        %2699 = vmatpush1.msra.mxu0 %v2176
        %2700 = vmatprep.subr.mxu0 %v2181
        %2701 = vmatpush1.msra.mxu0 %v2180
        %2702 = vmatprep.subr.mxu0 %v2185
        %2703 = vmatpush1.msra.mxu0 %v2184
        %2704 = vmatprep.subr.mxu0 %v2189
        %2705 = vmatpush1.msra.mxu0 %v2188
        %2706 = vmatprep.subr.mxu0 %v2193
        %2707 = vmatpush1.msra.mxu0 %v2192
        %2708 = vmatprep.mubr.f32.mxu0 %v1652
        %2709 = vmatmul.mubr.f32.gmra.mrb[0].mxu0 %v1650
        %v2710 = vpop.f32.mrb[0].mxu0
        %v2711 = vadd.f32 0.0, %v2710
        %v2712 = vpop.f32.mrb[0].mxu0
        %v2713 = vadd.f32 0.0, %v2712
        %2714 = vmatprep.mubr.f32.mxu0 %v1658
        %2715 = vmatmul.mubr.f32.gmra.mrb[0].mxu0 %v1656
        %v2716 = vpop.f32.mrb[0].mxu0
        %v2717 = vadd.f32 0.0, %v2716
        %v2718 = vpop.f32.mrb[0].mxu0
        %v2719 = vadd.f32 0.0, %v2718
        %2720 = vmatprep.mubr.f32.mxu0 %v1664
        %2721 = vmatmul.mubr.f32.gmra.mrb[0].mxu0 %v1662
        %v2722 = vpop.f32.mrb[0].mxu0
        %v2723 = vadd.f32 0.0, %v2722
        %v2724 = vpop.f32.mrb[0].mxu0
        %v2725 = vadd.f32 0.0, %v2724
        %2726 = vmatprep.mubr.f32.mxu0 %v1670
        %2727 = vmatmul.mubr.f32.gmra.mrb[0].mxu0 %v1668
        %v2728 = vpop.f32.mrb[0].mxu0
        %v2729 = vadd.f32 0.0, %v2728
        %v2730 = vpop.f32.mrb[0].mxu0
        %v2731 = vadd.f32 0.0, %v2730
        %2732 = vmatprep.mubr.f32.mxu0 %v1676
        %2733 = vmatmul.mubr.f32.gmra.mrb[0].mxu0 %v1674
        %v2734 = vpop.f32.mrb[0].mxu0
        %v2735 = vadd.f32 0.0, %v2734
        %v2736 = vpop.f32.mrb[0].mxu0
        %v2737 = vadd.f32 0.0, %v2736
        %2738 = vmatprep.mubr.f32.mxu0 %v1682
        %2739 = vmatmul.mubr.f32.gmra.mrb[0].mxu0 %v1680
        %v2740 = vpop.f32.mrb[0].mxu0
        %v2741 = vadd.f32 0.0, %v2740
        %v2742 = vpop.f32.mrb[0].mxu0
        %v2743 = vadd.f32 0.0, %v2742
        %2744 = vmatprep.mubr.f32.mxu0 %v1688
        %2745 = vmatmul.mubr.f32.gmra.mrb[0].mxu0 %v1686
        %v2746 = vpop.f32.mrb[0].mxu0
        %v2747 = vadd.f32 0.0, %v2746
        %v2748 = vpop.f32.mrb[0].mxu0
        %v2749 = vadd.f32 0.0, %v2748
        %2750 = vmatprep.mubr.f32.mxu0 %v1694
        %2751 = vmatmul.mubr.f32.gmra.mrb[0].mxu0 %v1692
        %v2752 = vpop.f32.mrb[0].mxu0
        %v2753 = vadd.f32 0.0, %v2752
        %v2754 = vpop.f32.mrb[0].mxu0
        %v2755 = vadd.f32 0.0, %v2754
        %2756 = vmatprep.mubr.f32.mxu0 %v1700
        %2757 = vmatmul.mubr.f32.gmra.mrb[0].mxu0 %v1698
        %v2758 = vpop.f32.mrb[0].mxu0
        %v2759 = vadd.f32 0.0, %v2758
        %v2760 = vpop.f32.mrb[0].mxu0
        %v2761 = vadd.f32 0.0, %v2760
        %2762 = vmatprep.mubr.f32.mxu0 %v1706
        %2763 = vmatmul.mubr.f32.gmra.mrb[0].mxu0 %v1704
        %v2764 = vpop.f32.mrb[0].mxu0
        %v2765 = vadd.f32 0.0, %v2764
        %v2766 = vpop.f32.mrb[0].mxu0
        %v2767 = vadd.f32 0.0, %v2766
        %2768 = vmatprep.mubr.f32.mxu0 %v1712
        %2769 = vmatmul.mubr.f32.gmra.mrb[0].mxu0 %v1710
        %v2770 = vpop.f32.mrb[0].mxu0
        %v2771 = vadd.f32 0.0, %v2770
        %v2772 = vpop.f32.mrb[0].mxu0
        %v2773 = vadd.f32 0.0, %v2772
        %2774 = vmatprep.mubr.f32.mxu0 %v1718
        %2775 = vmatmul.mubr.f32.gmra.mrb[0].mxu0 %v1716
        %v2776 = vpop.f32.mrb[0].mxu0
        %v2777 = vadd.f32 0.0, %v2776
        %v2778 = vpop.f32.mrb[0].mxu0
        %v2779 = vadd.f32 0.0, %v2778
        %2780 = vmatprep.mubr.f32.mxu0 %v1724
        %2781 = vmatmul.mubr.f32.gmra.mrb[0].mxu0 %v1722
        %v2782 = vpop.f32.mrb[0].mxu0
        %v2783 = vadd.f32 0.0, %v2782
        %v2784 = vpop.f32.mrb[0].mxu0
        %v2785 = vadd.f32 0.0, %v2784
        %2786 = vmatprep.mubr.f32.mxu0 %v1730
        %2787 = vmatmul.mubr.f32.gmra.mrb[0].mxu0 %v1728
        %v2788 = vpop.f32.mrb[0].mxu0
        %v2789 = vadd.f32 0.0, %v2788
        %v2790 = vpop.f32.mrb[0].mxu0
        %v2791 = vadd.f32 0.0, %v2790
        %2792 = vmatprep.mubr.f32.mxu0 %v1736
        %2793 = vmatmul.mubr.f32.gmra.mrb[0].mxu0 %v1734
        %v2794 = vpop.f32.mrb[0].mxu0
        %v2795 = vadd.f32 0.0, %v2794
        %v2796 = vpop.f32.mrb[0].mxu0
        %v2797 = vadd.f32 0.0, %v2796
        %2798 = vmatprep.mubr.f32.mxu0 %v1742
        %2799 = vmatmul.mubr.f32.gmra.mrb[0].mxu0 %v1740
        %v2800 = vpop.f32.mrb[0].mxu0
        %v2801 = vadd.f32 0.0, %v2800
        %v2802 = vpop.f32.mrb[0].mxu0
        %v2803 = vadd.f32 0.0, %v2802
        %2804 = vdwg.mxu0
        %2805 = vmatprep.subr.mxu0 %v2197
        %2806 = vmatpush1.msra.mxu0 %v2196
        %2807 = vmatprep.subr.mxu0 %v2201
        %2808 = vmatpush1.msra.mxu0 %v2200
        %2809 = vmatprep.subr.mxu0 %v2205
        %2810 = vmatpush1.msra.mxu0 %v2204
        %2811 = vmatprep.subr.mxu0 %v2209
        %2812 = vmatpush1.msra.mxu0 %v2208
        %2813 = vmatprep.subr.mxu0 %v2213
        %2814 = vmatpush1.msra.mxu0 %v2212
        %2815 = vmatprep.subr.mxu0 %v2217
        %2816 = vmatpush1.msra.mxu0 %v2216
        %2817 = vmatprep.subr.mxu0 %v2221
        %2818 = vmatpush1.msra.mxu0 %v2220
        %2819 = vmatprep.subr.mxu0 %v2225
        %2820 = vmatpush1.msra.mxu0 %v2224
        %2821 = vmatprep.subr.mxu0 %v2229
        %2822 = vmatpush1.msra.mxu0 %v2228
        %2823 = vmatprep.subr.mxu0 %v2233
        %2824 = vmatpush1.msra.mxu0 %v2232
        %2825 = vmatprep.subr.mxu0 %v2237
        %2826 = vmatpush1.msra.mxu0 %v2236
        %2827 = vmatprep.subr.mxu0 %v2241
        %2828 = vmatpush1.msra.mxu0 %v2240
        %2829 = vmatprep.subr.mxu0 %v2245
        %2830 = vmatpush1.msra.mxu0 %v2244
        %2831 = vmatprep.subr.mxu0 %v2249
        %2832 = vmatpush1.msra.mxu0 %v2248
        %2833 = vmatprep.subr.mxu0 %v2253
        %2834 = vmatpush1.msra.mxu0 %v2252
        %2835 = vmatprep.subr.mxu0 %v2257
        %2836 = vmatpush1.msra.mxu0 %v2256
        %2837 = vmatprep.subr.mxu0 %v2261
        %2838 = vmatpush1.msra.mxu0 %v2260
        %2839 = vmatprep.subr.mxu0 %v2265
        %2840 = vmatpush1.msra.mxu0 %v2264
        %2841 = vmatprep.subr.mxu0 %v2269
        %2842 = vmatpush1.msra.mxu0 %v2268
        %2843 = vmatprep.subr.mxu0 %v2273
        %2844 = vmatpush1.msra.mxu0 %v2272
        %2845 = vmatprep.subr.mxu0 %v2277
        %2846 = vmatpush1.msra.mxu0 %v2276
        %2847 = vmatprep.subr.mxu0 %v2281
        %2848 = vmatpush1.msra.mxu0 %v2280
        %2849 = vmatprep.subr.mxu0 %v2285
        %2850 = vmatpush1.msra.mxu0 %v2284
        %2851 = vmatprep.subr.mxu0 %v2289
        %2852 = vmatpush1.msra.mxu0 %v2288
        %2853 = vmatprep.subr.mxu0 %v2293
        %2854 = vmatpush1.msra.mxu0 %v2292
        %2855 = vmatprep.subr.mxu0 %v2297
        %2856 = vmatpush1.msra.mxu0 %v2296
        %2857 = vmatprep.subr.mxu0 %v2301
        %2858 = vmatpush1.msra.mxu0 %v2300
        %2859 = vmatprep.subr.mxu0 %v2305
        %2860 = vmatpush1.msra.mxu0 %v2304
        %2861 = vmatprep.subr.mxu0 %v2309
        %2862 = vmatpush1.msra.mxu0 %v2308
        %2863 = vmatprep.subr.mxu0 %v2313
        %2864 = vmatpush1.msra.mxu0 %v2312
        %2865 = vmatprep.subr.mxu0 %v2317
        %2866 = vmatpush1.msra.mxu0 %v2316
        %2867 = vmatprep.subr.mxu0 %v2321
        %2868 = vmatpush1.msra.mxu0 %v2320
        %2869 = vmatprep.mubr.f32.mxu0 %v1974
        %2870 = vmatmul.mubr.f32.gmra.mrb[0].mxu0 %v1972
        %v2871 = vpop.f32.mrb[0].mxu0
        %v2872 = vadd.f32 %v2711, %v2871
        %v2873 = vpop.f32.mrb[0].mxu0
        %v2874 = vadd.f32 %v2713, %v2873
        %2875 = vmatprep.mubr.f32.mxu0 %v1980
        %2876 = vmatmul.mubr.f32.gmra.mrb[0].mxu0 %v1978
        %v2877 = vpop.f32.mrb[0].mxu0
        %v2878 = vadd.f32 %v2717, %v2877
        %v2879 = vpop.f32.mrb[0].mxu0
        %v2880 = vadd.f32 %v2719, %v2879
        %2881 = vmatprep.mubr.f32.mxu0 %v1986
        %2882 = vmatmul.mubr.f32.gmra.mrb[0].mxu0 %v1984
        %v2883 = vpop.f32.mrb[0].mxu0
        %v2884 = vadd.f32 %v2723, %v2883
        %v2885 = vpop.f32.mrb[0].mxu0
        %v2886 = vadd.f32 %v2725, %v2885
        %2887 = vmatprep.mubr.f32.mxu0 %v1992
        %2888 = vmatmul.mubr.f32.gmra.mrb[0].mxu0 %v1990
        %v2889 = vpop.f32.mrb[0].mxu0
        %v2890 = vadd.f32 %v2729, %v2889
        %v2891 = vpop.f32.mrb[0].mxu0
        %v2892 = vadd.f32 %v2731, %v2891
        %2893 = vmatprep.mubr.f32.mxu0 %v1998
        %2894 = vmatmul.mubr.f32.gmra.mrb[0].mxu0 %v1996
        %v2895 = vpop.f32.mrb[0].mxu0
        %v2896 = vadd.f32 %v2735, %v2895
        %v2897 = vpop.f32.mrb[0].mxu0
        %v2898 = vadd.f32 %v2737, %v2897
        %2899 = vmatprep.mubr.f32.mxu0 %v2004
        %2900 = vmatmul.mubr.f32.gmra.mrb[0].mxu0 %v2002
        %v2901 = vpop.f32.mrb[0].mxu0
        %v2902 = vadd.f32 %v2741, %v2901
        %v2903 = vpop.f32.mrb[0].mxu0
        %v2904 = vadd.f32 %v2743, %v2903
        %2905 = vmatprep.mubr.f32.mxu0 %v2010
        %2906 = vmatmul.mubr.f32.gmra.mrb[0].mxu0 %v2008
        %v2907 = vpop.f32.mrb[0].mxu0
        %v2908 = vadd.f32 %v2747, %v2907
        %v2909 = vpop.f32.mrb[0].mxu0
        %v2910 = vadd.f32 %v2749, %v2909
        %2911 = vmatprep.mubr.f32.mxu0 %v2016
        %2912 = vmatmul.mubr.f32.gmra.mrb[0].mxu0 %v2014
        %v2913 = vpop.f32.mrb[0].mxu0
        %v2914 = vadd.f32 %v2753, %v2913
        %v2915 = vpop.f32.mrb[0].mxu0
        %v2916 = vadd.f32 %v2755, %v2915
        %2917 = vmatprep.mubr.f32.mxu0 %v2022
        %2918 = vmatmul.mubr.f32.gmra.mrb[0].mxu0 %v2020
        %v2919 = vpop.f32.mrb[0].mxu0
        %v2920 = vadd.f32 %v2759, %v2919
        %v2921 = vpop.f32.mrb[0].mxu0
        %v2922 = vadd.f32 %v2761, %v2921
        %2923 = vmatprep.mubr.f32.mxu0 %v2028
        %2924 = vmatmul.mubr.f32.gmra.mrb[0].mxu0 %v2026
        %v2925 = vpop.f32.mrb[0].mxu0
        %v2926 = vadd.f32 %v2765, %v2925
        %v2927 = vpop.f32.mrb[0].mxu0
        %v2928 = vadd.f32 %v2767, %v2927
        %2929 = vmatprep.mubr.f32.mxu0 %v2034
        %2930 = vmatmul.mubr.f32.gmra.mrb[0].mxu0 %v2032
        %v2931 = vpop.f32.mrb[0].mxu0
        %v2932 = vadd.f32 %v2771, %v2931
        %v2933 = vpop.f32.mrb[0].mxu0
        %v2934 = vadd.f32 %v2773, %v2933
        %2935 = vmatprep.mubr.f32.mxu0 %v2040
        %2936 = vmatmul.mubr.f32.gmra.mrb[0].mxu0 %v2038
        %v2937 = vpop.f32.mrb[0].mxu0
        %v2938 = vadd.f32 %v2777, %v2937
        %v2939 = vpop.f32.mrb[0].mxu0
        %v2940 = vadd.f32 %v2779, %v2939
        %2941 = vmatprep.mubr.f32.mxu0 %v2046
        %2942 = vmatmul.mubr.f32.gmra.mrb[0].mxu0 %v2044
        %v2943 = vpop.f32.mrb[0].mxu0
        %v2944 = vadd.f32 %v2783, %v2943
        %v2945 = vpop.f32.mrb[0].mxu0
        %v2946 = vadd.f32 %v2785, %v2945
        %2947 = vmatprep.mubr.f32.mxu0 %v2052
        %2948 = vmatmul.mubr.f32.gmra.mrb[0].mxu0 %v2050
        %v2949 = vpop.f32.mrb[0].mxu0
        %v2950 = vadd.f32 %v2789, %v2949
        %v2951 = vpop.f32.mrb[0].mxu0
        %v2952 = vadd.f32 %v2791, %v2951
        %2953 = vmatprep.mubr.f32.mxu0 %v2058
        %2954 = vmatmul.mubr.f32.gmra.mrb[0].mxu0 %v2056
        %v2955 = vpop.f32.mrb[0].mxu0
        %v2956 = vadd.f32 %v2795, %v2955
        %v2957 = vpop.f32.mrb[0].mxu0
        %v2958 = vadd.f32 %v2797, %v2957
        %2959 = vmatprep.mubr.f32.mxu0 %v2064
        %2960 = vmatmul.mubr.f32.gmra.mrb[0].mxu0 %v2062
        %v2961 = vpop.f32.mrb[0].mxu0
        %v2962 = vadd.f32 %v2801, %v2961
        %v2963 = vpop.f32.mrb[0].mxu0
        %v2964 = vadd.f32 %v2803, %v2963
        %2965 = vdwg.mxu0
        %2966 = vst [vmem:[%s193] sm:$0xff] %v2550
        %2967 = vst [vmem:[%s193 + $0x8] sm:$0xff] %v2552
        %2968 = vst [vmem:[%s193 + $0x10] sm:$0xff] %v2872
        %2969 = vst [vmem:[%s193 + $0x18] sm:$0xff] %v2874
        %2970 = vst [vmem:[%s193 + $0x20] sm:$0xff] %v2556
        %2971 = vst [vmem:[%s193 + $0x28] sm:$0xff] %v2558
        %2972 = vst [vmem:[%s193 + $0x30] sm:$0xff] %v2878
        %2973 = vst [vmem:[%s193 + $0x38] sm:$0xff] %v2880
        %2974 = vst [vmem:[%s193 + $0x40] sm:$0xff] %v2562
        %2975 = vst [vmem:[%s193 + $0x48] sm:$0xff] %v2564
        %2976 = vst [vmem:[%s193 + $0x50] sm:$0xff] %v2884
        %2977 = vst [vmem:[%s193 + $0x58] sm:$0xff] %v2886
        %2978 = vst [vmem:[%s193 + $0x60] sm:$0xff] %v2568
        %2979 = vst [vmem:[%s193 + $0x68] sm:$0xff] %v2570
        %2980 = vst [vmem:[%s193 + $0x70] sm:$0xff] %v2890
        %2981 = vst [vmem:[%s193 + $0x78] sm:$0xff] %v2892
        %2982 = vst [vmem:[%s193 + $0x80] sm:$0xff] %v2574
        %2983 = vst [vmem:[%s193 + $0x88] sm:$0xff] %v2576
        %2984 = vst [vmem:[%s193 + $0x90] sm:$0xff] %v2896
        %2985 = vst [vmem:[%s193 + $0x98] sm:$0xff] %v2898
        %2986 = vst [vmem:[%s193 + $0xa0] sm:$0xff] %v2580
        %2987 = vst [vmem:[%s193 + $0xa8] sm:$0xff] %v2582
        %2988 = vst [vmem:[%s193 + $0xb0] sm:$0xff] %v2902
        %2989 = vst [vmem:[%s193 + $0xb8] sm:$0xff] %v2904
        %2990 = vst [vmem:[%s193 + $0xc0] sm:$0xff] %v2586
        %2991 = vst [vmem:[%s193 + $0xc8] sm:$0xff] %v2588
        %2992 = vst [vmem:[%s193 + $0xd0] sm:$0xff] %v2908
        %2993 = vst [vmem:[%s193 + $0xd8] sm:$0xff] %v2910
        %2994 = vst [vmem:[%s193 + $0xe0] sm:$0xff] %v2592
        %2995 = vst [vmem:[%s193 + $0xe8] sm:$0xff] %v2594
        %2996 = vst [vmem:[%s193 + $0xf0] sm:$0xff] %v2914
        %2997 = vst [vmem:[%s193 + $0xf8] sm:$0xff] %v2916
        %2998 = vst [vmem:[%s193 + $0x100] sm:$0xff] %v2598
        %2999 = vst [vmem:[%s193 + $0x108] sm:$0xff] %v2600
        %3000 = vst [vmem:[%s193 + $0x110] sm:$0xff] %v2920
        %3001 = vst [vmem:[%s193 + $0x118] sm:$0xff] %v2922
        %3002 = vst [vmem:[%s193 + $0x120] sm:$0xff] %v2604
        %3003 = vst [vmem:[%s193 + $0x128] sm:$0xff] %v2606
        %3004 = vst [vmem:[%s193 + $0x130] sm:$0xff] %v2926
        %3005 = vst [vmem:[%s193 + $0x138] sm:$0xff] %v2928
        %3006 = vst [vmem:[%s193 + $0x140] sm:$0xff] %v2610
        %3007 = vst [vmem:[%s193 + $0x148] sm:$0xff] %v2612
        %3008 = vst [vmem:[%s193 + $0x150] sm:$0xff] %v2932
        %3009 = vst [vmem:[%s193 + $0x158] sm:$0xff] %v2934
        %3010 = vst [vmem:[%s193 + $0x160] sm:$0xff] %v2616
        %3011 = vst [vmem:[%s193 + $0x168] sm:$0xff] %v2618
        %3012 = vst [vmem:[%s193 + $0x170] sm:$0xff] %v2938
        %3013 = vst [vmem:[%s193 + $0x178] sm:$0xff] %v2940
        %3014 = vst [vmem:[%s193 + $0x180] sm:$0xff] %v2622
        %3015 = vst [vmem:[%s193 + $0x188] sm:$0xff] %v2624
        %3016 = vst [vmem:[%s193 + $0x190] sm:$0xff] %v2944
        %3017 = vst [vmem:[%s193 + $0x198] sm:$0xff] %v2946
        %3018 = vst [vmem:[%s193 + $0x1a0] sm:$0xff] %v2628
        %3019 = vst [vmem:[%s193 + $0x1a8] sm:$0xff] %v2630
        %3020 = vst [vmem:[%s193 + $0x1b0] sm:$0xff] %v2950
        %3021 = vst [vmem:[%s193 + $0x1b8] sm:$0xff] %v2952
        %3022 = vst [vmem:[%s193 + $0x1c0] sm:$0xff] %v2634
        %3023 = vst [vmem:[%s193 + $0x1c8] sm:$0xff] %v2636
        %3024 = vst [vmem:[%s193 + $0x1d0] sm:$0xff] %v2956
        %3025 = vst [vmem:[%s193 + $0x1d8] sm:$0xff] %v2958
        %3026 = vst [vmem:[%s193 + $0x1e0] sm:$0xff] %v2640
        %3027 = vst [vmem:[%s193 + $0x1e8] sm:$0xff] %v2642
        %3028 = vst [vmem:[%s193 + $0x1f0] sm:$0xff] %v2962
        %3029 = vst [vmem:[%s193 + $0x1f8] sm:$0xff] %v2964
        %s3030 = sand.u32 %s115, 1
        %s3031 = scalar_lea.sflag [#allocation3], %s3030
        %s3032 = sand.u32 %s115, 1
        %s3033 = smul.addr %s3032, 512
        %s3034 = scalar_lea.vmem [#allocation2], %s3033
        // Predicated region
        $region37: #{mixer_forward.1} parent=35 // pred_check
          %p3035 = pneg %p125
        $region38: #{mixer_forward.1} parent=35 // pred_check_branch
          %3037 = sbr.rel (%p3035) target = $region40
        $region39: #{mixer_forward.1} parent=35 // pred_region
          %s3038 = smul.u32 16, %s18
          %s3040 = ssub.s32 8192, 8192
          %3041 = vsyncadd %s3031, %s3040
          %s3042 = smul.addr %s3038, 4
          %s3043 = smul.addr %s3042, 128
          %s3044 = scalar_lea.hbm %s4, %s3043
          %s3045 = sshll.u32 %s3034, 4
          %s3046 = int_to_ptr.vmem [resolvable:$true] %s3045
          %3051 = dma.vmem_to_hbm [thread:$0]  %s3046, 8192, %s3044, %s3031, 512, 512, 32
        $region40: #{mixer_forward.1} parent=35 // pred_fallthru
          _
      $region36: #{mixer_forward.1} parent=5 // pred_fallthru
        _
      %p3052 = scmp.le.s32.totalorder 2, %s13
      // Predicated region
      $region41: #{mixer_forward.1} parent=5 // pred_check
        %p3053 = pneg %p3052
      $region42: #{mixer_forward.1} parent=5 // pred_check_branch
        %3055 = sbr.rel (%p3053) target = $region44
      $region43: #{mixer_forward.1} parent=5 // pred_region
        %s3056 = ssub.s32 %s13, 2
        // Predicated region
        $region45: #{mixer_forward.1} parent=43 // pred_check
          %p3057 = pneg %p131
        $region46: #{mixer_forward.1} parent=43 // pred_check_branch
          %3059 = sbr.rel (%p3057) target = $region48
        $region47: #{mixer_forward.1} parent=43 // pred_region
          %s3060 = sand.u32 %s116, 1
          %s3061 = scalar_lea.sflag [#allocation3], %s3060
          %s3062 = sand.u32 %s116, 1
          %s3063 = smul.addr %s3062, 512
          %s3064 = scalar_lea.vmem [#allocation2], %s3063
          %3065 = dma.done %s3061, 8192
        $region48: #{mixer_forward.1} parent=43 // pred_fallthru
          _
      $region44: #{mixer_forward.1} parent=5 // pred_fallthru
        _
    $region6: #{mixer_forward.1} parent=1 // loop_footer
      %s17 = sadd.s32 1, %s13
    $region7: #{mixer_forward.1} parent=1 // loop_footer_branch
      %12 = sbr.rel target = $region3
    $region8: #{mixer_forward.1} parent=1 // loop_exit
      _
    %3066 = vsyncpa [#allocation3], 1
    %s3067 = scalar_lea.sflag [#allocation3], 1
    %3068 = vsyncpa %s3067, 1

</llo_original>
